<compile_context>
chip_gen: v5e
topology: v5e:2x2
jax: 0.10.0
libtpu: 0.0.40
codegen_flags: <defaults>
</compile_context>

<pallas_src>
import functools

import jax
import jax.numpy as jnp
from jax.experimental import pallas as pl
from jax.experimental.pallas import tpu as pltpu

X_DIM = 784   # config.x_dim implied by forward()'s x.view(-1, 784)
H1 = 512
H2 = 256
Z_DIM = 2
Z_PAD = 128           # lane-dense padding of the latent dimension
Z2 = 2 * Z_PAD        # fused fc31|fc32 output width
TB_TARGET = 256       # max batch rows per grid step
TB_MULT = 16          # bf16 sublane packing -> batch tile multiple of 16


def _round_up(n, m):
    return -(-n // m) * m


def _choose_tile(n, target=TB_TARGET, mult=TB_MULT):
    """Adaptive batch tile: <= target, multiple of `mult`, minimal padding."""
    if n <= target:
        return max(mult, _round_up(n, mult))
    steps = -(-n // target)                       # number of grid steps
    return _round_up(-(-n // steps), mult)


# ----------------------------------------------------------------------------
# Fused kernel: encoder -> reparameterize -> decoder, one batch tile per step.
# All intermediates stay in vregs/VMEM; weights are VMEM-resident.
# ----------------------------------------------------------------------------
def _vae_fused_kernel(x_ref, eps_ref,
                      w1_ref, b1_ref, w2_ref, b2_ref,
                      w3_ref, b3_ref,
                      w4_ref, b4_ref, w5_ref, b5_ref,
                      w6_ref, b6_ref,
                      o_ref):
    bf16 = jnp.bfloat16
    x = x_ref[...]                                                     # (TB,784) bf16

    # ----- encoder -----
    h = jnp.dot(x, w1_ref[...], preferred_element_type=jnp.float32) + b1_ref[...]
    h = jnp.maximum(h, 0.0)                                            # (TB,512) f32
    h = jnp.dot(h.astype(bf16), w2_ref[...],
                preferred_element_type=jnp.float32) + b2_ref[...]
    h = jnp.maximum(h, 0.0)                                            # (TB,256) f32

    # fused fc31|fc32: single (TB,256) x (256,256) matmul
    ml = jnp.dot(h.astype(bf16), w3_ref[...],
                 preferred_element_type=jnp.float32) + b3_ref[...]     # (TB,256)
    mu = ml[:, :Z_PAD]           # lanes [0,128)   (free slice on lane boundary)
    log_var = ml[:, Z_PAD:]      # lanes [128,256)

    # ----- reparameterization: z = mu + eps * exp(0.5*log_var) -----
    # Padded lanes of mu/log_var are exactly zero (zero weight cols + zero
    # bias), so padded z lanes equal eps and are annihilated by the zero rows
    # of w4 -> exact.
    z = mu + eps_ref[...] * jnp.exp(0.5 * log_var)                     # (TB,128) f32

    # ----- decoder -----
    h = jnp.dot(z.astype(bf16), w4_ref[...],
                preferred_element_type=jnp.float32) + b4_ref[...]
    h = jnp.maximum(h, 0.0)                                            # (TB,256) f32
    h = jnp.dot(h.astype(bf16), w5_ref[...],
                preferred_element_type=jnp.float32) + b5_ref[...]
    h = jnp.maximum(h, 0.0)                                            # (TB,512) f32
    logits = jnp.dot(h.astype(bf16), w6_ref[...],
                     preferred_element_type=jnp.float32) + b6_ref[...]  # (TB,784)

    # sigmoid: exp on EUP, reciprocal on EUP (approx) -> VALU nearly free
    y = pl.reciprocal(1.0 + jnp.exp(-logits), approx=True)
    o_ref[...] = y.astype(o_ref.dtype)


# ----------------------------------------------------------------------------
# Parameter init (PyTorch-style uniform bounds), f32 "reference" params.
# ----------------------------------------------------------------------------
def _uniform(key, fan_in, shape):
    bound = 1.0 / jnp.sqrt(jnp.float32(fan_in))
    return jax.random.uniform(key, shape, jnp.float32, -bound, bound)


def init_params(key):
    ks = jax.random.split(key, 14)
    p = {}
    p["w1"] = _uniform(ks[0], X_DIM, (X_DIM, H1));  p["b1"] = _uniform(ks[1], X_DIM, (1, H1))
    p["w2"] = _uniform(ks[2], H1, (H1, H2));        p["b2"] = _uniform(ks[3], H1, (1, H2))
    p["w31"] = _uniform(ks[4], H2, (H2, Z_DIM));    p["b31"] = _uniform(ks[5], H2, (1, Z_DIM))
    p["w32"] = _uniform(ks[6], H2, (H2, Z_DIM));    p["b32"] = _uniform(ks[7], H2, (1, Z_DIM))
    p["w4"] = _uniform(ks[8], Z_DIM, (Z_DIM, H2));  p["b4"] = _uniform(ks[9], Z_DIM, (1, H2))
    p["w5"] = _uniform(ks[10], H2, (H2, H1));       p["b5"] = _uniform(ks[11], H2, (1, H1))
    p["w6"] = _uniform(ks[12], H1, (H1, X_DIM));    p["b6"] = _uniform(ks[13], H1, (1, X_DIM))
    return p


def pack_params(p):
    """Kernel-side params: bf16 weights (zero-padded latent), f32 biases,
    fc31/fc32 fused into one (H2, 2*Z_PAD) weight."""
    bf16 = jnp.bfloat16
    w3 = jnp.zeros((H2, Z2), jnp.float32)
    w3 = w3.at[:, :Z_DIM].set(p["w31"]).at[:, Z_PAD:Z_PAD + Z_DIM].set(p["w32"])
    b3 = jnp.zeros((1, Z2), jnp.float32)
    b3 = b3.at[:, :Z_DIM].set(p["b31"]).at[:, Z_PAD:Z_PAD + Z_DIM].set(p["b32"])
    w4 = jnp.zeros((Z_PAD, H2), jnp.float32).at[:Z_DIM, :].set(p["w4"])
    return {
        "w1": p["w1"].astype(bf16), "b1": p["b1"],
        "w2": p["w2"].astype(bf16), "b2": p["b2"],
        "w3": w3.astype(bf16),      "b3": b3,
        "w4": w4.astype(bf16),      "b4": p["b4"],
        "w5": p["w5"].astype(bf16), "b5": p["b5"],
        "w6": p["w6"].astype(bf16), "b6": p["b6"],
    }


# ----------------------------------------------------------------------------
# Forward wrapper: x.view(-1, 784), adaptive batch tiling, single pallas_call.
# ----------------------------------------------------------------------------
@functools.partial(jax.jit, static_argnames=())
def vae_forward(kp, x, eps):
    N = x.shape[0]
    x2 = x.reshape(N, X_DIM).astype(jnp.bfloat16)     # bf16 stream halves x DMA
    eps = eps.astype(jnp.float32)
    if eps.shape[1] < Z_PAD:                          # accept (N, z_dim) eps
        eps = jnp.pad(eps, ((0, 0), (0, Z_PAD - eps.shape[1])))

    TB = _choose_tile(N)
    M = _round_up(N, TB)
    if M != N:
        x2 = jnp.pad(x2, ((0, M - N), (0, 0)))
        eps = jnp.pad(eps, ((0, M - N), (0, 0)))

    row = lambda i: (i, 0)   # batch-tiled operands
    res = lambda i: (0, 0)   # VMEM-resident weights/biases (constant index_map)

    out = pl.pallas_call(
        _vae_fused_kernel,
        out_shape=jax.ShapeDtypeStruct((M, X_DIM), jnp.float32),
        grid=(M // TB,),
        in_specs=[
            pl.BlockSpec((TB, X_DIM), row),          # x   (bf16)
            pl.BlockSpec((TB, Z_PAD), row),          # eps (f32)
            pl.BlockSpec((X_DIM, H1), res), pl.BlockSpec((1, H1), res),   # fc1
            pl.BlockSpec((H1, H2), res),    pl.BlockSpec((1, H2), res),   # fc2
            pl.BlockSpec((H2, Z2), res),    pl.BlockSpec((1, Z2), res),   # fc31|fc32
            pl.BlockSpec((Z_PAD, H2), res), pl.BlockSpec((1, H2), res),   # fc4
            pl.BlockSpec((H2, H1), res),    pl.BlockSpec((1, H1), res),   # fc5
            pl.BlockSpec((H1, X_DIM), res), pl.BlockSpec((1, X_DIM), res),# fc6
        ],
        out_specs=pl.BlockSpec((TB, X_DIM), row),
        compiler_params=pltpu.CompilerParams(
            dimension_semantics=("parallel",),
            vmem_limit_bytes=48 * 1024 * 1024,       # safe on v7x (64 MiB phys)
        ),
    )(x2, eps,
      kp["w1"], kp["b1"], kp["w2"], kp["b2"],
      kp["w3"], kp["b3"],
      kp["w4"], kp["b4"], kp["w5"], kp["b5"],
      kp["w6"], kp["b6"])
    return out[:N]


# Pure-JAX f32 reference (mirrors the PyTorch module) for correctness checking.
def vae_forward_ref(p, x, eps):
    x2 = x.reshape(-1, X_DIM).astype(jnp.float32)
    h = jnp.maximum(x2 @ p["w1"] + p["b1"], 0.0)
    h = jnp.maximum(h @ p["w2"] + p["b2"], 0.0)
    mu = h @ p["w31"] + p["b31"]
    lv = h @ p["w32"] + p["b32"]
    z = mu + eps[:, :Z_DIM] * jnp.exp(0.5 * lv)
    h = jnp.maximum(z @ p["w4"] + p["b4"], 0.0)
    h = jnp.maximum(h @ p["w5"] + p["b5"], 0.0)
    return jax.nn.sigmoid(h @ p["w6"] + p["b6"])


if __name__ == "__main__":
    key = jax.random.PRNGKey(0)
    pkey, xkey, ekey = jax.random.split(key, 3)
    params = init_params(pkey)
    kparams = pack_params(params)

    N = 16
    # Input like MNIST images; forward() flattens to (-1, 784).
    x = jax.random.normal(xkey, (N, 1, 28, 28), dtype=jnp.float32)
    # Reparameterization noise (replaces torch.randn_like), natural (N, z_dim).
    eps = jax.random.normal(ekey, (N, Z_DIM), dtype=jnp.float32)

    y = vae_forward(kparams, x, eps)
    jax.block_until_ready(y)

    assert y.shape == (N, X_DIM) and y.dtype == jnp.float32
    assert bool(jnp.all((y >= 0.0) & (y <= 1.0)))          # sigmoid output range
    y_ref = vae_forward_ref(params, x, eps)
    assert float(jnp.max(jnp.abs(y - y_ref))) < 3e-2       # bf16-matmul tolerance
    print("KERNEL_OK")
</pallas_src>

<mosaic_0001>
module attributes {stable_mosaic.version = 11 : i64} {
  func.func @_vae_fused_kernel(%arg0: i32, %arg1: memref<16x784xbf16, #tpu.memory_space<vmem>>, %arg2: memref<16x128xf32, #tpu.memory_space<vmem>>, %arg3: memref<784x512xbf16, #tpu.memory_space<vmem>>, %arg4: memref<1x512xf32, #tpu.memory_space<vmem>>, %arg5: memref<512x256xbf16, #tpu.memory_space<vmem>>, %arg6: memref<1x256xf32, #tpu.memory_space<vmem>>, %arg7: memref<256x256xbf16, #tpu.memory_space<vmem>>, %arg8: memref<1x256xf32, #tpu.memory_space<vmem>>, %arg9: memref<128x256xbf16, #tpu.memory_space<vmem>>, %arg10: memref<1x256xf32, #tpu.memory_space<vmem>>, %arg11: memref<256x512xbf16, #tpu.memory_space<vmem>>, %arg12: memref<1x512xf32, #tpu.memory_space<vmem>>, %arg13: memref<512x784xbf16, #tpu.memory_space<vmem>>, %arg14: memref<1x784xf32, #tpu.memory_space<vmem>>, %arg15: memref<16x784xf32, #tpu.memory_space<vmem>>) attributes {dimension_semantics = [#tpu.dimension_semantics<parallel>], iteration_bounds = array<i64: 1>, scalar_prefetch = 0 : i64, scratch_operands = 0 : i64, tpu.core_type = #tpu.core_type<tc>, window_params = [{transform_indices = @transform_0, window_bounds = array<i64: 16, 784>}, {transform_indices = @transform_1, window_bounds = array<i64: 16, 128>}, {pipeline_mode = #tpu.pipeline_mode<synchronous>, transform_indices = @transform_2, window_bounds = array<i64: 784, 512>}, {pipeline_mode = #tpu.pipeline_mode<synchronous>, transform_indices = @transform_3, window_bounds = array<i64: 1, 512>}, {pipeline_mode = #tpu.pipeline_mode<synchronous>, transform_indices = @transform_4, window_bounds = array<i64: 512, 256>}, {pipeline_mode = #tpu.pipeline_mode<synchronous>, transform_indices = @transform_5, window_bounds = array<i64: 1, 256>}, {pipeline_mode = #tpu.pipeline_mode<synchronous>, transform_indices = @transform_6, window_bounds = array<i64: 256, 256>}, {pipeline_mode = #tpu.pipeline_mode<synchronous>, transform_indices = @transform_7, window_bounds = array<i64: 1, 256>}, {pipeline_mode = #tpu.pipeline_mode<synchronous>, transform_indices = @transform_8, window_bounds = array<i64: 128, 256>}, {pipeline_mode = #tpu.pipeline_mode<synchronous>, transform_indices = @transform_9, window_bounds = array<i64: 1, 256>}, {pipeline_mode = #tpu.pipeline_mode<synchronous>, transform_indices = @transform_10, window_bounds = array<i64: 256, 512>}, {pipeline_mode = #tpu.pipeline_mode<synchronous>, transform_indices = @transform_11, window_bounds = array<i64: 1, 512>}, {pipeline_mode = #tpu.pipeline_mode<synchronous>, transform_indices = @transform_12, window_bounds = array<i64: 512, 784>}, {pipeline_mode = #tpu.pipeline_mode<synchronous>, transform_indices = @transform_13, window_bounds = array<i64: 1, 784>}, {transform_indices = @transform_14, window_bounds = array<i64: 16, 784>}]} {
    %c0 = arith.constant 0 : index
    %c0_0 = arith.constant 0 : index
    %0 = vector.load %arg1[%c0, %c0_0] : memref<16x784xbf16, #tpu.memory_space<vmem>>, vector<16x784xbf16>
    %c0_1 = arith.constant 0 : index
    %c0_2 = arith.constant 0 : index
    %1 = vector.load %arg3[%c0_1, %c0_2] : memref<784x512xbf16, #tpu.memory_space<vmem>>, vector<784x512xbf16>
    %cst = arith.constant dense<0.000000e+00> : vector<16x512xf32>
    %2 = tpu.matmul %0, %1, %cst {dimension_numbers = #tpu.dot_dimension_numbers<[1], [0], [0], [1], [0, 0, 1, 1], [], []>} : vector<16x784xbf16>, vector<784x512xbf16>, vector<16x512xf32> -> vector<16x512xf32>
    %c0_3 = arith.constant 0 : index
    %c0_4 = arith.constant 0 : index
    %3 = vector.load %arg4[%c0_3, %c0_4] : memref<1x512xf32, #tpu.memory_space<vmem>>, vector<1x512xf32>
    %4 = vector.broadcast %3 : vector<1x512xf32> to vector<16x512xf32>
    %5 = arith.addf %2, %4 : vector<16x512xf32>
    %cst_5 = arith.constant 0.000000e+00 : f32
    %6 = vector.broadcast %cst_5 : f32 to vector<16x512xf32>
    %7 = arith.maximumf %5, %6 : vector<16x512xf32>
    %8 = arith.truncf %7 : vector<16x512xf32> to vector<16x512xbf16>
    %c0_6 = arith.constant 0 : index
    %c0_7 = arith.constant 0 : index
    %9 = vector.load %arg5[%c0_6, %c0_7] : memref<512x256xbf16, #tpu.memory_space<vmem>>, vector<512x256xbf16>
    %cst_8 = arith.constant dense<0.000000e+00> : vector<16x256xf32>
    %10 = tpu.matmul %8, %9, %cst_8 {dimension_numbers = #tpu.dot_dimension_numbers<[1], [0], [0], [1], [0, 0, 1, 1], [], []>} : vector<16x512xbf16>, vector<512x256xbf16>, vector<16x256xf32> -> vector<16x256xf32>
    %c0_9 = arith.constant 0 : index
    %c0_10 = arith.constant 0 : index
    %11 = vector.load %arg6[%c0_9, %c0_10] : memref<1x256xf32, #tpu.memory_space<vmem>>, vector<1x256xf32>
    %12 = vector.broadcast %11 : vector<1x256xf32> to vector<16x256xf32>
    %13 = arith.addf %10, %12 : vector<16x256xf32>
    %cst_11 = arith.constant 0.000000e+00 : f32
    %14 = vector.broadcast %cst_11 : f32 to vector<16x256xf32>
    %15 = arith.maximumf %13, %14 : vector<16x256xf32>
    %16 = arith.truncf %15 : vector<16x256xf32> to vector<16x256xbf16>
    %c0_12 = arith.constant 0 : index
    %c0_13 = arith.constant 0 : index
    %17 = vector.load %arg7[%c0_12, %c0_13] : memref<256x256xbf16, #tpu.memory_space<vmem>>, vector<256x256xbf16>
    %cst_14 = arith.constant dense<0.000000e+00> : vector<16x256xf32>
    %18 = tpu.matmul %16, %17, %cst_14 {dimension_numbers = #tpu.dot_dimension_numbers<[1], [0], [0], [1], [0, 0, 1, 1], [], []>} : vector<16x256xbf16>, vector<256x256xbf16>, vector<16x256xf32> -> vector<16x256xf32>
    %c0_15 = arith.constant 0 : index
    %c0_16 = arith.constant 0 : index
    %19 = vector.load %arg8[%c0_15, %c0_16] : memref<1x256xf32, #tpu.memory_space<vmem>>, vector<1x256xf32>
    %20 = vector.broadcast %19 : vector<1x256xf32> to vector<16x256xf32>
    %21 = arith.addf %18, %20 : vector<16x256xf32>
    %22 = vector.extract_strided_slice %21 {offsets = [0, 0], sizes = [16, 128], strides = [1, 1]} : vector<16x256xf32> to vector<16x128xf32>
    %23 = vector.extract_strided_slice %21 {offsets = [0, 128], sizes = [16, 128], strides = [1, 1]} : vector<16x256xf32> to vector<16x128xf32>
    %c0_17 = arith.constant 0 : index
    %c0_18 = arith.constant 0 : index
    %24 = vector.load %arg2[%c0_17, %c0_18] : memref<16x128xf32, #tpu.memory_space<vmem>>, vector<16x128xf32>
    %cst_19 = arith.constant 5.000000e-01 : f32
    %25 = vector.broadcast %cst_19 : f32 to vector<16x128xf32>
    %26 = arith.mulf %25, %23 : vector<16x128xf32>
    %27 = math.exp %26 : vector<16x128xf32>
    %28 = arith.mulf %24, %27 : vector<16x128xf32>
    %29 = arith.addf %22, %28 : vector<16x128xf32>
    %30 = arith.truncf %29 : vector<16x128xf32> to vector<16x128xbf16>
    %c0_20 = arith.constant 0 : index
    %c0_21 = arith.constant 0 : index
    %31 = vector.load %arg9[%c0_20, %c0_21] : memref<128x256xbf16, #tpu.memory_space<vmem>>, vector<128x256xbf16>
    %cst_22 = arith.constant dense<0.000000e+00> : vector<16x256xf32>
    %32 = tpu.matmul %30, %31, %cst_22 {dimension_numbers = #tpu.dot_dimension_numbers<[1], [0], [0], [1], [0, 0, 1, 1], [], []>} : vector<16x128xbf16>, vector<128x256xbf16>, vector<16x256xf32> -> vector<16x256xf32>
    %c0_23 = arith.constant 0 : index
    %c0_24 = arith.constant 0 : index
    %33 = vector.load %arg10[%c0_23, %c0_24] : memref<1x256xf32, #tpu.memory_space<vmem>>, vector<1x256xf32>
    %34 = vector.broadcast %33 : vector<1x256xf32> to vector<16x256xf32>
    %35 = arith.addf %32, %34 : vector<16x256xf32>
    %cst_25 = arith.constant 0.000000e+00 : f32
    %36 = vector.broadcast %cst_25 : f32 to vector<16x256xf32>
    %37 = arith.maximumf %35, %36 : vector<16x256xf32>
    %38 = arith.truncf %37 : vector<16x256xf32> to vector<16x256xbf16>
    %c0_26 = arith.constant 0 : index
    %c0_27 = arith.constant 0 : index
    %39 = vector.load %arg11[%c0_26, %c0_27] : memref<256x512xbf16, #tpu.memory_space<vmem>>, vector<256x512xbf16>
    %cst_28 = arith.constant dense<0.000000e+00> : vector<16x512xf32>
    %40 = tpu.matmul %38, %39, %cst_28 {dimension_numbers = #tpu.dot_dimension_numbers<[1], [0], [0], [1], [0, 0, 1, 1], [], []>} : vector<16x256xbf16>, vector<256x512xbf16>, vector<16x512xf32> -> vector<16x512xf32>
    %c0_29 = arith.constant 0 : index
    %c0_30 = arith.constant 0 : index
    %41 = vector.load %arg12[%c0_29, %c0_30] : memref<1x512xf32, #tpu.memory_space<vmem>>, vector<1x512xf32>
    %42 = vector.broadcast %41 : vector<1x512xf32> to vector<16x512xf32>
    %43 = arith.addf %40, %42 : vector<16x512xf32>
    %cst_31 = arith.constant 0.000000e+00 : f32
    %44 = vector.broadcast %cst_31 : f32 to vector<16x512xf32>
    %45 = arith.maximumf %43, %44 : vector<16x512xf32>
    %46 = arith.truncf %45 : vector<16x512xf32> to vector<16x512xbf16>
    %c0_32 = arith.constant 0 : index
    %c0_33 = arith.constant 0 : index
    %47 = vector.load %arg13[%c0_32, %c0_33] : memref<512x784xbf16, #tpu.memory_space<vmem>>, vector<512x784xbf16>
    %cst_34 = arith.constant dense<0.000000e+00> : vector<16x784xf32>
    %48 = tpu.matmul %46, %47, %cst_34 {dimension_numbers = #tpu.dot_dimension_numbers<[1], [0], [0], [1], [0, 0, 1, 1], [], []>} : vector<16x512xbf16>, vector<512x784xbf16>, vector<16x784xf32> -> vector<16x784xf32>
    %c0_35 = arith.constant 0 : index
    %c0_36 = arith.constant 0 : index
    %49 = vector.load %arg14[%c0_35, %c0_36] : memref<1x784xf32, #tpu.memory_space<vmem>>, vector<1x784xf32>
    %50 = vector.broadcast %49 : vector<1x784xf32> to vector<16x784xf32>
    %51 = arith.addf %48, %50 : vector<16x784xf32>
    %cst_37 = arith.constant 0.000000e+00 : f32
    %52 = vector.broadcast %cst_37 : f32 to vector<16x784xf32>
    %53 = arith.subf %52, %51 : vector<16x784xf32>
    %54 = math.exp %53 : vector<16x784xf32>
    %cst_38 = arith.constant 1.000000e+00 : f32
    %55 = vector.broadcast %cst_38 : f32 to vector<16x784xf32>
    %56 = arith.addf %55, %54 : vector<16x784xf32>
    %57 = tpu.reciprocal %56 {approx = true} : vector<16x784xf32> -> vector<16x784xf32>
    %c0_39 = arith.constant 0 : index
    %c0_40 = arith.constant 0 : index
    %58 = vector.load %arg15[%c0_39, %c0_40] : memref<16x784xf32, #tpu.memory_space<vmem>>, vector<16x784xf32>
    tpu.vector_store %arg15[%c0_39, %c0_40], %57 {strides = array<i32>} : memref<16x784xf32, #tpu.memory_space<vmem>>, vector<16x784xf32>,
    return
  }
  func.func @transform_0(%arg0: i32) -> (i32, i32) {
    %c0_i32 = arith.constant 0 : i32
    %c0_i32_0 = arith.constant 0 : i32
    return %arg0, %c0_i32 : i32, i32
  }
  func.func @transform_1(%arg0: i32) -> (i32, i32) {
    %c0_i32 = arith.constant 0 : i32
    %c0_i32_0 = arith.constant 0 : i32
    return %arg0, %c0_i32 : i32, i32
  }
  func.func @transform_2(%arg0: i32) -> (i32, i32) {
    %c0_i32 = arith.constant 0 : i32
    %c0_i32_0 = arith.constant 0 : i32
    %c0_i32_1 = arith.constant 0 : i32
    return %c0_i32, %c0_i32_0 : i32, i32
  }
  func.func @transform_3(%arg0: i32) -> (i32, i32) {
    %c0_i32 = arith.constant 0 : i32
    %c0_i32_0 = arith.constant 0 : i32
    %c0_i32_1 = arith.constant 0 : i32
    return %c0_i32, %c0_i32_0 : i32, i32
  }
  func.func @transform_4(%arg0: i32) -> (i32, i32) {
    %c0_i32 = arith.constant 0 : i32
    %c0_i32_0 = arith.constant 0 : i32
    %c0_i32_1 = arith.constant 0 : i32
    return %c0_i32, %c0_i32_0 : i32, i32
  }
  func.func @transform_5(%arg0: i32) -> (i32, i32) {
    %c0_i32 = arith.constant 0 : i32
    %c0_i32_0 = arith.constant 0 : i32
    %c0_i32_1 = arith.constant 0 : i32
    return %c0_i32, %c0_i32_0 : i32, i32
  }
  func.func @transform_6(%arg0: i32) -> (i32, i32) {
    %c0_i32 = arith.constant 0 : i32
    %c0_i32_0 = arith.constant 0 : i32
    %c0_i32_1 = arith.constant 0 : i32
    return %c0_i32, %c0_i32_0 : i32, i32
  }
  func.func @transform_7(%arg0: i32) -> (i32, i32) {
    %c0_i32 = arith.constant 0 : i32
    %c0_i32_0 = arith.constant 0 : i32
    %c0_i32_1 = arith.constant 0 : i32
    return %c0_i32, %c0_i32_0 : i32, i32
  }
  func.func @transform_8(%arg0: i32) -> (i32, i32) {
    %c0_i32 = arith.constant 0 : i32
    %c0_i32_0 = arith.constant 0 : i32
    %c0_i32_1 = arith.constant 0 : i32
    return %c0_i32, %c0_i32_0 : i32, i32
  }
  func.func @transform_9(%arg0: i32) -> (i32, i32) {
    %c0_i32 = arith.constant 0 : i32
    %c0_i32_0 = arith.constant 0 : i32
    %c0_i32_1 = arith.constant 0 : i32
    return %c0_i32, %c0_i32_0 : i32, i32
  }
  func.func @transform_10(%arg0: i32) -> (i32, i32) {
    %c0_i32 = arith.constant 0 : i32
    %c0_i32_0 = arith.constant 0 : i32
    %c0_i32_1 = arith.constant 0 : i32
    return %c0_i32, %c0_i32_0 : i32, i32
  }
  func.func @transform_11(%arg0: i32) -> (i32, i32) {
    %c0_i32 = arith.constant 0 : i32
    %c0_i32_0 = arith.constant 0 : i32
    %c0_i32_1 = arith.constant 0 : i32
    return %c0_i32, %c0_i32_0 : i32, i32
  }
  func.func @transform_12(%arg0: i32) -> (i32, i32) {
    %c0_i32 = arith.constant 0 : i32
    %c0_i32_0 = arith.constant 0 : i32
    %c0_i32_1 = arith.constant 0 : i32
    return %c0_i32, %c0_i32_0 : i32, i32
  }
  func.func @transform_13(%arg0: i32) -> (i32, i32) {
    %c0_i32 = arith.constant 0 : i32
    %c0_i32_0 = arith.constant 0 : i32
    %c0_i32_1 = arith.constant 0 : i32
    return %c0_i32, %c0_i32_0 : i32, i32
  }
  func.func @transform_14(%arg0: i32) -> (i32, i32) {
    %c0_i32 = arith.constant 0 : i32
    %c0_i32_0 = arith.constant 0 : i32
    return %arg0, %c0_i32 : i32, i32
  }
}

</mosaic_0001>

<llo_original>
// kernel: vae_forward.1
$region0: #{vae_forward.1}
  #allocation0 [shape = 'u32[]', space=smem, size = 0x4, offset = 0x4, fixed_abs, tag = 'smem constant byte address 0x4 - core index']
  #allocation1 [shape = 'u32[72,128]{1,0:T(1,128)}', space=vmem, size = 0x9000, scoped, tag = 'internal scratch']
  %s0 = inlined_call_operand.vmem [shape: bf16[16,784], index: 0, kind: input, shape index: {}]
  %s1 = inlined_call_operand.vmem [shape: f32[16,128], index: 1, kind: input, shape index: {}]
  %s2 = inlined_call_operand.vmem [shape: bf16[784,512], index: 2, kind: input, shape index: {}]
  %s3 = inlined_call_operand.vmem [shape: f32[1,512], index: 3, kind: input, shape index: {}]
  %s4 = inlined_call_operand.vmem [shape: bf16[512,256], index: 4, kind: input, shape index: {}]
  %s5 = inlined_call_operand.vmem [shape: f32[1,256], index: 5, kind: input, shape index: {}]
  %s6 = inlined_call_operand.vmem [shape: bf16[256,256], index: 6, kind: input, shape index: {}]
  %s7 = inlined_call_operand.vmem [shape: f32[1,256], index: 7, kind: input, shape index: {}]
  %s8 = inlined_call_operand.vmem [shape: bf16[128,256], index: 8, kind: input, shape index: {}]
  %s9 = inlined_call_operand.vmem [shape: f32[1,256], index: 9, kind: input, shape index: {}]
  %s10 = inlined_call_operand.vmem [shape: bf16[256,512], index: 10, kind: input, shape index: {}]
  %s11 = inlined_call_operand.vmem [shape: f32[1,512], index: 11, kind: input, shape index: {}]
  %s12 = inlined_call_operand.vmem [shape: bf16[512,784], index: 12, kind: input, shape index: {}]
  %s13 = inlined_call_operand.vmem [shape: f32[1,784], index: 13, kind: input, shape index: {}]
  %s14 = inlined_call_operand.hbm [shape: f32[16,784], index: 14, kind: output, shape index: {}]
  %s15 = sld [smem:[#allocation0]]
  $region66: #{vae_forward.1} parent=0
    _
  %s17 = ssub.s32 1, %s15
  %s18 = scalar_select 0, %s17, %s15
  $region1: #{vae_forward.1} parent=0
    #allocation2 [shape = 'u8[57344]{0}', space=vmem, size = 0xe000, scoped, tag = 'output window, operand 0, single buffered']
    #allocation3 [shape = 's32[1]{0}', space=sflag, size = 0x4, scoped, tag = 'scoped memory for vae_forward.1']
    %19 = vsyncpa [#allocation3], 0
    // Predicated region
    $region2: #{vae_forward.1} parent=1 // pred_check
      _
    $region3: #{vae_forward.1} parent=1 // pred_check_branch
      %21 = sbr.rel (0) target = $region5
    $region4: #{vae_forward.1} parent=1 // pred_region
      _
    $region5: #{vae_forward.1} parent=1 // pred_fallthru
      _
    // Predicated region
    $region6: #{vae_forward.1} parent=1 // pred_check
      _
    $region7: #{vae_forward.1} parent=1 // pred_check_branch
      %23 = sbr.rel (0) target = $region9
    $region8: #{vae_forward.1} parent=1 // pred_region
      _
    $region9: #{vae_forward.1} parent=1 // pred_fallthru
      _
    // Predicated region
    $region10: #{vae_forward.1} parent=1 // pred_check
      _
    $region11: #{vae_forward.1} parent=1 // pred_check_branch
      %25 = sbr.rel (0) target = $region13
    $region12: #{vae_forward.1} parent=1 // pred_region
      _
    $region13: #{vae_forward.1} parent=1 // pred_fallthru
      _
    // Predicated region
    $region14: #{vae_forward.1} parent=1 // pred_check
      _
    $region15: #{vae_forward.1} parent=1 // pred_check_branch
      %27 = sbr.rel (0) target = $region17
    $region16: #{vae_forward.1} parent=1 // pred_region
      _
    $region17: #{vae_forward.1} parent=1 // pred_fallthru
      _
    // Predicated region
    $region18: #{vae_forward.1} parent=1 // pred_check
      _
    $region19: #{vae_forward.1} parent=1 // pred_check_branch
      %29 = sbr.rel (0) target = $region21
    $region20: #{vae_forward.1} parent=1 // pred_region
      _
    $region21: #{vae_forward.1} parent=1 // pred_fallthru
      _
    // Predicated region
    $region22: #{vae_forward.1} parent=1 // pred_check
      _
    $region23: #{vae_forward.1} parent=1 // pred_check_branch
      %31 = sbr.rel (0) target = $region25
    $region24: #{vae_forward.1} parent=1 // pred_region
      _
    $region25: #{vae_forward.1} parent=1 // pred_fallthru
      _
    // Predicated region
    $region26: #{vae_forward.1} parent=1 // pred_check
      _
    $region27: #{vae_forward.1} parent=1 // pred_check_branch
      %33 = sbr.rel (0) target = $region29
    $region28: #{vae_forward.1} parent=1 // pred_region
      _
    $region29: #{vae_forward.1} parent=1 // pred_fallthru
      _
    // Predicated region
    $region30: #{vae_forward.1} parent=1 // pred_check
      _
    $region31: #{vae_forward.1} parent=1 // pred_check_branch
      %35 = sbr.rel (0) target = $region33
    $region32: #{vae_forward.1} parent=1 // pred_region
      _
    $region33: #{vae_forward.1} parent=1 // pred_fallthru
      _
    // Predicated region
    $region34: #{vae_forward.1} parent=1 // pred_check
      _
    $region35: #{vae_forward.1} parent=1 // pred_check_branch
      %37 = sbr.rel (0) target = $region37
    $region36: #{vae_forward.1} parent=1 // pred_region
      _
    $region37: #{vae_forward.1} parent=1 // pred_fallthru
      _
    // Predicated region
    $region38: #{vae_forward.1} parent=1 // pred_check
      _
    $region39: #{vae_forward.1} parent=1 // pred_check_branch
      %39 = sbr.rel (0) target = $region41
    $region40: #{vae_forward.1} parent=1 // pred_region
      _
    $region41: #{vae_forward.1} parent=1 // pred_fallthru
      _
    // Predicated region
    $region42: #{vae_forward.1} parent=1 // pred_check
      _
    $region43: #{vae_forward.1} parent=1 // pred_check_branch
      %41 = sbr.rel (0) target = $region45
    $region44: #{vae_forward.1} parent=1 // pred_region
      _
    $region45: #{vae_forward.1} parent=1 // pred_fallthru
      _
    // Predicated region
    $region46: #{vae_forward.1} parent=1 // pred_check
      _
    $region47: #{vae_forward.1} parent=1 // pred_check_branch
      %43 = sbr.rel (0) target = $region49
    $region48: #{vae_forward.1} parent=1 // pred_region
      _
    $region49: #{vae_forward.1} parent=1 // pred_fallthru
      _
    // Predicated region
    $region50: #{vae_forward.1} parent=1 // pred_check
      _
    $region51: #{vae_forward.1} parent=1 // pred_check_branch
      %45 = sbr.rel (0) target = $region53
    $region52: #{vae_forward.1} parent=1 // pred_region
      _
    $region53: #{vae_forward.1} parent=1 // pred_fallthru
      _
    // Predicated region
    $region54: #{vae_forward.1} parent=1 // pred_check
      _
    $region55: #{vae_forward.1} parent=1 // pred_check_branch
      %47 = sbr.rel (0) target = $region57
    $region56: #{vae_forward.1} parent=1 // pred_region
      _
    $region57: #{vae_forward.1} parent=1 // pred_fallthru
      _
    %v49 = vld [vmem:[%s0] sm:$0xff]
    %v50 = vld [vmem:[%s0 + $0x8] sm:$0xff]
    %v51 = vld [vmem:[%s0 + $0x10] sm:$0xff]
    %v52 = vld [vmem:[%s0 + $0x18] sm:$0xf]
    %v53 = vld [vmem:[%s0 + $0x1c] sm:$0xff]
    %v54 = vld [vmem:[%s0 + $0x24] sm:$0xff]
    %v55 = vld [vmem:[%s0 + $0x2c] sm:$0xff]
    %v56 = vld [vmem:[%s0 + $0x34] sm:$0xf]
    %v57 = vld [vmem:[%s2] sm:$0xff]
    %v58 = vld [vmem:[%s2 + $0x8] sm:$0xff]
    %v59 = vld [vmem:[%s2 + $0x10] sm:$0xff]
    %v60 = vld [vmem:[%s2 + $0x18] sm:$0xff]
    %v61 = vld [vmem:[%s2 + $0x20] sm:$0xff]
    %v62 = vld [vmem:[%s2 + $0x28] sm:$0xff]
    %v63 = vld [vmem:[%s2 + $0x30] sm:$0xff]
    %v64 = vld [vmem:[%s2 + $0x38] sm:$0xff]
    %v65 = vld [vmem:[%s2 + $0x40] sm:$0xff]
    %v66 = vld [vmem:[%s2 + $0x48] sm:$0xff]
    %v67 = vld [vmem:[%s2 + $0x50] sm:$0xff]
    %v68 = vld [vmem:[%s2 + $0x58] sm:$0xff]
    %v69 = vld [vmem:[%s2 + $0x60] sm:$0xff]
    %v70 = vld [vmem:[%s2 + $0x68] sm:$0xff]
    %v71 = vld [vmem:[%s2 + $0x70] sm:$0xff]
    %v72 = vld [vmem:[%s2 + $0x78] sm:$0xff]
    %v73 = vld [vmem:[%s2 + $0x80] sm:$0xff]
    %v74 = vld [vmem:[%s2 + $0x88] sm:$0xff]
    %v75 = vld [vmem:[%s2 + $0x90] sm:$0xff]
    %v76 = vld [vmem:[%s2 + $0x98] sm:$0xff]
    %v77 = vld [vmem:[%s2 + $0xa0] sm:$0xff]
    %v78 = vld [vmem:[%s2 + $0xa8] sm:$0xff]
    %v79 = vld [vmem:[%s2 + $0xb0] sm:$0xff]
    %v80 = vld [vmem:[%s2 + $0xb8] sm:$0xff]
    %v81 = vld [vmem:[%s2 + $0xc0] sm:$0xff]
    %v82 = vld [vmem:[%s2 + $0xc8] sm:$0xff]
    %v83 = vld [vmem:[%s2 + $0xd0] sm:$0xff]
    %v84 = vld [vmem:[%s2 + $0xd8] sm:$0xff]
    %v85 = vld [vmem:[%s2 + $0xe0] sm:$0xff]
    %v86 = vld [vmem:[%s2 + $0xe8] sm:$0xff]
    %v87 = vld [vmem:[%s2 + $0xf0] sm:$0xff]
    %v88 = vld [vmem:[%s2 + $0xf8] sm:$0xff]
    %v89 = vld [vmem:[%s2 + $0x100] sm:$0xff]
    %v90 = vld [vmem:[%s2 + $0x108] sm:$0xff]
    %v91 = vld [vmem:[%s2 + $0x110] sm:$0xff]
    %v92 = vld [vmem:[%s2 + $0x118] sm:$0xff]
    %v93 = vld [vmem:[%s2 + $0x120] sm:$0xff]
    %v94 = vld [vmem:[%s2 + $0x128] sm:$0xff]
    %v95 = vld [vmem:[%s2 + $0x130] sm:$0xff]
    %v96 = vld [vmem:[%s2 + $0x138] sm:$0xff]
    %v97 = vld [vmem:[%s2 + $0x140] sm:$0xff]
    %v98 = vld [vmem:[%s2 + $0x148] sm:$0xff]
    %v99 = vld [vmem:[%s2 + $0x150] sm:$0xff]
    %v100 = vld [vmem:[%s2 + $0x158] sm:$0xff]
    %v101 = vld [vmem:[%s2 + $0x160] sm:$0xff]
    %v102 = vld [vmem:[%s2 + $0x168] sm:$0xff]
    %v103 = vld [vmem:[%s2 + $0x170] sm:$0xff]
    %v104 = vld [vmem:[%s2 + $0x178] sm:$0xff]
    %v105 = vld [vmem:[%s2 + $0x180] sm:$0xff]
    %v106 = vld [vmem:[%s2 + $0x188] sm:$0xff]
    %v107 = vld [vmem:[%s2 + $0x190] sm:$0xff]
    %v108 = vld [vmem:[%s2 + $0x198] sm:$0xff]
    %v109 = vld [vmem:[%s2 + $0x1a0] sm:$0xff]
    %v110 = vld [vmem:[%s2 + $0x1a8] sm:$0xff]
    %v111 = vld [vmem:[%s2 + $0x1b0] sm:$0xff]
    %v112 = vld [vmem:[%s2 + $0x1b8] sm:$0xff]
    %v113 = vld [vmem:[%s2 + $0x1c0] sm:$0xff]
    %v114 = vld [vmem:[%s2 + $0x1c8] sm:$0xff]
    %v115 = vld [vmem:[%s2 + $0x1d0] sm:$0xff]
    %v116 = vld [vmem:[%s2 + $0x1d8] sm:$0xff]
    %v117 = vld [vmem:[%s2 + $0x1e0] sm:$0xff]
    %v118 = vld [vmem:[%s2 + $0x1e8] sm:$0xff]
    %v119 = vld [vmem:[%s2 + $0x1f0] sm:$0xff]
    %v120 = vld [vmem:[%s2 + $0x1f8] sm:$0xff]
    %v121 = vld [vmem:[%s2 + $0x200] sm:$0xff]
    %v122 = vld [vmem:[%s2 + $0x208] sm:$0xff]
    %v123 = vld [vmem:[%s2 + $0x210] sm:$0xff]
    %v124 = vld [vmem:[%s2 + $0x218] sm:$0xff]
    %v125 = vld [vmem:[%s2 + $0x220] sm:$0xff]
    %v126 = vld [vmem:[%s2 + $0x228] sm:$0xff]
    %v127 = vld [vmem:[%s2 + $0x230] sm:$0xff]
    %v128 = vld [vmem:[%s2 + $0x238] sm:$0xff]
    %v129 = vld [vmem:[%s2 + $0x240] sm:$0xff]
    %v130 = vld [vmem:[%s2 + $0x248] sm:$0xff]
    %v131 = vld [vmem:[%s2 + $0x250] sm:$0xff]
    %v132 = vld [vmem:[%s2 + $0x258] sm:$0xff]
    %v133 = vld [vmem:[%s2 + $0x260] sm:$0xff]
    %v134 = vld [vmem:[%s2 + $0x268] sm:$0xff]
    %v135 = vld [vmem:[%s2 + $0x270] sm:$0xff]
    %v136 = vld [vmem:[%s2 + $0x278] sm:$0xff]
    %v137 = vld [vmem:[%s2 + $0x280] sm:$0xff]
    %v138 = vld [vmem:[%s2 + $0x288] sm:$0xff]
    %v139 = vld [vmem:[%s2 + $0x290] sm:$0xff]
    %v140 = vld [vmem:[%s2 + $0x298] sm:$0xff]
    %v141 = vld [vmem:[%s2 + $0x2a0] sm:$0xff]
    %v142 = vld [vmem:[%s2 + $0x2a8] sm:$0xff]
    %v143 = vld [vmem:[%s2 + $0x2b0] sm:$0xff]
    %v144 = vld [vmem:[%s2 + $0x2b8] sm:$0xff]
    %v145 = vld [vmem:[%s2 + $0x2c0] sm:$0xff]
    %v146 = vld [vmem:[%s2 + $0x2c8] sm:$0xff]
    %v147 = vld [vmem:[%s2 + $0x2d0] sm:$0xff]
    %v148 = vld [vmem:[%s2 + $0x2d8] sm:$0xff]
    %v149 = vld [vmem:[%s2 + $0x2e0] sm:$0xff]
    %v150 = vld [vmem:[%s2 + $0x2e8] sm:$0xff]
    %v151 = vld [vmem:[%s2 + $0x2f0] sm:$0xff]
    %v152 = vld [vmem:[%s2 + $0x2f8] sm:$0xff]
    %v153 = vld [vmem:[%s2 + $0x300] sm:$0xff]
    %v154 = vld [vmem:[%s2 + $0x308] sm:$0xff]
    %v155 = vld [vmem:[%s2 + $0x310] sm:$0xff]
    %v156 = vld [vmem:[%s2 + $0x318] sm:$0xff]
    %v157 = vld [vmem:[%s2 + $0x320] sm:$0xff]
    %v158 = vld [vmem:[%s2 + $0x328] sm:$0xff]
    %v159 = vld [vmem:[%s2 + $0x330] sm:$0xff]
    %v160 = vld [vmem:[%s2 + $0x338] sm:$0xff]
    %v161 = vld [vmem:[%s2 + $0x340] sm:$0xff]
    %v162 = vld [vmem:[%s2 + $0x348] sm:$0xff]
    %v163 = vld [vmem:[%s2 + $0x350] sm:$0xff]
    %v164 = vld [vmem:[%s2 + $0x358] sm:$0xff]
    %v165 = vld [vmem:[%s2 + $0x360] sm:$0xff]
    %v166 = vld [vmem:[%s2 + $0x368] sm:$0xff]
    %v167 = vld [vmem:[%s2 + $0x370] sm:$0xff]
    %v168 = vld [vmem:[%s2 + $0x378] sm:$0xff]
    %v169 = vld [vmem:[%s2 + $0x380] sm:$0xff]
    %v170 = vld [vmem:[%s2 + $0x388] sm:$0xff]
    %v171 = vld [vmem:[%s2 + $0x390] sm:$0xff]
    %v172 = vld [vmem:[%s2 + $0x398] sm:$0xff]
    %v173 = vld [vmem:[%s2 + $0x3a0] sm:$0xff]
    %v174 = vld [vmem:[%s2 + $0x3a8] sm:$0xff]
    %v175 = vld [vmem:[%s2 + $0x3b0] sm:$0xff]
    %v176 = vld [vmem:[%s2 + $0x3b8] sm:$0xff]
    %v177 = vld [vmem:[%s2 + $0x3c0] sm:$0xff]
    %v178 = vld [vmem:[%s2 + $0x3c8] sm:$0xff]
    %v179 = vld [vmem:[%s2 + $0x3d0] sm:$0xff]
    %v180 = vld [vmem:[%s2 + $0x3d8] sm:$0xff]
    %v181 = vld [vmem:[%s2 + $0x3e0] sm:$0xff]
    %v182 = vld [vmem:[%s2 + $0x3e8] sm:$0xff]
    %v183 = vld [vmem:[%s2 + $0x3f0] sm:$0xff]
    %v184 = vld [vmem:[%s2 + $0x3f8] sm:$0xff]
    %v185 = vld [vmem:[%s2 + $0x400] sm:$0xff]
    %v186 = vld [vmem:[%s2 + $0x408] sm:$0xff]
    %v187 = vld [vmem:[%s2 + $0x410] sm:$0xff]
    %v188 = vld [vmem:[%s2 + $0x418] sm:$0xff]
    %v189 = vld [vmem:[%s2 + $0x420] sm:$0xff]
    %v190 = vld [vmem:[%s2 + $0x428] sm:$0xff]
    %v191 = vld [vmem:[%s2 + $0x430] sm:$0xff]
    %v192 = vld [vmem:[%s2 + $0x438] sm:$0xff]
    %v193 = vld [vmem:[%s2 + $0x440] sm:$0xff]
    %v194 = vld [vmem:[%s2 + $0x448] sm:$0xff]
    %v195 = vld [vmem:[%s2 + $0x450] sm:$0xff]
    %v196 = vld [vmem:[%s2 + $0x458] sm:$0xff]
    %v197 = vld [vmem:[%s2 + $0x460] sm:$0xff]
    %v198 = vld [vmem:[%s2 + $0x468] sm:$0xff]
    %v199 = vld [vmem:[%s2 + $0x470] sm:$0xff]
    %v200 = vld [vmem:[%s2 + $0x478] sm:$0xff]
    %v201 = vld [vmem:[%s2 + $0x480] sm:$0xff]
    %v202 = vld [vmem:[%s2 + $0x488] sm:$0xff]
    %v203 = vld [vmem:[%s2 + $0x490] sm:$0xff]
    %v204 = vld [vmem:[%s2 + $0x498] sm:$0xff]
    %v205 = vld [vmem:[%s2 + $0x4a0] sm:$0xff]
    %v206 = vld [vmem:[%s2 + $0x4a8] sm:$0xff]
    %v207 = vld [vmem:[%s2 + $0x4b0] sm:$0xff]
    %v208 = vld [vmem:[%s2 + $0x4b8] sm:$0xff]
    %v209 = vld [vmem:[%s2 + $0x4c0] sm:$0xff]
    %v210 = vld [vmem:[%s2 + $0x4c8] sm:$0xff]
    %v211 = vld [vmem:[%s2 + $0x4d0] sm:$0xff]
    %v212 = vld [vmem:[%s2 + $0x4d8] sm:$0xff]
    %v213 = vld [vmem:[%s2 + $0x4e0] sm:$0xff]
    %v214 = vld [vmem:[%s2 + $0x4e8] sm:$0xff]
    %v215 = vld [vmem:[%s2 + $0x4f0] sm:$0xff]
    %v216 = vld [vmem:[%s2 + $0x4f8] sm:$0xff]
    %v217 = vld [vmem:[%s2 + $0x500] sm:$0xff]
    %v218 = vld [vmem:[%s2 + $0x508] sm:$0xff]
    %v219 = vld [vmem:[%s2 + $0x510] sm:$0xff]
    %v220 = vld [vmem:[%s2 + $0x518] sm:$0xff]
    %v221 = vld [vmem:[%s2 + $0x520] sm:$0xff]
    %v222 = vld [vmem:[%s2 + $0x528] sm:$0xff]
    %v223 = vld [vmem:[%s2 + $0x530] sm:$0xff]
    %v224 = vld [vmem:[%s2 + $0x538] sm:$0xff]
    %v225 = vld [vmem:[%s2 + $0x540] sm:$0xff]
    %v226 = vld [vmem:[%s2 + $0x548] sm:$0xff]
    %v227 = vld [vmem:[%s2 + $0x550] sm:$0xff]
    %v228 = vld [vmem:[%s2 + $0x558] sm:$0xff]
    %v229 = vld [vmem:[%s2 + $0x560] sm:$0xff]
    %v230 = vld [vmem:[%s2 + $0x568] sm:$0xff]
    %v231 = vld [vmem:[%s2 + $0x570] sm:$0xff]
    %v232 = vld [vmem:[%s2 + $0x578] sm:$0xff]
    %v233 = vld [vmem:[%s2 + $0x580] sm:$0xff]
    %v234 = vld [vmem:[%s2 + $0x588] sm:$0xff]
    %v235 = vld [vmem:[%s2 + $0x590] sm:$0xff]
    %v236 = vld [vmem:[%s2 + $0x598] sm:$0xff]
    %v237 = vld [vmem:[%s2 + $0x5a0] sm:$0xff]
    %v238 = vld [vmem:[%s2 + $0x5a8] sm:$0xff]
    %v239 = vld [vmem:[%s2 + $0x5b0] sm:$0xff]
    %v240 = vld [vmem:[%s2 + $0x5b8] sm:$0xff]
    %v241 = vld [vmem:[%s2 + $0x5c0] sm:$0xff]
    %v242 = vld [vmem:[%s2 + $0x5c8] sm:$0xff]
    %v243 = vld [vmem:[%s2 + $0x5d0] sm:$0xff]
    %v244 = vld [vmem:[%s2 + $0x5d8] sm:$0xff]
    %v245 = vld [vmem:[%s2 + $0x5e0] sm:$0xff]
    %v246 = vld [vmem:[%s2 + $0x5e8] sm:$0xff]
    %v247 = vld [vmem:[%s2 + $0x5f0] sm:$0xff]
    %v248 = vld [vmem:[%s2 + $0x5f8] sm:$0xff]
    %v249 = vld [vmem:[%s2 + $0x600] sm:$0xff]
    %v250 = vld [vmem:[%s2 + $0x608] sm:$0xff]
    %v251 = vld [vmem:[%s2 + $0x610] sm:$0xff]
    %v252 = vld [vmem:[%s2 + $0x618] sm:$0xff]
    %v253 = vld [vmem:[%s3] sm:$0xf]
    %v255 = vperm.slane %v253, 0
    %v256 = vperm.slane %v253, 1
    %v257 = vperm.slane %v253, 2
    %v258 = vperm.slane %v253, 3
    %v271 = vunpack.c.l.b16 %v49
    %v272 = vunpack.c.h.b16 %v49
    %v273 = vunpack.c.l.b16 %v50
    %v274 = vunpack.c.h.b16 %v50
    %v275 = vunpack.c.l.b16 %v51
    %v276 = vunpack.c.h.b16 %v51
    %v277 = vunpack.c.l.b16 %v52
    %v278 = vunpack.c.l.b16 %v53
    %v279 = vunpack.c.h.b16 %v53
    %v280 = vunpack.c.l.b16 %v54
    %v281 = vunpack.c.h.b16 %v54
    %v282 = vunpack.c.l.b16 %v55
    %v283 = vunpack.c.h.b16 %v55
    %v284 = vunpack.c.l.b16 %v56
    %v285 = vpack.c.b16 %v278, %v271
    %v286 = vpack.c.b16 %v279, %v272
    %v287 = vpack.c.b16 %v280, %v273
    %v288 = vpack.c.b16 %v281, %v274
    %v289 = vpack.c.b16 %v282, %v275
    %v290 = vpack.c.b16 %v283, %v276
    %v291 = vpack.c.b16 %v284, %v277
    %v494 = vunpack.c.l.b16 %v57
    %v495 = vunpack.c.h.b16 %v57
    %v496 = vunpack.c.l.b16 %v58
    %v497 = vunpack.c.h.b16 %v58
    %v498 = vunpack.c.l.b16 %v59
    %v499 = vunpack.c.h.b16 %v59
    %v500 = vunpack.c.l.b16 %v60
    %v501 = vunpack.c.h.b16 %v60
    %v502 = vunpack.c.l.b16 %v61
    %v503 = vunpack.c.h.b16 %v61
    %v504 = vunpack.c.l.b16 %v62
    %v505 = vunpack.c.h.b16 %v62
    %v506 = vunpack.c.l.b16 %v63
    %v507 = vunpack.c.h.b16 %v63
    %v508 = vunpack.c.l.b16 %v64
    %v509 = vunpack.c.h.b16 %v64
    %v510 = vunpack.c.l.b16 %v65
    %v511 = vunpack.c.h.b16 %v65
    %v512 = vunpack.c.l.b16 %v66
    %v513 = vunpack.c.h.b16 %v66
    %v514 = vunpack.c.l.b16 %v67
    %v515 = vunpack.c.h.b16 %v67
    %v516 = vunpack.c.l.b16 %v68
    %v517 = vunpack.c.h.b16 %v68
    %v518 = vunpack.c.l.b16 %v69
    %v519 = vunpack.c.h.b16 %v69
    %v520 = vunpack.c.l.b16 %v70
    %v521 = vunpack.c.h.b16 %v70
    %v522 = vunpack.c.l.b16 %v71
    %v523 = vunpack.c.h.b16 %v71
    %v524 = vunpack.c.l.b16 %v72
    %v525 = vunpack.c.h.b16 %v72
    %v526 = vunpack.c.l.b16 %v73
    %v527 = vunpack.c.h.b16 %v73
    %v528 = vunpack.c.l.b16 %v74
    %v529 = vunpack.c.h.b16 %v74
    %v530 = vunpack.c.l.b16 %v75
    %v531 = vunpack.c.h.b16 %v75
    %v532 = vunpack.c.l.b16 %v76
    %v533 = vunpack.c.h.b16 %v76
    %v534 = vunpack.c.l.b16 %v77
    %v535 = vunpack.c.h.b16 %v77
    %v536 = vunpack.c.l.b16 %v78
    %v537 = vunpack.c.h.b16 %v78
    %v538 = vunpack.c.l.b16 %v79
    %v539 = vunpack.c.h.b16 %v79
    %v540 = vunpack.c.l.b16 %v80
    %v541 = vunpack.c.h.b16 %v80
    %v542 = vunpack.c.l.b16 %v81
    %v543 = vunpack.c.h.b16 %v81
    %v544 = vunpack.c.l.b16 %v82
    %v545 = vunpack.c.h.b16 %v82
    %v546 = vunpack.c.l.b16 %v83
    %v547 = vunpack.c.h.b16 %v83
    %v548 = vunpack.c.l.b16 %v84
    %v549 = vunpack.c.h.b16 %v84
    %v550 = vunpack.c.l.b16 %v85
    %v551 = vunpack.c.h.b16 %v85
    %v552 = vunpack.c.l.b16 %v86
    %v553 = vunpack.c.h.b16 %v86
    %v554 = vunpack.c.l.b16 %v87
    %v555 = vunpack.c.h.b16 %v87
    %v556 = vunpack.c.l.b16 %v88
    %v557 = vunpack.c.h.b16 %v88
    %v558 = vunpack.c.l.b16 %v89
    %v559 = vunpack.c.h.b16 %v89
    %v560 = vunpack.c.l.b16 %v90
    %v561 = vunpack.c.h.b16 %v90
    %v562 = vunpack.c.l.b16 %v91
    %v563 = vunpack.c.h.b16 %v91
    %v564 = vunpack.c.l.b16 %v92
    %v565 = vunpack.c.h.b16 %v92
    %v566 = vunpack.c.l.b16 %v93
    %v567 = vunpack.c.h.b16 %v93
    %v568 = vunpack.c.l.b16 %v94
    %v569 = vunpack.c.h.b16 %v94
    %v570 = vunpack.c.l.b16 %v95
    %v571 = vunpack.c.h.b16 %v95
    %v572 = vunpack.c.l.b16 %v96
    %v573 = vunpack.c.h.b16 %v96
    %v574 = vunpack.c.l.b16 %v97
    %v575 = vunpack.c.h.b16 %v97
    %v576 = vunpack.c.l.b16 %v98
    %v577 = vunpack.c.h.b16 %v98
    %v578 = vunpack.c.l.b16 %v99
    %v579 = vunpack.c.h.b16 %v99
    %v580 = vunpack.c.l.b16 %v100
    %v581 = vunpack.c.h.b16 %v100
    %v582 = vunpack.c.l.b16 %v101
    %v583 = vunpack.c.h.b16 %v101
    %v584 = vunpack.c.l.b16 %v102
    %v585 = vunpack.c.h.b16 %v102
    %v586 = vunpack.c.l.b16 %v103
    %v587 = vunpack.c.h.b16 %v103
    %v588 = vunpack.c.l.b16 %v104
    %v589 = vunpack.c.h.b16 %v104
    %v590 = vunpack.c.l.b16 %v105
    %v591 = vunpack.c.h.b16 %v105
    %v592 = vunpack.c.l.b16 %v106
    %v593 = vunpack.c.h.b16 %v106
    %v594 = vunpack.c.l.b16 %v107
    %v595 = vunpack.c.h.b16 %v107
    %v596 = vunpack.c.l.b16 %v108
    %v597 = vunpack.c.h.b16 %v108
    %v598 = vunpack.c.l.b16 %v109
    %v599 = vunpack.c.h.b16 %v109
    %v600 = vunpack.c.l.b16 %v110
    %v601 = vunpack.c.h.b16 %v110
    %v602 = vunpack.c.l.b16 %v111
    %v603 = vunpack.c.h.b16 %v111
    %v604 = vunpack.c.l.b16 %v112
    %v605 = vunpack.c.h.b16 %v112
    %v606 = vunpack.c.l.b16 %v113
    %v607 = vunpack.c.h.b16 %v113
    %v608 = vunpack.c.l.b16 %v114
    %v609 = vunpack.c.h.b16 %v114
    %v610 = vunpack.c.l.b16 %v115
    %v611 = vunpack.c.h.b16 %v115
    %v612 = vunpack.c.l.b16 %v116
    %v613 = vunpack.c.h.b16 %v116
    %v614 = vunpack.c.l.b16 %v117
    %v615 = vunpack.c.h.b16 %v117
    %v616 = vunpack.c.l.b16 %v118
    %v617 = vunpack.c.h.b16 %v118
    %v618 = vunpack.c.l.b16 %v119
    %v619 = vunpack.c.h.b16 %v119
    %v620 = vunpack.c.l.b16 %v120
    %v621 = vunpack.c.h.b16 %v120
    %v622 = vunpack.c.l.b16 %v121
    %v623 = vunpack.c.h.b16 %v121
    %v624 = vunpack.c.l.b16 %v122
    %v625 = vunpack.c.h.b16 %v122
    %v626 = vunpack.c.l.b16 %v123
    %v627 = vunpack.c.h.b16 %v123
    %v628 = vunpack.c.l.b16 %v124
    %v629 = vunpack.c.h.b16 %v124
    %v630 = vunpack.c.l.b16 %v125
    %v631 = vunpack.c.h.b16 %v125
    %v632 = vunpack.c.l.b16 %v126
    %v633 = vunpack.c.h.b16 %v126
    %v634 = vunpack.c.l.b16 %v127
    %v635 = vunpack.c.h.b16 %v127
    %v636 = vunpack.c.l.b16 %v128
    %v637 = vunpack.c.h.b16 %v128
    %v638 = vunpack.c.l.b16 %v129
    %v639 = vunpack.c.h.b16 %v129
    %v640 = vunpack.c.l.b16 %v130
    %v641 = vunpack.c.h.b16 %v130
    %v642 = vunpack.c.l.b16 %v131
    %v643 = vunpack.c.h.b16 %v131
    %v644 = vunpack.c.l.b16 %v132
    %v645 = vunpack.c.h.b16 %v132
    %v646 = vunpack.c.l.b16 %v133
    %v647 = vunpack.c.h.b16 %v133
    %v648 = vunpack.c.l.b16 %v134
    %v649 = vunpack.c.h.b16 %v134
    %v650 = vunpack.c.l.b16 %v135
    %v651 = vunpack.c.h.b16 %v135
    %v652 = vunpack.c.l.b16 %v136
    %v653 = vunpack.c.h.b16 %v136
    %v654 = vunpack.c.l.b16 %v137
    %v655 = vunpack.c.h.b16 %v137
    %v656 = vunpack.c.l.b16 %v138
    %v657 = vunpack.c.h.b16 %v138
    %v658 = vunpack.c.l.b16 %v139
    %v659 = vunpack.c.h.b16 %v139
    %v660 = vunpack.c.l.b16 %v140
    %v661 = vunpack.c.h.b16 %v140
    %v662 = vunpack.c.l.b16 %v141
    %v663 = vunpack.c.h.b16 %v141
    %v664 = vunpack.c.l.b16 %v142
    %v665 = vunpack.c.h.b16 %v142
    %v666 = vunpack.c.l.b16 %v143
    %v667 = vunpack.c.h.b16 %v143
    %v668 = vunpack.c.l.b16 %v144
    %v669 = vunpack.c.h.b16 %v144
    %v670 = vunpack.c.l.b16 %v145
    %v671 = vunpack.c.h.b16 %v145
    %v672 = vunpack.c.l.b16 %v146
    %v673 = vunpack.c.h.b16 %v146
    %v674 = vunpack.c.l.b16 %v147
    %v675 = vunpack.c.h.b16 %v147
    %v676 = vunpack.c.l.b16 %v148
    %v677 = vunpack.c.h.b16 %v148
    %v678 = vunpack.c.l.b16 %v149
    %v679 = vunpack.c.h.b16 %v149
    %v680 = vunpack.c.l.b16 %v150
    %v681 = vunpack.c.h.b16 %v150
    %v682 = vunpack.c.l.b16 %v151
    %v683 = vunpack.c.h.b16 %v151
    %v684 = vunpack.c.l.b16 %v152
    %v685 = vunpack.c.h.b16 %v152
    %v686 = vunpack.c.l.b16 %v153
    %v687 = vunpack.c.h.b16 %v153
    %v688 = vunpack.c.l.b16 %v154
    %v689 = vunpack.c.h.b16 %v154
    %v690 = vunpack.c.l.b16 %v155
    %v691 = vunpack.c.h.b16 %v155
    %v692 = vunpack.c.l.b16 %v156
    %v693 = vunpack.c.h.b16 %v156
    %v694 = vunpack.c.l.b16 %v157
    %v695 = vunpack.c.h.b16 %v157
    %v696 = vunpack.c.l.b16 %v158
    %v697 = vunpack.c.h.b16 %v158
    %v698 = vunpack.c.l.b16 %v159
    %v699 = vunpack.c.h.b16 %v159
    %v700 = vunpack.c.l.b16 %v160
    %v701 = vunpack.c.h.b16 %v160
    %v702 = vunpack.c.l.b16 %v161
    %v703 = vunpack.c.h.b16 %v161
    %v704 = vunpack.c.l.b16 %v162
    %v705 = vunpack.c.h.b16 %v162
    %v706 = vunpack.c.l.b16 %v163
    %v707 = vunpack.c.h.b16 %v163
    %v708 = vunpack.c.l.b16 %v164
    %v709 = vunpack.c.h.b16 %v164
    %v710 = vunpack.c.l.b16 %v165
    %v711 = vunpack.c.h.b16 %v165
    %v712 = vunpack.c.l.b16 %v166
    %v713 = vunpack.c.h.b16 %v166
    %v714 = vunpack.c.l.b16 %v167
    %v715 = vunpack.c.h.b16 %v167
    %v716 = vunpack.c.l.b16 %v168
    %v717 = vunpack.c.h.b16 %v168
    %v718 = vunpack.c.l.b16 %v169
    %v719 = vunpack.c.h.b16 %v169
    %v720 = vunpack.c.l.b16 %v170
    %v721 = vunpack.c.h.b16 %v170
    %v722 = vunpack.c.l.b16 %v171
    %v723 = vunpack.c.h.b16 %v171
    %v724 = vunpack.c.l.b16 %v172
    %v725 = vunpack.c.h.b16 %v172
    %v726 = vunpack.c.l.b16 %v173
    %v727 = vunpack.c.h.b16 %v173
    %v728 = vunpack.c.l.b16 %v174
    %v729 = vunpack.c.h.b16 %v174
    %v730 = vunpack.c.l.b16 %v175
    %v731 = vunpack.c.h.b16 %v175
    %v732 = vunpack.c.l.b16 %v176
    %v733 = vunpack.c.h.b16 %v176
    %v734 = vunpack.c.l.b16 %v177
    %v735 = vunpack.c.h.b16 %v177
    %v736 = vunpack.c.l.b16 %v178
    %v737 = vunpack.c.h.b16 %v178
    %v738 = vunpack.c.l.b16 %v179
    %v739 = vunpack.c.h.b16 %v179
    %v740 = vunpack.c.l.b16 %v180
    %v741 = vunpack.c.h.b16 %v180
    %v742 = vunpack.c.l.b16 %v181
    %v743 = vunpack.c.h.b16 %v181
    %v744 = vunpack.c.l.b16 %v182
    %v745 = vunpack.c.h.b16 %v182
    %v746 = vunpack.c.l.b16 %v183
    %v747 = vunpack.c.h.b16 %v183
    %v748 = vunpack.c.l.b16 %v184
    %v749 = vunpack.c.h.b16 %v184
    %v750 = vunpack.c.l.b16 %v185
    %v751 = vunpack.c.h.b16 %v185
    %v752 = vunpack.c.l.b16 %v186
    %v753 = vunpack.c.h.b16 %v186
    %v754 = vunpack.c.l.b16 %v187
    %v755 = vunpack.c.h.b16 %v187
    %v756 = vunpack.c.l.b16 %v188
    %v757 = vunpack.c.h.b16 %v188
    %v758 = vunpack.c.l.b16 %v189
    %v759 = vunpack.c.h.b16 %v189
    %v760 = vunpack.c.l.b16 %v190
    %v761 = vunpack.c.h.b16 %v190
    %v762 = vunpack.c.l.b16 %v191
    %v763 = vunpack.c.h.b16 %v191
    %v764 = vunpack.c.l.b16 %v192
    %v765 = vunpack.c.h.b16 %v192
    %v766 = vunpack.c.l.b16 %v193
    %v767 = vunpack.c.h.b16 %v193
    %v768 = vunpack.c.l.b16 %v194
    %v769 = vunpack.c.h.b16 %v194
    %v770 = vunpack.c.l.b16 %v195
    %v771 = vunpack.c.h.b16 %v195
    %v772 = vunpack.c.l.b16 %v196
    %v773 = vunpack.c.h.b16 %v196
    %v774 = vunpack.c.l.b16 %v197
    %v775 = vunpack.c.h.b16 %v197
    %v776 = vunpack.c.l.b16 %v198
    %v777 = vunpack.c.h.b16 %v198
    %v778 = vunpack.c.l.b16 %v199
    %v779 = vunpack.c.h.b16 %v199
    %v780 = vunpack.c.l.b16 %v200
    %v781 = vunpack.c.h.b16 %v200
    %v782 = vunpack.c.l.b16 %v201
    %v783 = vunpack.c.h.b16 %v201
    %v784 = vunpack.c.l.b16 %v202
    %v785 = vunpack.c.h.b16 %v202
    %v786 = vunpack.c.l.b16 %v203
    %v787 = vunpack.c.h.b16 %v203
    %v788 = vunpack.c.l.b16 %v204
    %v789 = vunpack.c.h.b16 %v204
    %v790 = vunpack.c.l.b16 %v205
    %v791 = vunpack.c.h.b16 %v205
    %v792 = vunpack.c.l.b16 %v206
    %v793 = vunpack.c.h.b16 %v206
    %v794 = vunpack.c.l.b16 %v207
    %v795 = vunpack.c.h.b16 %v207
    %v796 = vunpack.c.l.b16 %v208
    %v797 = vunpack.c.h.b16 %v208
    %v798 = vunpack.c.l.b16 %v209
    %v799 = vunpack.c.h.b16 %v209
    %v800 = vunpack.c.l.b16 %v210
    %v801 = vunpack.c.h.b16 %v210
    %v802 = vunpack.c.l.b16 %v211
    %v803 = vunpack.c.h.b16 %v211
    %v804 = vunpack.c.l.b16 %v212
    %v805 = vunpack.c.h.b16 %v212
    %v806 = vunpack.c.l.b16 %v213
    %v807 = vunpack.c.h.b16 %v213
    %v808 = vunpack.c.l.b16 %v214
    %v809 = vunpack.c.h.b16 %v214
    %v810 = vunpack.c.l.b16 %v215
    %v811 = vunpack.c.h.b16 %v215
    %v812 = vunpack.c.l.b16 %v216
    %v813 = vunpack.c.h.b16 %v216
    %v814 = vunpack.c.l.b16 %v217
    %v815 = vunpack.c.h.b16 %v217
    %v816 = vunpack.c.l.b16 %v218
    %v817 = vunpack.c.h.b16 %v218
    %v818 = vunpack.c.l.b16 %v219
    %v819 = vunpack.c.h.b16 %v219
    %v820 = vunpack.c.l.b16 %v220
    %v821 = vunpack.c.h.b16 %v220
    %v822 = vunpack.c.l.b16 %v221
    %v823 = vunpack.c.h.b16 %v221
    %v824 = vunpack.c.l.b16 %v222
    %v825 = vunpack.c.h.b16 %v222
    %v826 = vunpack.c.l.b16 %v223
    %v827 = vunpack.c.h.b16 %v223
    %v828 = vunpack.c.l.b16 %v224
    %v829 = vunpack.c.h.b16 %v224
    %v830 = vunpack.c.l.b16 %v225
    %v831 = vunpack.c.h.b16 %v225
    %v832 = vunpack.c.l.b16 %v226
    %v833 = vunpack.c.h.b16 %v226
    %v834 = vunpack.c.l.b16 %v227
    %v835 = vunpack.c.h.b16 %v227
    %v836 = vunpack.c.l.b16 %v228
    %v837 = vunpack.c.h.b16 %v228
    %v838 = vunpack.c.l.b16 %v229
    %v839 = vunpack.c.h.b16 %v229
    %v840 = vunpack.c.l.b16 %v230
    %v841 = vunpack.c.h.b16 %v230
    %v842 = vunpack.c.l.b16 %v231
    %v843 = vunpack.c.h.b16 %v231
    %v844 = vunpack.c.l.b16 %v232
    %v845 = vunpack.c.h.b16 %v232
    %v846 = vunpack.c.l.b16 %v233
    %v847 = vunpack.c.h.b16 %v233
    %v848 = vunpack.c.l.b16 %v234
    %v849 = vunpack.c.h.b16 %v234
    %v850 = vunpack.c.l.b16 %v235
    %v851 = vunpack.c.h.b16 %v235
    %v852 = vunpack.c.l.b16 %v236
    %v853 = vunpack.c.h.b16 %v236
    %v854 = vunpack.c.l.b16 %v237
    %v855 = vunpack.c.h.b16 %v237
    %v856 = vunpack.c.l.b16 %v238
    %v857 = vunpack.c.h.b16 %v238
    %v858 = vunpack.c.l.b16 %v239
    %v859 = vunpack.c.h.b16 %v239
    %v860 = vunpack.c.l.b16 %v240
    %v861 = vunpack.c.h.b16 %v240
    %v862 = vunpack.c.l.b16 %v241
    %v863 = vunpack.c.h.b16 %v241
    %v864 = vunpack.c.l.b16 %v242
    %v865 = vunpack.c.h.b16 %v242
    %v866 = vunpack.c.l.b16 %v243
    %v867 = vunpack.c.h.b16 %v243
    %v868 = vunpack.c.l.b16 %v244
    %v869 = vunpack.c.h.b16 %v244
    %v870 = vunpack.c.l.b16 %v245
    %v871 = vunpack.c.h.b16 %v245
    %v872 = vunpack.c.l.b16 %v246
    %v873 = vunpack.c.h.b16 %v246
    %v874 = vunpack.c.l.b16 %v247
    %v875 = vunpack.c.h.b16 %v247
    %v876 = vunpack.c.l.b16 %v248
    %v877 = vunpack.c.h.b16 %v248
    %v878 = vunpack.c.l.b16 %v249
    %v879 = vunpack.c.h.b16 %v249
    %v880 = vunpack.c.l.b16 %v250
    %v881 = vunpack.c.h.b16 %v250
    %v882 = vunpack.c.l.b16 %v251
    %v883 = vunpack.c.h.b16 %v251
    %v884 = vunpack.c.l.b16 %v252
    %v885 = vunpack.c.h.b16 %v252
    %v886 = vpack.c.b16 %v498, %v494
    %v887 = vpack.c.b16 %v499, %v495
    %v888 = vpack.c.b16 %v500, %v496
    %v889 = vpack.c.b16 %v501, %v497
    %v890 = vpack.c.b16 %v506, %v502
    %v891 = vpack.c.b16 %v507, %v503
    %v892 = vpack.c.b16 %v508, %v504
    %v893 = vpack.c.b16 %v509, %v505
    %v894 = vpack.c.b16 %v514, %v510
    %v895 = vpack.c.b16 %v515, %v511
    %v896 = vpack.c.b16 %v516, %v512
    %v897 = vpack.c.b16 %v517, %v513
    %v898 = vpack.c.b16 %v522, %v518
    %v899 = vpack.c.b16 %v523, %v519
    %v900 = vpack.c.b16 %v524, %v520
    %v901 = vpack.c.b16 %v525, %v521
    %v902 = vpack.c.b16 %v530, %v526
    %v903 = vpack.c.b16 %v531, %v527
    %v904 = vpack.c.b16 %v532, %v528
    %v905 = vpack.c.b16 %v533, %v529
    %v906 = vpack.c.b16 %v538, %v534
    %v907 = vpack.c.b16 %v539, %v535
    %v908 = vpack.c.b16 %v540, %v536
    %v909 = vpack.c.b16 %v541, %v537
    %v910 = vpack.c.b16 %v546, %v542
    %v911 = vpack.c.b16 %v547, %v543
    %v912 = vpack.c.b16 %v548, %v544
    %v913 = vpack.c.b16 %v549, %v545
    %v914 = vpack.c.b16 %v554, %v550
    %v915 = vpack.c.b16 %v555, %v551
    %v916 = vpack.c.b16 %v556, %v552
    %v917 = vpack.c.b16 %v557, %v553
    %v918 = vpack.c.b16 %v562, %v558
    %v919 = vpack.c.b16 %v563, %v559
    %v920 = vpack.c.b16 %v564, %v560
    %v921 = vpack.c.b16 %v565, %v561
    %v922 = vpack.c.b16 %v570, %v566
    %v923 = vpack.c.b16 %v571, %v567
    %v924 = vpack.c.b16 %v572, %v568
    %v925 = vpack.c.b16 %v573, %v569
    %v926 = vpack.c.b16 %v578, %v574
    %v927 = vpack.c.b16 %v579, %v575
    %v928 = vpack.c.b16 %v580, %v576
    %v929 = vpack.c.b16 %v581, %v577
    %v930 = vpack.c.b16 %v586, %v582
    %v931 = vpack.c.b16 %v587, %v583
    %v932 = vpack.c.b16 %v588, %v584
    %v933 = vpack.c.b16 %v589, %v585
    %v934 = vpack.c.b16 %v594, %v590
    %v935 = vpack.c.b16 %v595, %v591
    %v936 = vpack.c.b16 %v596, %v592
    %v937 = vpack.c.b16 %v597, %v593
    %v938 = vpack.c.b16 %v602, %v598
    %v939 = vpack.c.b16 %v603, %v599
    %v940 = vpack.c.b16 %v604, %v600
    %v941 = vpack.c.b16 %v605, %v601
    %v942 = vpack.c.b16 %v610, %v606
    %v943 = vpack.c.b16 %v611, %v607
    %v944 = vpack.c.b16 %v612, %v608
    %v945 = vpack.c.b16 %v613, %v609
    %v946 = vpack.c.b16 %v618, %v614
    %v947 = vpack.c.b16 %v619, %v615
    %v948 = vpack.c.b16 %v620, %v616
    %v949 = vpack.c.b16 %v621, %v617
    %v950 = vpack.c.b16 %v626, %v622
    %v951 = vpack.c.b16 %v627, %v623
    %v952 = vpack.c.b16 %v628, %v624
    %v953 = vpack.c.b16 %v629, %v625
    %v954 = vpack.c.b16 %v634, %v630
    %v955 = vpack.c.b16 %v635, %v631
    %v956 = vpack.c.b16 %v636, %v632
    %v957 = vpack.c.b16 %v637, %v633
    %v958 = vpack.c.b16 %v642, %v638
    %v959 = vpack.c.b16 %v643, %v639
    %v960 = vpack.c.b16 %v644, %v640
    %v961 = vpack.c.b16 %v645, %v641
    %v962 = vpack.c.b16 %v650, %v646
    %v963 = vpack.c.b16 %v651, %v647
    %v964 = vpack.c.b16 %v652, %v648
    %v965 = vpack.c.b16 %v653, %v649
    %v966 = vpack.c.b16 %v658, %v654
    %v967 = vpack.c.b16 %v659, %v655
    %v968 = vpack.c.b16 %v660, %v656
    %v969 = vpack.c.b16 %v661, %v657
    %v970 = vpack.c.b16 %v666, %v662
    %v971 = vpack.c.b16 %v667, %v663
    %v972 = vpack.c.b16 %v668, %v664
    %v973 = vpack.c.b16 %v669, %v665
    %v974 = vpack.c.b16 %v674, %v670
    %v975 = vpack.c.b16 %v675, %v671
    %v976 = vpack.c.b16 %v676, %v672
    %v977 = vpack.c.b16 %v677, %v673
    %v978 = vpack.c.b16 %v682, %v678
    %v979 = vpack.c.b16 %v683, %v679
    %v980 = vpack.c.b16 %v684, %v680
    %v981 = vpack.c.b16 %v685, %v681
    %v982 = vpack.c.b16 %v690, %v686
    %v983 = vpack.c.b16 %v691, %v687
    %v984 = vpack.c.b16 %v692, %v688
    %v985 = vpack.c.b16 %v693, %v689
    %v986 = vpack.c.b16 %v698, %v694
    %v987 = vpack.c.b16 %v699, %v695
    %v988 = vpack.c.b16 %v700, %v696
    %v989 = vpack.c.b16 %v701, %v697
    %v990 = vpack.c.b16 %v706, %v702
    %v991 = vpack.c.b16 %v707, %v703
    %v992 = vpack.c.b16 %v708, %v704
    %v993 = vpack.c.b16 %v709, %v705
    %v994 = vpack.c.b16 %v714, %v710
    %v995 = vpack.c.b16 %v715, %v711
    %v996 = vpack.c.b16 %v716, %v712
    %v997 = vpack.c.b16 %v717, %v713
    %v998 = vpack.c.b16 %v722, %v718
    %v999 = vpack.c.b16 %v723, %v719
    %v1000 = vpack.c.b16 %v724, %v720
    %v1001 = vpack.c.b16 %v725, %v721
    %v1002 = vpack.c.b16 %v730, %v726
    %v1003 = vpack.c.b16 %v731, %v727
    %v1004 = vpack.c.b16 %v732, %v728
    %v1005 = vpack.c.b16 %v733, %v729
    %v1006 = vpack.c.b16 %v738, %v734
    %v1007 = vpack.c.b16 %v739, %v735
    %v1008 = vpack.c.b16 %v740, %v736
    %v1009 = vpack.c.b16 %v741, %v737
    %v1010 = vpack.c.b16 %v746, %v742
    %v1011 = vpack.c.b16 %v747, %v743
    %v1012 = vpack.c.b16 %v748, %v744
    %v1013 = vpack.c.b16 %v749, %v745
    %v1014 = vpack.c.b16 %v754, %v750
    %v1015 = vpack.c.b16 %v755, %v751
    %v1016 = vpack.c.b16 %v756, %v752
    %v1017 = vpack.c.b16 %v757, %v753
    %v1018 = vpack.c.b16 %v762, %v758
    %v1019 = vpack.c.b16 %v763, %v759
    %v1020 = vpack.c.b16 %v764, %v760
    %v1021 = vpack.c.b16 %v765, %v761
    %v1022 = vpack.c.b16 %v770, %v766
    %v1023 = vpack.c.b16 %v771, %v767
    %v1024 = vpack.c.b16 %v772, %v768
    %v1025 = vpack.c.b16 %v773, %v769
    %v1026 = vpack.c.b16 %v778, %v774
    %v1027 = vpack.c.b16 %v779, %v775
    %v1028 = vpack.c.b16 %v780, %v776
    %v1029 = vpack.c.b16 %v781, %v777
    %v1030 = vpack.c.b16 %v786, %v782
    %v1031 = vpack.c.b16 %v787, %v783
    %v1032 = vpack.c.b16 %v788, %v784
    %v1033 = vpack.c.b16 %v789, %v785
    %v1034 = vpack.c.b16 %v794, %v790
    %v1035 = vpack.c.b16 %v795, %v791
    %v1036 = vpack.c.b16 %v796, %v792
    %v1037 = vpack.c.b16 %v797, %v793
    %v1038 = vpack.c.b16 %v802, %v798
    %v1039 = vpack.c.b16 %v803, %v799
    %v1040 = vpack.c.b16 %v804, %v800
    %v1041 = vpack.c.b16 %v805, %v801
    %v1042 = vpack.c.b16 %v810, %v806
    %v1043 = vpack.c.b16 %v811, %v807
    %v1044 = vpack.c.b16 %v812, %v808
    %v1045 = vpack.c.b16 %v813, %v809
    %v1046 = vpack.c.b16 %v818, %v814
    %v1047 = vpack.c.b16 %v819, %v815
    %v1048 = vpack.c.b16 %v820, %v816
    %v1049 = vpack.c.b16 %v821, %v817
    %v1050 = vpack.c.b16 %v826, %v822
    %v1051 = vpack.c.b16 %v827, %v823
    %v1052 = vpack.c.b16 %v828, %v824
    %v1053 = vpack.c.b16 %v829, %v825
    %v1054 = vpack.c.b16 %v834, %v830
    %v1055 = vpack.c.b16 %v835, %v831
    %v1056 = vpack.c.b16 %v836, %v832
    %v1057 = vpack.c.b16 %v837, %v833
    %v1058 = vpack.c.b16 %v842, %v838
    %v1059 = vpack.c.b16 %v843, %v839
    %v1060 = vpack.c.b16 %v844, %v840
    %v1061 = vpack.c.b16 %v845, %v841
    %v1062 = vpack.c.b16 %v850, %v846
    %v1063 = vpack.c.b16 %v851, %v847
    %v1064 = vpack.c.b16 %v852, %v848
    %v1065 = vpack.c.b16 %v853, %v849
    %v1066 = vpack.c.b16 %v858, %v854
    %v1067 = vpack.c.b16 %v859, %v855
    %v1068 = vpack.c.b16 %v860, %v856
    %v1069 = vpack.c.b16 %v861, %v857
    %v1070 = vpack.c.b16 %v866, %v862
    %v1071 = vpack.c.b16 %v867, %v863
    %v1072 = vpack.c.b16 %v868, %v864
    %v1073 = vpack.c.b16 %v869, %v865
    %v1074 = vpack.c.b16 %v874, %v870
    %v1075 = vpack.c.b16 %v875, %v871
    %v1076 = vpack.c.b16 %v876, %v872
    %v1077 = vpack.c.b16 %v877, %v873
    %v1078 = vpack.c.b16 %v882, %v878
    %v1079 = vpack.c.b16 %v883, %v879
    %v1080 = vpack.c.b16 %v884, %v880
    %v1081 = vpack.c.b16 %v885, %v881
    %vm1278 = vcmask 130048
    %v1280 = vsel %vm1278, %v291, 0
    %1282 = vmatpush.bf16.msra.mxu0 %v914
    %1283 = vmatpush.bf16.msra.mxu0 %v910
    %1284 = vmatpush.bf16.msra.mxu0 %v906
    %1285 = vmatpush.bf16.msra.mxu0 %v902
    %1286 = vmatpush.bf16.msra.mxu0 %v898
    %1287 = vmatpush.bf16.msra.mxu0 %v894
    %1288 = vmatpush.bf16.msra.mxu0 %v890
    %1289 = vmatpush.bf16.msra.mxu0 %v886
    %1290 = vmatmul.bf16.gmra.mxu0 %v285
    %v1291 = vpop.f32.mrf.mxu0
    %v1292 = vadd.f32 %v255, %v1291
    %v1293 = vpop.f32.mrf.mxu0
    %v1294 = vadd.f32 %v255, %v1293
    %1295 = vdwg.mxu0
    %1296 = vmatpush.bf16.msra.mxu0 %v946
    %1297 = vmatpush.bf16.msra.mxu0 %v942
    %1298 = vmatpush.bf16.msra.mxu0 %v938
    %1299 = vmatpush.bf16.msra.mxu0 %v934
    %1300 = vmatpush.bf16.msra.mxu0 %v930
    %1301 = vmatpush.bf16.msra.mxu0 %v926
    %1302 = vmatpush.bf16.msra.mxu0 %v922
    %1303 = vmatpush.bf16.msra.mxu0 %v918
    %1304 = vmatmul.bf16.gmra.mxu0 %v286
    %v1305 = vpop.f32.mrf.mxu0
    %v1306 = vadd.f32 %v1292, %v1305
    %v1307 = vpop.f32.mrf.mxu0
    %v1308 = vadd.f32 %v1294, %v1307
    %1309 = vdwg.mxu0
    %1310 = vmatpush.bf16.msra.mxu0 %v978
    %1311 = vmatpush.bf16.msra.mxu0 %v974
    %1312 = vmatpush.bf16.msra.mxu0 %v970
    %1313 = vmatpush.bf16.msra.mxu0 %v966
    %1314 = vmatpush.bf16.msra.mxu0 %v962
    %1315 = vmatpush.bf16.msra.mxu0 %v958
    %1316 = vmatpush.bf16.msra.mxu0 %v954
    %1317 = vmatpush.bf16.msra.mxu0 %v950
    %1318 = vmatmul.bf16.gmra.mxu0 %v287
    %v1319 = vpop.f32.mrf.mxu0
    %v1320 = vadd.f32 %v1306, %v1319
    %v1321 = vpop.f32.mrf.mxu0
    %v1322 = vadd.f32 %v1308, %v1321
    %1323 = vdwg.mxu0
    %1324 = vmatpush.bf16.msra.mxu0 %v1010
    %1325 = vmatpush.bf16.msra.mxu0 %v1006
    %1326 = vmatpush.bf16.msra.mxu0 %v1002
    %1327 = vmatpush.bf16.msra.mxu0 %v998
    %1328 = vmatpush.bf16.msra.mxu0 %v994
    %1329 = vmatpush.bf16.msra.mxu0 %v990
    %1330 = vmatpush.bf16.msra.mxu0 %v986
    %1331 = vmatpush.bf16.msra.mxu0 %v982
    %1332 = vmatmul.bf16.gmra.mxu0 %v288
    %v1333 = vpop.f32.mrf.mxu0
    %v1334 = vadd.f32 %v1320, %v1333
    %v1335 = vpop.f32.mrf.mxu0
    %v1336 = vadd.f32 %v1322, %v1335
    %1337 = vdwg.mxu0
    %1338 = vmatpush.bf16.msra.mxu0 %v1042
    %1339 = vmatpush.bf16.msra.mxu0 %v1038
    %1340 = vmatpush.bf16.msra.mxu0 %v1034
    %1341 = vmatpush.bf16.msra.mxu0 %v1030
    %1342 = vmatpush.bf16.msra.mxu0 %v1026
    %1343 = vmatpush.bf16.msra.mxu0 %v1022
    %1344 = vmatpush.bf16.msra.mxu0 %v1018
    %1345 = vmatpush.bf16.msra.mxu0 %v1014
    %1346 = vmatmul.bf16.gmra.mxu0 %v289
    %v1347 = vpop.f32.mrf.mxu0
    %v1348 = vadd.f32 %v1334, %v1347
    %v1349 = vpop.f32.mrf.mxu0
    %v1350 = vadd.f32 %v1336, %v1349
    %1351 = vdwg.mxu0
    %1352 = vmatpush.bf16.msra.mxu0 %v1074
    %1353 = vmatpush.bf16.msra.mxu0 %v1070
    %1354 = vmatpush.bf16.msra.mxu0 %v1066
    %1355 = vmatpush.bf16.msra.mxu0 %v1062
    %1356 = vmatpush.bf16.msra.mxu0 %v1058
    %1357 = vmatpush.bf16.msra.mxu0 %v1054
    %1358 = vmatpush.bf16.msra.mxu0 %v1050
    %1359 = vmatpush.bf16.msra.mxu0 %v1046
    %1360 = vmatmul.bf16.gmra.mxu0 %v290
    %v1361 = vpop.f32.mrf.mxu0
    %v1362 = vadd.f32 %v1348, %v1361
    %v1363 = vpop.f32.mrf.mxu0
    %v1364 = vadd.f32 %v1350, %v1363
    %1365 = vdwg.mxu0
    %1366 = vmatpush.bf16.msra.mxu0 0
    %1367 = vmatpush.bf16.msra.mxu0 0
    %1368 = vmatpush.bf16.msra.mxu0 0
    %1369 = vmatpush.bf16.msra.mxu0 0
    %1370 = vmatpush.bf16.msra.mxu0 0
    %1371 = vmatpush.bf16.msra.mxu0 0
    %1372 = vmatpush.bf16.msra.mxu0 0
    %1373 = vmatpush.bf16.msra.mxu0 %v1078
    %1374 = vmatmul.bf16.gmra.mxu0 %v1280
    %v1375 = vpop.f32.mrf.mxu0
    %v1376 = vadd.f32 %v1362, %v1375
    %v1377 = vpop.f32.mrf.mxu0
    %v1378 = vadd.f32 %v1364, %v1377
    %1379 = vdwg.mxu0
    %1380 = vmatpush.bf16.msra.mxu0 %v915
    %1381 = vmatpush.bf16.msra.mxu0 %v911
    %1382 = vmatpush.bf16.msra.mxu0 %v907
    %1383 = vmatpush.bf16.msra.mxu0 %v903
    %1384 = vmatpush.bf16.msra.mxu0 %v899
    %1385 = vmatpush.bf16.msra.mxu0 %v895
    %1386 = vmatpush.bf16.msra.mxu0 %v891
    %1387 = vmatpush.bf16.msra.mxu0 %v887
    %1388 = vmatmul.bf16.gmra.mxu0 %v285
    %v1389 = vpop.f32.mrf.mxu0
    %v1390 = vadd.f32 %v256, %v1389
    %v1391 = vpop.f32.mrf.mxu0
    %v1392 = vadd.f32 %v256, %v1391
    %1393 = vdwg.mxu0
    %1394 = vmatpush.bf16.msra.mxu0 %v947
    %1395 = vmatpush.bf16.msra.mxu0 %v943
    %1396 = vmatpush.bf16.msra.mxu0 %v939
    %1397 = vmatpush.bf16.msra.mxu0 %v935
    %1398 = vmatpush.bf16.msra.mxu0 %v931
    %1399 = vmatpush.bf16.msra.mxu0 %v927
    %1400 = vmatpush.bf16.msra.mxu0 %v923
    %1401 = vmatpush.bf16.msra.mxu0 %v919
    %1402 = vmatmul.bf16.gmra.mxu0 %v286
    %v1403 = vpop.f32.mrf.mxu0
    %v1404 = vadd.f32 %v1390, %v1403
    %v1405 = vpop.f32.mrf.mxu0
    %v1406 = vadd.f32 %v1392, %v1405
    %1407 = vdwg.mxu0
    %1408 = vmatpush.bf16.msra.mxu0 %v979
    %1409 = vmatpush.bf16.msra.mxu0 %v975
    %1410 = vmatpush.bf16.msra.mxu0 %v971
    %1411 = vmatpush.bf16.msra.mxu0 %v967
    %1412 = vmatpush.bf16.msra.mxu0 %v963
    %1413 = vmatpush.bf16.msra.mxu0 %v959
    %1414 = vmatpush.bf16.msra.mxu0 %v955
    %1415 = vmatpush.bf16.msra.mxu0 %v951
    %1416 = vmatmul.bf16.gmra.mxu0 %v287
    %v1417 = vpop.f32.mrf.mxu0
    %v1418 = vadd.f32 %v1404, %v1417
    %v1419 = vpop.f32.mrf.mxu0
    %v1420 = vadd.f32 %v1406, %v1419
    %1421 = vdwg.mxu0
    %1422 = vmatpush.bf16.msra.mxu0 %v1011
    %1423 = vmatpush.bf16.msra.mxu0 %v1007
    %1424 = vmatpush.bf16.msra.mxu0 %v1003
    %1425 = vmatpush.bf16.msra.mxu0 %v999
    %1426 = vmatpush.bf16.msra.mxu0 %v995
    %1427 = vmatpush.bf16.msra.mxu0 %v991
    %1428 = vmatpush.bf16.msra.mxu0 %v987
    %1429 = vmatpush.bf16.msra.mxu0 %v983
    %1430 = vmatmul.bf16.gmra.mxu0 %v288
    %v1431 = vpop.f32.mrf.mxu0
    %v1432 = vadd.f32 %v1418, %v1431
    %v1433 = vpop.f32.mrf.mxu0
    %v1434 = vadd.f32 %v1420, %v1433
    %1435 = vdwg.mxu0
    %1436 = vmatpush.bf16.msra.mxu0 %v1043
    %1437 = vmatpush.bf16.msra.mxu0 %v1039
    %1438 = vmatpush.bf16.msra.mxu0 %v1035
    %1439 = vmatpush.bf16.msra.mxu0 %v1031
    %1440 = vmatpush.bf16.msra.mxu0 %v1027
    %1441 = vmatpush.bf16.msra.mxu0 %v1023
    %1442 = vmatpush.bf16.msra.mxu0 %v1019
    %1443 = vmatpush.bf16.msra.mxu0 %v1015
    %1444 = vmatmul.bf16.gmra.mxu0 %v289
    %v1445 = vpop.f32.mrf.mxu0
    %v1446 = vadd.f32 %v1432, %v1445
    %v1447 = vpop.f32.mrf.mxu0
    %v1448 = vadd.f32 %v1434, %v1447
    %1449 = vdwg.mxu0
    %1450 = vmatpush.bf16.msra.mxu0 %v1075
    %1451 = vmatpush.bf16.msra.mxu0 %v1071
    %1452 = vmatpush.bf16.msra.mxu0 %v1067
    %1453 = vmatpush.bf16.msra.mxu0 %v1063
    %1454 = vmatpush.bf16.msra.mxu0 %v1059
    %1455 = vmatpush.bf16.msra.mxu0 %v1055
    %1456 = vmatpush.bf16.msra.mxu0 %v1051
    %1457 = vmatpush.bf16.msra.mxu0 %v1047
    %1458 = vmatmul.bf16.gmra.mxu0 %v290
    %v1459 = vpop.f32.mrf.mxu0
    %v1460 = vadd.f32 %v1446, %v1459
    %v1461 = vpop.f32.mrf.mxu0
    %v1462 = vadd.f32 %v1448, %v1461
    %1463 = vdwg.mxu0
    %1464 = vmatpush.bf16.msra.mxu0 0
    %1465 = vmatpush.bf16.msra.mxu0 0
    %1466 = vmatpush.bf16.msra.mxu0 0
    %1467 = vmatpush.bf16.msra.mxu0 0
    %1468 = vmatpush.bf16.msra.mxu0 0
    %1469 = vmatpush.bf16.msra.mxu0 0
    %1470 = vmatpush.bf16.msra.mxu0 0
    %1471 = vmatpush.bf16.msra.mxu0 %v1079
    %1472 = vmatmul.bf16.gmra.mxu0 %v1280
    %v1473 = vpop.f32.mrf.mxu0
    %v1474 = vadd.f32 %v1460, %v1473
    %v1475 = vpop.f32.mrf.mxu0
    %v1476 = vadd.f32 %v1462, %v1475
    %1477 = vdwg.mxu0
    %1478 = vmatpush.bf16.msra.mxu0 %v916
    %1479 = vmatpush.bf16.msra.mxu0 %v912
    %1480 = vmatpush.bf16.msra.mxu0 %v908
    %1481 = vmatpush.bf16.msra.mxu0 %v904
    %1482 = vmatpush.bf16.msra.mxu0 %v900
    %1483 = vmatpush.bf16.msra.mxu0 %v896
    %1484 = vmatpush.bf16.msra.mxu0 %v892
    %1485 = vmatpush.bf16.msra.mxu0 %v888
    %1486 = vmatmul.bf16.gmra.mxu0 %v285
    %v1487 = vpop.f32.mrf.mxu0
    %v1488 = vadd.f32 %v257, %v1487
    %v1489 = vpop.f32.mrf.mxu0
    %v1490 = vadd.f32 %v257, %v1489
    %1491 = vdwg.mxu0
    %1492 = vmatpush.bf16.msra.mxu0 %v948
    %1493 = vmatpush.bf16.msra.mxu0 %v944
    %1494 = vmatpush.bf16.msra.mxu0 %v940
    %1495 = vmatpush.bf16.msra.mxu0 %v936
    %1496 = vmatpush.bf16.msra.mxu0 %v932
    %1497 = vmatpush.bf16.msra.mxu0 %v928
    %1498 = vmatpush.bf16.msra.mxu0 %v924
    %1499 = vmatpush.bf16.msra.mxu0 %v920
    %1500 = vmatmul.bf16.gmra.mxu0 %v286
    %v1501 = vpop.f32.mrf.mxu0
    %v1502 = vadd.f32 %v1488, %v1501
    %v1503 = vpop.f32.mrf.mxu0
    %v1504 = vadd.f32 %v1490, %v1503
    %1505 = vdwg.mxu0
    %1506 = vmatpush.bf16.msra.mxu0 %v980
    %1507 = vmatpush.bf16.msra.mxu0 %v976
    %1508 = vmatpush.bf16.msra.mxu0 %v972
    %1509 = vmatpush.bf16.msra.mxu0 %v968
    %1510 = vmatpush.bf16.msra.mxu0 %v964
    %1511 = vmatpush.bf16.msra.mxu0 %v960
    %1512 = vmatpush.bf16.msra.mxu0 %v956
    %1513 = vmatpush.bf16.msra.mxu0 %v952
    %1514 = vmatmul.bf16.gmra.mxu0 %v287
    %v1515 = vpop.f32.mrf.mxu0
    %v1516 = vadd.f32 %v1502, %v1515
    %v1517 = vpop.f32.mrf.mxu0
    %v1518 = vadd.f32 %v1504, %v1517
    %1519 = vdwg.mxu0
    %1520 = vmatpush.bf16.msra.mxu0 %v1012
    %1521 = vmatpush.bf16.msra.mxu0 %v1008
    %1522 = vmatpush.bf16.msra.mxu0 %v1004
    %1523 = vmatpush.bf16.msra.mxu0 %v1000
    %1524 = vmatpush.bf16.msra.mxu0 %v996
    %1525 = vmatpush.bf16.msra.mxu0 %v992
    %1526 = vmatpush.bf16.msra.mxu0 %v988
    %1527 = vmatpush.bf16.msra.mxu0 %v984
    %1528 = vmatmul.bf16.gmra.mxu0 %v288
    %v1529 = vpop.f32.mrf.mxu0
    %v1530 = vadd.f32 %v1516, %v1529
    %v1531 = vpop.f32.mrf.mxu0
    %v1532 = vadd.f32 %v1518, %v1531
    %1533 = vdwg.mxu0
    %1534 = vmatpush.bf16.msra.mxu0 %v1044
    %1535 = vmatpush.bf16.msra.mxu0 %v1040
    %1536 = vmatpush.bf16.msra.mxu0 %v1036
    %1537 = vmatpush.bf16.msra.mxu0 %v1032
    %1538 = vmatpush.bf16.msra.mxu0 %v1028
    %1539 = vmatpush.bf16.msra.mxu0 %v1024
    %1540 = vmatpush.bf16.msra.mxu0 %v1020
    %1541 = vmatpush.bf16.msra.mxu0 %v1016
    %1542 = vmatmul.bf16.gmra.mxu0 %v289
    %v1543 = vpop.f32.mrf.mxu0
    %v1544 = vadd.f32 %v1530, %v1543
    %v1545 = vpop.f32.mrf.mxu0
    %v1546 = vadd.f32 %v1532, %v1545
    %1547 = vdwg.mxu0
    %1548 = vmatpush.bf16.msra.mxu0 %v1076
    %1549 = vmatpush.bf16.msra.mxu0 %v1072
    %1550 = vmatpush.bf16.msra.mxu0 %v1068
    %1551 = vmatpush.bf16.msra.mxu0 %v1064
    %1552 = vmatpush.bf16.msra.mxu0 %v1060
    %1553 = vmatpush.bf16.msra.mxu0 %v1056
    %1554 = vmatpush.bf16.msra.mxu0 %v1052
    %1555 = vmatpush.bf16.msra.mxu0 %v1048
    %1556 = vmatmul.bf16.gmra.mxu0 %v290
    %v1557 = vpop.f32.mrf.mxu0
    %v1558 = vadd.f32 %v1544, %v1557
    %v1559 = vpop.f32.mrf.mxu0
    %v1560 = vadd.f32 %v1546, %v1559
    %1561 = vdwg.mxu0
    %1562 = vmatpush.bf16.msra.mxu0 0
    %1563 = vmatpush.bf16.msra.mxu0 0
    %1564 = vmatpush.bf16.msra.mxu0 0
    %1565 = vmatpush.bf16.msra.mxu0 0
    %1566 = vmatpush.bf16.msra.mxu0 0
    %1567 = vmatpush.bf16.msra.mxu0 0
    %1568 = vmatpush.bf16.msra.mxu0 0
    %1569 = vmatpush.bf16.msra.mxu0 %v1080
    %1570 = vmatmul.bf16.gmra.mxu0 %v1280
    %v1571 = vpop.f32.mrf.mxu0
    %v1572 = vadd.f32 %v1558, %v1571
    %v1573 = vpop.f32.mrf.mxu0
    %v1574 = vadd.f32 %v1560, %v1573
    %1575 = vdwg.mxu0
    %1576 = vmatpush.bf16.msra.mxu0 %v917
    %1577 = vmatpush.bf16.msra.mxu0 %v913
    %1578 = vmatpush.bf16.msra.mxu0 %v909
    %1579 = vmatpush.bf16.msra.mxu0 %v905
    %1580 = vmatpush.bf16.msra.mxu0 %v901
    %1581 = vmatpush.bf16.msra.mxu0 %v897
    %1582 = vmatpush.bf16.msra.mxu0 %v893
    %1583 = vmatpush.bf16.msra.mxu0 %v889
    %1584 = vmatmul.bf16.gmra.mxu0 %v285
    %v1585 = vpop.f32.mrf.mxu0
    %v1586 = vadd.f32 %v258, %v1585
    %v1587 = vpop.f32.mrf.mxu0
    %v1588 = vadd.f32 %v258, %v1587
    %1589 = vdwg.mxu0
    %1590 = vmatpush.bf16.msra.mxu0 %v949
    %1591 = vmatpush.bf16.msra.mxu0 %v945
    %1592 = vmatpush.bf16.msra.mxu0 %v941
    %1593 = vmatpush.bf16.msra.mxu0 %v937
    %1594 = vmatpush.bf16.msra.mxu0 %v933
    %1595 = vmatpush.bf16.msra.mxu0 %v929
    %1596 = vmatpush.bf16.msra.mxu0 %v925
    %1597 = vmatpush.bf16.msra.mxu0 %v921
    %1598 = vmatmul.bf16.gmra.mxu0 %v286
    %v1599 = vpop.f32.mrf.mxu0
    %v1600 = vadd.f32 %v1586, %v1599
    %v1601 = vpop.f32.mrf.mxu0
    %v1602 = vadd.f32 %v1588, %v1601
    %1603 = vdwg.mxu0
    %1604 = vmatpush.bf16.msra.mxu0 %v981
    %1605 = vmatpush.bf16.msra.mxu0 %v977
    %1606 = vmatpush.bf16.msra.mxu0 %v973
    %1607 = vmatpush.bf16.msra.mxu0 %v969
    %1608 = vmatpush.bf16.msra.mxu0 %v965
    %1609 = vmatpush.bf16.msra.mxu0 %v961
    %1610 = vmatpush.bf16.msra.mxu0 %v957
    %1611 = vmatpush.bf16.msra.mxu0 %v953
    %1612 = vmatmul.bf16.gmra.mxu0 %v287
    %v1613 = vpop.f32.mrf.mxu0
    %v1614 = vadd.f32 %v1600, %v1613
    %v1615 = vpop.f32.mrf.mxu0
    %v1616 = vadd.f32 %v1602, %v1615
    %1617 = vdwg.mxu0
    %1618 = vmatpush.bf16.msra.mxu0 %v1013
    %1619 = vmatpush.bf16.msra.mxu0 %v1009
    %1620 = vmatpush.bf16.msra.mxu0 %v1005
    %1621 = vmatpush.bf16.msra.mxu0 %v1001
    %1622 = vmatpush.bf16.msra.mxu0 %v997
    %1623 = vmatpush.bf16.msra.mxu0 %v993
    %1624 = vmatpush.bf16.msra.mxu0 %v989
    %1625 = vmatpush.bf16.msra.mxu0 %v985
    %1626 = vmatmul.bf16.gmra.mxu0 %v288
    %v1627 = vpop.f32.mrf.mxu0
    %v1628 = vadd.f32 %v1614, %v1627
    %v1629 = vpop.f32.mrf.mxu0
    %v1630 = vadd.f32 %v1616, %v1629
    %1631 = vdwg.mxu0
    %1632 = vmatpush.bf16.msra.mxu0 %v1045
    %1633 = vmatpush.bf16.msra.mxu0 %v1041
    %1634 = vmatpush.bf16.msra.mxu0 %v1037
    %1635 = vmatpush.bf16.msra.mxu0 %v1033
    %1636 = vmatpush.bf16.msra.mxu0 %v1029
    %1637 = vmatpush.bf16.msra.mxu0 %v1025
    %1638 = vmatpush.bf16.msra.mxu0 %v1021
    %1639 = vmatpush.bf16.msra.mxu0 %v1017
    %1640 = vmatmul.bf16.gmra.mxu0 %v289
    %v1641 = vpop.f32.mrf.mxu0
    %v1642 = vadd.f32 %v1628, %v1641
    %v1643 = vpop.f32.mrf.mxu0
    %v1644 = vadd.f32 %v1630, %v1643
    %1645 = vdwg.mxu0
    %1646 = vmatpush.bf16.msra.mxu0 %v1077
    %1647 = vmatpush.bf16.msra.mxu0 %v1073
    %1648 = vmatpush.bf16.msra.mxu0 %v1069
    %1649 = vmatpush.bf16.msra.mxu0 %v1065
    %1650 = vmatpush.bf16.msra.mxu0 %v1061
    %1651 = vmatpush.bf16.msra.mxu0 %v1057
    %1652 = vmatpush.bf16.msra.mxu0 %v1053
    %1653 = vmatpush.bf16.msra.mxu0 %v1049
    %1654 = vmatmul.bf16.gmra.mxu0 %v290
    %v1655 = vpop.f32.mrf.mxu0
    %v1656 = vadd.f32 %v1642, %v1655
    %v1657 = vpop.f32.mrf.mxu0
    %v1658 = vadd.f32 %v1644, %v1657
    %1659 = vdwg.mxu0
    %1660 = vmatpush.bf16.msra.mxu0 0
    %1661 = vmatpush.bf16.msra.mxu0 0
    %1662 = vmatpush.bf16.msra.mxu0 0
    %1663 = vmatpush.bf16.msra.mxu0 0
    %1664 = vmatpush.bf16.msra.mxu0 0
    %1665 = vmatpush.bf16.msra.mxu0 0
    %1666 = vmatpush.bf16.msra.mxu0 0
    %1667 = vmatpush.bf16.msra.mxu0 %v1081
    %1668 = vmatmul.bf16.gmra.mxu0 %v1280
    %v1669 = vpop.f32.mrf.mxu0
    %v1670 = vadd.f32 %v1656, %v1669
    %v1671 = vpop.f32.mrf.mxu0
    %v1672 = vadd.f32 %v1658, %v1671
    %1673 = vdwg.mxu0
    %v1674 = vmax.f32 %v1376, 0.0
    %v1675 = vmax.f32 %v1474, 0.0
    %v1676 = vmax.f32 %v1572, 0.0
    %v1677 = vmax.f32 %v1670, 0.0
    %v1678 = vmax.f32 %v1378, 0.0
    %v1679 = vmax.f32 %v1476, 0.0
    %v1680 = vmax.f32 %v1574, 0.0
    %v1681 = vmax.f32 %v1672, 0.0
    %v1682 = vpack.c.bf16 %v1678, %v1674
    %v1683 = vpack.c.bf16 %v1679, %v1675
    %v1684 = vpack.c.bf16 %v1680, %v1676
    %v1685 = vpack.c.bf16 %v1681, %v1677
    %v1686 = vld [vmem:[%s4] sm:$0xff]
    %v1687 = vld [vmem:[%s4 + $0x8] sm:$0xff]
    %v1688 = vld [vmem:[%s4 + $0x10] sm:$0xff]
    %v1689 = vld [vmem:[%s4 + $0x18] sm:$0xff]
    %v1690 = vld [vmem:[%s4 + $0x20] sm:$0xff]
    %v1691 = vld [vmem:[%s4 + $0x28] sm:$0xff]
    %v1692 = vld [vmem:[%s4 + $0x30] sm:$0xff]
    %v1693 = vld [vmem:[%s4 + $0x38] sm:$0xff]
    %v1694 = vld [vmem:[%s4 + $0x40] sm:$0xff]
    %v1695 = vld [vmem:[%s4 + $0x48] sm:$0xff]
    %v1696 = vld [vmem:[%s4 + $0x50] sm:$0xff]
    %v1697 = vld [vmem:[%s4 + $0x58] sm:$0xff]
    %v1698 = vld [vmem:[%s4 + $0x60] sm:$0xff]
    %v1699 = vld [vmem:[%s4 + $0x68] sm:$0xff]
    %v1700 = vld [vmem:[%s4 + $0x70] sm:$0xff]
    %v1701 = vld [vmem:[%s4 + $0x78] sm:$0xff]
    %v1702 = vld [vmem:[%s4 + $0x80] sm:$0xff]
    %v1703 = vld [vmem:[%s4 + $0x88] sm:$0xff]
    %v1704 = vld [vmem:[%s4 + $0x90] sm:$0xff]
    %v1705 = vld [vmem:[%s4 + $0x98] sm:$0xff]
    %v1706 = vld [vmem:[%s4 + $0xa0] sm:$0xff]
    %v1707 = vld [vmem:[%s4 + $0xa8] sm:$0xff]
    %v1708 = vld [vmem:[%s4 + $0xb0] sm:$0xff]
    %v1709 = vld [vmem:[%s4 + $0xb8] sm:$0xff]
    %v1710 = vld [vmem:[%s4 + $0xc0] sm:$0xff]
    %v1711 = vld [vmem:[%s4 + $0xc8] sm:$0xff]
    %v1712 = vld [vmem:[%s4 + $0xd0] sm:$0xff]
    %v1713 = vld [vmem:[%s4 + $0xd8] sm:$0xff]
    %v1714 = vld [vmem:[%s4 + $0xe0] sm:$0xff]
    %v1715 = vld [vmem:[%s4 + $0xe8] sm:$0xff]
    %v1716 = vld [vmem:[%s4 + $0xf0] sm:$0xff]
    %v1717 = vld [vmem:[%s4 + $0xf8] sm:$0xff]
    %v1718 = vld [vmem:[%s4 + $0x100] sm:$0xff]
    %v1719 = vld [vmem:[%s4 + $0x108] sm:$0xff]
    %v1720 = vld [vmem:[%s4 + $0x110] sm:$0xff]
    %v1721 = vld [vmem:[%s4 + $0x118] sm:$0xff]
    %v1722 = vld [vmem:[%s4 + $0x120] sm:$0xff]
    %v1723 = vld [vmem:[%s4 + $0x128] sm:$0xff]
    %v1724 = vld [vmem:[%s4 + $0x130] sm:$0xff]
    %v1725 = vld [vmem:[%s4 + $0x138] sm:$0xff]
    %v1726 = vld [vmem:[%s4 + $0x140] sm:$0xff]
    %v1727 = vld [vmem:[%s4 + $0x148] sm:$0xff]
    %v1728 = vld [vmem:[%s4 + $0x150] sm:$0xff]
    %v1729 = vld [vmem:[%s4 + $0x158] sm:$0xff]
    %v1730 = vld [vmem:[%s4 + $0x160] sm:$0xff]
    %v1731 = vld [vmem:[%s4 + $0x168] sm:$0xff]
    %v1732 = vld [vmem:[%s4 + $0x170] sm:$0xff]
    %v1733 = vld [vmem:[%s4 + $0x178] sm:$0xff]
    %v1734 = vld [vmem:[%s4 + $0x180] sm:$0xff]
    %v1735 = vld [vmem:[%s4 + $0x188] sm:$0xff]
    %v1736 = vld [vmem:[%s4 + $0x190] sm:$0xff]
    %v1737 = vld [vmem:[%s4 + $0x198] sm:$0xff]
    %v1738 = vld [vmem:[%s4 + $0x1a0] sm:$0xff]
    %v1739 = vld [vmem:[%s4 + $0x1a8] sm:$0xff]
    %v1740 = vld [vmem:[%s4 + $0x1b0] sm:$0xff]
    %v1741 = vld [vmem:[%s4 + $0x1b8] sm:$0xff]
    %v1742 = vld [vmem:[%s4 + $0x1c0] sm:$0xff]
    %v1743 = vld [vmem:[%s4 + $0x1c8] sm:$0xff]
    %v1744 = vld [vmem:[%s4 + $0x1d0] sm:$0xff]
    %v1745 = vld [vmem:[%s4 + $0x1d8] sm:$0xff]
    %v1746 = vld [vmem:[%s4 + $0x1e0] sm:$0xff]
    %v1747 = vld [vmem:[%s4 + $0x1e8] sm:$0xff]
    %v1748 = vld [vmem:[%s4 + $0x1f0] sm:$0xff]
    %v1749 = vld [vmem:[%s4 + $0x1f8] sm:$0xff]
    %v1750 = vld [vmem:[%s5] sm:$0x3]
    %v1752 = vperm.slane %v1750, 0
    %v1753 = vperm.slane %v1750, 1
    %v1820 = vunpack.c.l.b16 %v1686
    %v1821 = vunpack.c.h.b16 %v1686
    %v1822 = vunpack.c.l.b16 %v1687
    %v1823 = vunpack.c.h.b16 %v1687
    %v1824 = vunpack.c.l.b16 %v1688
    %v1825 = vunpack.c.h.b16 %v1688
    %v1826 = vunpack.c.l.b16 %v1689
    %v1827 = vunpack.c.h.b16 %v1689
    %v1828 = vunpack.c.l.b16 %v1690
    %v1829 = vunpack.c.h.b16 %v1690
    %v1830 = vunpack.c.l.b16 %v1691
    %v1831 = vunpack.c.h.b16 %v1691
    %v1832 = vunpack.c.l.b16 %v1692
    %v1833 = vunpack.c.h.b16 %v1692
    %v1834 = vunpack.c.l.b16 %v1693
    %v1835 = vunpack.c.h.b16 %v1693
    %v1836 = vunpack.c.l.b16 %v1694
    %v1837 = vunpack.c.h.b16 %v1694
    %v1838 = vunpack.c.l.b16 %v1695
    %v1839 = vunpack.c.h.b16 %v1695
    %v1840 = vunpack.c.l.b16 %v1696
    %v1841 = vunpack.c.h.b16 %v1696
    %v1842 = vunpack.c.l.b16 %v1697
    %v1843 = vunpack.c.h.b16 %v1697
    %v1844 = vunpack.c.l.b16 %v1698
    %v1845 = vunpack.c.h.b16 %v1698
    %v1846 = vunpack.c.l.b16 %v1699
    %v1847 = vunpack.c.h.b16 %v1699
    %v1848 = vunpack.c.l.b16 %v1700
    %v1849 = vunpack.c.h.b16 %v1700
    %v1850 = vunpack.c.l.b16 %v1701
    %v1851 = vunpack.c.h.b16 %v1701
    %v1852 = vunpack.c.l.b16 %v1702
    %v1853 = vunpack.c.h.b16 %v1702
    %v1854 = vunpack.c.l.b16 %v1703
    %v1855 = vunpack.c.h.b16 %v1703
    %v1856 = vunpack.c.l.b16 %v1704
    %v1857 = vunpack.c.h.b16 %v1704
    %v1858 = vunpack.c.l.b16 %v1705
    %v1859 = vunpack.c.h.b16 %v1705
    %v1860 = vunpack.c.l.b16 %v1706
    %v1861 = vunpack.c.h.b16 %v1706
    %v1862 = vunpack.c.l.b16 %v1707
    %v1863 = vunpack.c.h.b16 %v1707
    %v1864 = vunpack.c.l.b16 %v1708
    %v1865 = vunpack.c.h.b16 %v1708
    %v1866 = vunpack.c.l.b16 %v1709
    %v1867 = vunpack.c.h.b16 %v1709
    %v1868 = vunpack.c.l.b16 %v1710
    %v1869 = vunpack.c.h.b16 %v1710
    %v1870 = vunpack.c.l.b16 %v1711
    %v1871 = vunpack.c.h.b16 %v1711
    %v1872 = vunpack.c.l.b16 %v1712
    %v1873 = vunpack.c.h.b16 %v1712
    %v1874 = vunpack.c.l.b16 %v1713
    %v1875 = vunpack.c.h.b16 %v1713
    %v1876 = vunpack.c.l.b16 %v1714
    %v1877 = vunpack.c.h.b16 %v1714
    %v1878 = vunpack.c.l.b16 %v1715
    %v1879 = vunpack.c.h.b16 %v1715
    %v1880 = vunpack.c.l.b16 %v1716
    %v1881 = vunpack.c.h.b16 %v1716
    %v1882 = vunpack.c.l.b16 %v1717
    %v1883 = vunpack.c.h.b16 %v1717
    %v1884 = vunpack.c.l.b16 %v1718
    %v1885 = vunpack.c.h.b16 %v1718
    %v1886 = vunpack.c.l.b16 %v1719
    %v1887 = vunpack.c.h.b16 %v1719
    %v1888 = vunpack.c.l.b16 %v1720
    %v1889 = vunpack.c.h.b16 %v1720
    %v1890 = vunpack.c.l.b16 %v1721
    %v1891 = vunpack.c.h.b16 %v1721
    %v1892 = vunpack.c.l.b16 %v1722
    %v1893 = vunpack.c.h.b16 %v1722
    %v1894 = vunpack.c.l.b16 %v1723
    %v1895 = vunpack.c.h.b16 %v1723
    %v1896 = vunpack.c.l.b16 %v1724
    %v1897 = vunpack.c.h.b16 %v1724
    %v1898 = vunpack.c.l.b16 %v1725
    %v1899 = vunpack.c.h.b16 %v1725
    %v1900 = vunpack.c.l.b16 %v1726
    %v1901 = vunpack.c.h.b16 %v1726
    %v1902 = vunpack.c.l.b16 %v1727
    %v1903 = vunpack.c.h.b16 %v1727
    %v1904 = vunpack.c.l.b16 %v1728
    %v1905 = vunpack.c.h.b16 %v1728
    %v1906 = vunpack.c.l.b16 %v1729
    %v1907 = vunpack.c.h.b16 %v1729
    %v1908 = vunpack.c.l.b16 %v1730
    %v1909 = vunpack.c.h.b16 %v1730
    %v1910 = vunpack.c.l.b16 %v1731
    %v1911 = vunpack.c.h.b16 %v1731
    %v1912 = vunpack.c.l.b16 %v1732
    %v1913 = vunpack.c.h.b16 %v1732
    %v1914 = vunpack.c.l.b16 %v1733
    %v1915 = vunpack.c.h.b16 %v1733
    %v1916 = vunpack.c.l.b16 %v1734
    %v1917 = vunpack.c.h.b16 %v1734
    %v1918 = vunpack.c.l.b16 %v1735
    %v1919 = vunpack.c.h.b16 %v1735
    %v1920 = vunpack.c.l.b16 %v1736
    %v1921 = vunpack.c.h.b16 %v1736
    %v1922 = vunpack.c.l.b16 %v1737
    %v1923 = vunpack.c.h.b16 %v1737
    %v1924 = vunpack.c.l.b16 %v1738
    %v1925 = vunpack.c.h.b16 %v1738
    %v1926 = vunpack.c.l.b16 %v1739
    %v1927 = vunpack.c.h.b16 %v1739
    %v1928 = vunpack.c.l.b16 %v1740
    %v1929 = vunpack.c.h.b16 %v1740
    %v1930 = vunpack.c.l.b16 %v1741
    %v1931 = vunpack.c.h.b16 %v1741
    %v1932 = vunpack.c.l.b16 %v1742
    %v1933 = vunpack.c.h.b16 %v1742
    %v1934 = vunpack.c.l.b16 %v1743
    %v1935 = vunpack.c.h.b16 %v1743
    %v1936 = vunpack.c.l.b16 %v1744
    %v1937 = vunpack.c.h.b16 %v1744
    %v1938 = vunpack.c.l.b16 %v1745
    %v1939 = vunpack.c.h.b16 %v1745
    %v1940 = vunpack.c.l.b16 %v1746
    %v1941 = vunpack.c.h.b16 %v1746
    %v1942 = vunpack.c.l.b16 %v1747
    %v1943 = vunpack.c.h.b16 %v1747
    %v1944 = vunpack.c.l.b16 %v1748
    %v1945 = vunpack.c.h.b16 %v1748
    %v1946 = vunpack.c.l.b16 %v1749
    %v1947 = vunpack.c.h.b16 %v1749
    %v1948 = vpack.c.b16 %v1822, %v1820
    %v1949 = vpack.c.b16 %v1823, %v1821
    %v1950 = vpack.c.b16 %v1826, %v1824
    %v1951 = vpack.c.b16 %v1827, %v1825
    %v1952 = vpack.c.b16 %v1830, %v1828
    %v1953 = vpack.c.b16 %v1831, %v1829
    %v1954 = vpack.c.b16 %v1834, %v1832
    %v1955 = vpack.c.b16 %v1835, %v1833
    %v1956 = vpack.c.b16 %v1838, %v1836
    %v1957 = vpack.c.b16 %v1839, %v1837
    %v1958 = vpack.c.b16 %v1842, %v1840
    %v1959 = vpack.c.b16 %v1843, %v1841
    %v1960 = vpack.c.b16 %v1846, %v1844
    %v1961 = vpack.c.b16 %v1847, %v1845
    %v1962 = vpack.c.b16 %v1850, %v1848
    %v1963 = vpack.c.b16 %v1851, %v1849
    %v1964 = vpack.c.b16 %v1854, %v1852
    %v1965 = vpack.c.b16 %v1855, %v1853
    %v1966 = vpack.c.b16 %v1858, %v1856
    %v1967 = vpack.c.b16 %v1859, %v1857
    %v1968 = vpack.c.b16 %v1862, %v1860
    %v1969 = vpack.c.b16 %v1863, %v1861
    %v1970 = vpack.c.b16 %v1866, %v1864
    %v1971 = vpack.c.b16 %v1867, %v1865
    %v1972 = vpack.c.b16 %v1870, %v1868
    %v1973 = vpack.c.b16 %v1871, %v1869
    %v1974 = vpack.c.b16 %v1874, %v1872
    %v1975 = vpack.c.b16 %v1875, %v1873
    %v1976 = vpack.c.b16 %v1878, %v1876
    %v1977 = vpack.c.b16 %v1879, %v1877
    %v1978 = vpack.c.b16 %v1882, %v1880
    %v1979 = vpack.c.b16 %v1883, %v1881
    %v1980 = vpack.c.b16 %v1886, %v1884
    %v1981 = vpack.c.b16 %v1887, %v1885
    %v1982 = vpack.c.b16 %v1890, %v1888
    %v1983 = vpack.c.b16 %v1891, %v1889
    %v1984 = vpack.c.b16 %v1894, %v1892
    %v1985 = vpack.c.b16 %v1895, %v1893
    %v1986 = vpack.c.b16 %v1898, %v1896
    %v1987 = vpack.c.b16 %v1899, %v1897
    %v1988 = vpack.c.b16 %v1902, %v1900
    %v1989 = vpack.c.b16 %v1903, %v1901
    %v1990 = vpack.c.b16 %v1906, %v1904
    %v1991 = vpack.c.b16 %v1907, %v1905
    %v1992 = vpack.c.b16 %v1910, %v1908
    %v1993 = vpack.c.b16 %v1911, %v1909
    %v1994 = vpack.c.b16 %v1914, %v1912
    %v1995 = vpack.c.b16 %v1915, %v1913
    %v1996 = vpack.c.b16 %v1918, %v1916
    %v1997 = vpack.c.b16 %v1919, %v1917
    %v1998 = vpack.c.b16 %v1922, %v1920
    %v1999 = vpack.c.b16 %v1923, %v1921
    %v2000 = vpack.c.b16 %v1926, %v1924
    %v2001 = vpack.c.b16 %v1927, %v1925
    %v2002 = vpack.c.b16 %v1930, %v1928
    %v2003 = vpack.c.b16 %v1931, %v1929
    %v2004 = vpack.c.b16 %v1934, %v1932
    %v2005 = vpack.c.b16 %v1935, %v1933
    %v2006 = vpack.c.b16 %v1938, %v1936
    %v2007 = vpack.c.b16 %v1939, %v1937
    %v2008 = vpack.c.b16 %v1942, %v1940
    %v2009 = vpack.c.b16 %v1943, %v1941
    %v2010 = vpack.c.b16 %v1946, %v1944
    %v2011 = vpack.c.b16 %v1947, %v1945
    %2076 = vmatpush.bf16.msra.mxu0 %v1962
    %2077 = vmatpush.bf16.msra.mxu0 %v1960
    %2078 = vmatpush.bf16.msra.mxu0 %v1958
    %2079 = vmatpush.bf16.msra.mxu0 %v1956
    %2080 = vmatpush.bf16.msra.mxu0 %v1954
    %2081 = vmatpush.bf16.msra.mxu0 %v1952
    %2082 = vmatpush.bf16.msra.mxu0 %v1950
    %2083 = vmatpush.bf16.msra.mxu0 %v1948
    %2084 = vmatmul.bf16.gmra.mxu0 %v1682
    %v2085 = vpop.f32.mrf.mxu0
    %v2086 = vadd.f32 %v1752, %v2085
    %v2087 = vpop.f32.mrf.mxu0
    %v2088 = vadd.f32 %v1752, %v2087
    %2089 = vdwg.mxu0
    %2090 = vmatpush.bf16.msra.mxu0 %v1978
    %2091 = vmatpush.bf16.msra.mxu0 %v1976
    %2092 = vmatpush.bf16.msra.mxu0 %v1974
    %2093 = vmatpush.bf16.msra.mxu0 %v1972
    %2094 = vmatpush.bf16.msra.mxu0 %v1970
    %2095 = vmatpush.bf16.msra.mxu0 %v1968
    %2096 = vmatpush.bf16.msra.mxu0 %v1966
    %2097 = vmatpush.bf16.msra.mxu0 %v1964
    %2098 = vmatmul.bf16.gmra.mxu0 %v1683
    %v2099 = vpop.f32.mrf.mxu0
    %v2100 = vadd.f32 %v2086, %v2099
    %v2101 = vpop.f32.mrf.mxu0
    %v2102 = vadd.f32 %v2088, %v2101
    %2103 = vdwg.mxu0
    %2104 = vmatpush.bf16.msra.mxu0 %v1994
    %2105 = vmatpush.bf16.msra.mxu0 %v1992
    %2106 = vmatpush.bf16.msra.mxu0 %v1990
    %2107 = vmatpush.bf16.msra.mxu0 %v1988
    %2108 = vmatpush.bf16.msra.mxu0 %v1986
    %2109 = vmatpush.bf16.msra.mxu0 %v1984
    %2110 = vmatpush.bf16.msra.mxu0 %v1982
    %2111 = vmatpush.bf16.msra.mxu0 %v1980
    %2112 = vmatmul.bf16.gmra.mxu0 %v1684
    %v2113 = vpop.f32.mrf.mxu0
    %v2114 = vadd.f32 %v2100, %v2113
    %v2115 = vpop.f32.mrf.mxu0
    %v2116 = vadd.f32 %v2102, %v2115
    %2117 = vdwg.mxu0
    %2118 = vmatpush.bf16.msra.mxu0 %v2010
    %2119 = vmatpush.bf16.msra.mxu0 %v2008
    %2120 = vmatpush.bf16.msra.mxu0 %v2006
    %2121 = vmatpush.bf16.msra.mxu0 %v2004
    %2122 = vmatpush.bf16.msra.mxu0 %v2002
    %2123 = vmatpush.bf16.msra.mxu0 %v2000
    %2124 = vmatpush.bf16.msra.mxu0 %v1998
    %2125 = vmatpush.bf16.msra.mxu0 %v1996
    %2126 = vmatmul.bf16.gmra.mxu0 %v1685
    %v2127 = vpop.f32.mrf.mxu0
    %v2128 = vadd.f32 %v2114, %v2127
    %v2129 = vpop.f32.mrf.mxu0
    %v2130 = vadd.f32 %v2116, %v2129
    %2131 = vdwg.mxu0
    %2132 = vmatpush.bf16.msra.mxu0 %v1963
    %2133 = vmatpush.bf16.msra.mxu0 %v1961
    %2134 = vmatpush.bf16.msra.mxu0 %v1959
    %2135 = vmatpush.bf16.msra.mxu0 %v1957
    %2136 = vmatpush.bf16.msra.mxu0 %v1955
    %2137 = vmatpush.bf16.msra.mxu0 %v1953
    %2138 = vmatpush.bf16.msra.mxu0 %v1951
    %2139 = vmatpush.bf16.msra.mxu0 %v1949
    %2140 = vmatmul.bf16.gmra.mxu0 %v1682
    %v2141 = vpop.f32.mrf.mxu0
    %v2142 = vadd.f32 %v1753, %v2141
    %v2143 = vpop.f32.mrf.mxu0
    %v2144 = vadd.f32 %v1753, %v2143
    %2145 = vdwg.mxu0
    %2146 = vmatpush.bf16.msra.mxu0 %v1979
    %2147 = vmatpush.bf16.msra.mxu0 %v1977
    %2148 = vmatpush.bf16.msra.mxu0 %v1975
    %2149 = vmatpush.bf16.msra.mxu0 %v1973
    %2150 = vmatpush.bf16.msra.mxu0 %v1971
    %2151 = vmatpush.bf16.msra.mxu0 %v1969
    %2152 = vmatpush.bf16.msra.mxu0 %v1967
    %2153 = vmatpush.bf16.msra.mxu0 %v1965
    %2154 = vmatmul.bf16.gmra.mxu0 %v1683
    %v2155 = vpop.f32.mrf.mxu0
    %v2156 = vadd.f32 %v2142, %v2155
    %v2157 = vpop.f32.mrf.mxu0
    %v2158 = vadd.f32 %v2144, %v2157
    %2159 = vdwg.mxu0
    %2160 = vmatpush.bf16.msra.mxu0 %v1995
    %2161 = vmatpush.bf16.msra.mxu0 %v1993
    %2162 = vmatpush.bf16.msra.mxu0 %v1991
    %2163 = vmatpush.bf16.msra.mxu0 %v1989
    %2164 = vmatpush.bf16.msra.mxu0 %v1987
    %2165 = vmatpush.bf16.msra.mxu0 %v1985
    %2166 = vmatpush.bf16.msra.mxu0 %v1983
    %2167 = vmatpush.bf16.msra.mxu0 %v1981
    %2168 = vmatmul.bf16.gmra.mxu0 %v1684
    %v2169 = vpop.f32.mrf.mxu0
    %v2170 = vadd.f32 %v2156, %v2169
    %v2171 = vpop.f32.mrf.mxu0
    %v2172 = vadd.f32 %v2158, %v2171
    %2173 = vdwg.mxu0
    %2174 = vmatpush.bf16.msra.mxu0 %v2011
    %2175 = vmatpush.bf16.msra.mxu0 %v2009
    %2176 = vmatpush.bf16.msra.mxu0 %v2007
    %2177 = vmatpush.bf16.msra.mxu0 %v2005
    %2178 = vmatpush.bf16.msra.mxu0 %v2003
    %2179 = vmatpush.bf16.msra.mxu0 %v2001
    %2180 = vmatpush.bf16.msra.mxu0 %v1999
    %2181 = vmatpush.bf16.msra.mxu0 %v1997
    %2182 = vmatmul.bf16.gmra.mxu0 %v1685
    %v2183 = vpop.f32.mrf.mxu0
    %v2184 = vadd.f32 %v2170, %v2183
    %v2185 = vpop.f32.mrf.mxu0
    %v2186 = vadd.f32 %v2172, %v2185
    %2187 = vdwg.mxu0
    %v2188 = vmax.f32 %v2128, 0.0
    %v2189 = vmax.f32 %v2184, 0.0
    %v2190 = vmax.f32 %v2130, 0.0
    %v2191 = vmax.f32 %v2186, 0.0
    %v2192 = vpack.c.bf16 %v2190, %v2188
    %v2193 = vpack.c.bf16 %v2191, %v2189
    %v2194 = vld [vmem:[%s6] sm:$0xff]
    %v2195 = vld [vmem:[%s6 + $0x8] sm:$0xff]
    %v2196 = vld [vmem:[%s6 + $0x10] sm:$0xff]
    %v2197 = vld [vmem:[%s6 + $0x18] sm:$0xff]
    %v2198 = vld [vmem:[%s6 + $0x20] sm:$0xff]
    %v2199 = vld [vmem:[%s6 + $0x28] sm:$0xff]
    %v2200 = vld [vmem:[%s6 + $0x30] sm:$0xff]
    %v2201 = vld [vmem:[%s6 + $0x38] sm:$0xff]
    %v2202 = vld [vmem:[%s6 + $0x40] sm:$0xff]
    %v2203 = vld [vmem:[%s6 + $0x48] sm:$0xff]
    %v2204 = vld [vmem:[%s6 + $0x50] sm:$0xff]
    %v2205 = vld [vmem:[%s6 + $0x58] sm:$0xff]
    %v2206 = vld [vmem:[%s6 + $0x60] sm:$0xff]
    %v2207 = vld [vmem:[%s6 + $0x68] sm:$0xff]
    %v2208 = vld [vmem:[%s6 + $0x70] sm:$0xff]
    %v2209 = vld [vmem:[%s6 + $0x78] sm:$0xff]
    %v2210 = vld [vmem:[%s6 + $0x80] sm:$0xff]
    %v2211 = vld [vmem:[%s6 + $0x88] sm:$0xff]
    %v2212 = vld [vmem:[%s6 + $0x90] sm:$0xff]
    %v2213 = vld [vmem:[%s6 + $0x98] sm:$0xff]
    %v2214 = vld [vmem:[%s6 + $0xa0] sm:$0xff]
    %v2215 = vld [vmem:[%s6 + $0xa8] sm:$0xff]
    %v2216 = vld [vmem:[%s6 + $0xb0] sm:$0xff]
    %v2217 = vld [vmem:[%s6 + $0xb8] sm:$0xff]
    %v2218 = vld [vmem:[%s6 + $0xc0] sm:$0xff]
    %v2219 = vld [vmem:[%s6 + $0xc8] sm:$0xff]
    %v2220 = vld [vmem:[%s6 + $0xd0] sm:$0xff]
    %v2221 = vld [vmem:[%s6 + $0xd8] sm:$0xff]
    %v2222 = vld [vmem:[%s6 + $0xe0] sm:$0xff]
    %v2223 = vld [vmem:[%s6 + $0xe8] sm:$0xff]
    %v2224 = vld [vmem:[%s6 + $0xf0] sm:$0xff]
    %v2225 = vld [vmem:[%s6 + $0xf8] sm:$0xff]
    %v2226 = vld [vmem:[%s7] sm:$0x3]
    %v2228 = vperm.slane %v2226, 0
    %v2229 = vperm.slane %v2226, 1
    %v2264 = vunpack.c.l.b16 %v2194
    %v2265 = vunpack.c.h.b16 %v2194
    %v2266 = vunpack.c.l.b16 %v2195
    %v2267 = vunpack.c.h.b16 %v2195
    %v2268 = vunpack.c.l.b16 %v2196
    %v2269 = vunpack.c.h.b16 %v2196
    %v2270 = vunpack.c.l.b16 %v2197
    %v2271 = vunpack.c.h.b16 %v2197
    %v2272 = vunpack.c.l.b16 %v2198
    %v2273 = vunpack.c.h.b16 %v2198
    %v2274 = vunpack.c.l.b16 %v2199
    %v2275 = vunpack.c.h.b16 %v2199
    %v2276 = vunpack.c.l.b16 %v2200
    %v2277 = vunpack.c.h.b16 %v2200
    %v2278 = vunpack.c.l.b16 %v2201
    %v2279 = vunpack.c.h.b16 %v2201
    %v2280 = vunpack.c.l.b16 %v2202
    %v2281 = vunpack.c.h.b16 %v2202
    %v2282 = vunpack.c.l.b16 %v2203
    %v2283 = vunpack.c.h.b16 %v2203
    %v2284 = vunpack.c.l.b16 %v2204
    %v2285 = vunpack.c.h.b16 %v2204
    %v2286 = vunpack.c.l.b16 %v2205
    %v2287 = vunpack.c.h.b16 %v2205
    %v2288 = vunpack.c.l.b16 %v2206
    %v2289 = vunpack.c.h.b16 %v2206
    %v2290 = vunpack.c.l.b16 %v2207
    %v2291 = vunpack.c.h.b16 %v2207
    %v2292 = vunpack.c.l.b16 %v2208
    %v2293 = vunpack.c.h.b16 %v2208
    %v2294 = vunpack.c.l.b16 %v2209
    %v2295 = vunpack.c.h.b16 %v2209
    %v2296 = vunpack.c.l.b16 %v2210
    %v2297 = vunpack.c.h.b16 %v2210
    %v2298 = vunpack.c.l.b16 %v2211
    %v2299 = vunpack.c.h.b16 %v2211
    %v2300 = vunpack.c.l.b16 %v2212
    %v2301 = vunpack.c.h.b16 %v2212
    %v2302 = vunpack.c.l.b16 %v2213
    %v2303 = vunpack.c.h.b16 %v2213
    %v2304 = vunpack.c.l.b16 %v2214
    %v2305 = vunpack.c.h.b16 %v2214
    %v2306 = vunpack.c.l.b16 %v2215
    %v2307 = vunpack.c.h.b16 %v2215
    %v2308 = vunpack.c.l.b16 %v2216
    %v2309 = vunpack.c.h.b16 %v2216
    %v2310 = vunpack.c.l.b16 %v2217
    %v2311 = vunpack.c.h.b16 %v2217
    %v2312 = vunpack.c.l.b16 %v2218
    %v2313 = vunpack.c.h.b16 %v2218
    %v2314 = vunpack.c.l.b16 %v2219
    %v2315 = vunpack.c.h.b16 %v2219
    %v2316 = vunpack.c.l.b16 %v2220
    %v2317 = vunpack.c.h.b16 %v2220
    %v2318 = vunpack.c.l.b16 %v2221
    %v2319 = vunpack.c.h.b16 %v2221
    %v2320 = vunpack.c.l.b16 %v2222
    %v2321 = vunpack.c.h.b16 %v2222
    %v2322 = vunpack.c.l.b16 %v2223
    %v2323 = vunpack.c.h.b16 %v2223
    %v2324 = vunpack.c.l.b16 %v2224
    %v2325 = vunpack.c.h.b16 %v2224
    %v2326 = vunpack.c.l.b16 %v2225
    %v2327 = vunpack.c.h.b16 %v2225
    %v2328 = vpack.c.b16 %v2266, %v2264
    %v2329 = vpack.c.b16 %v2267, %v2265
    %v2330 = vpack.c.b16 %v2270, %v2268
    %v2331 = vpack.c.b16 %v2271, %v2269
    %v2332 = vpack.c.b16 %v2274, %v2272
    %v2333 = vpack.c.b16 %v2275, %v2273
    %v2334 = vpack.c.b16 %v2278, %v2276
    %v2335 = vpack.c.b16 %v2279, %v2277
    %v2336 = vpack.c.b16 %v2282, %v2280
    %v2337 = vpack.c.b16 %v2283, %v2281
    %v2338 = vpack.c.b16 %v2286, %v2284
    %v2339 = vpack.c.b16 %v2287, %v2285
    %v2340 = vpack.c.b16 %v2290, %v2288
    %v2341 = vpack.c.b16 %v2291, %v2289
    %v2342 = vpack.c.b16 %v2294, %v2292
    %v2343 = vpack.c.b16 %v2295, %v2293
    %v2344 = vpack.c.b16 %v2298, %v2296
    %v2345 = vpack.c.b16 %v2299, %v2297
    %v2346 = vpack.c.b16 %v2302, %v2300
    %v2347 = vpack.c.b16 %v2303, %v2301
    %v2348 = vpack.c.b16 %v2306, %v2304
    %v2349 = vpack.c.b16 %v2307, %v2305
    %v2350 = vpack.c.b16 %v2310, %v2308
    %v2351 = vpack.c.b16 %v2311, %v2309
    %v2352 = vpack.c.b16 %v2314, %v2312
    %v2353 = vpack.c.b16 %v2315, %v2313
    %v2354 = vpack.c.b16 %v2318, %v2316
    %v2355 = vpack.c.b16 %v2319, %v2317
    %v2356 = vpack.c.b16 %v2322, %v2320
    %v2357 = vpack.c.b16 %v2323, %v2321
    %v2358 = vpack.c.b16 %v2326, %v2324
    %v2359 = vpack.c.b16 %v2327, %v2325
    %2392 = vmatpush.bf16.msra.mxu0 %v2342
    %2393 = vmatpush.bf16.msra.mxu0 %v2340
    %2394 = vmatpush.bf16.msra.mxu0 %v2338
    %2395 = vmatpush.bf16.msra.mxu0 %v2336
    %2396 = vmatpush.bf16.msra.mxu0 %v2334
    %2397 = vmatpush.bf16.msra.mxu0 %v2332
    %2398 = vmatpush.bf16.msra.mxu0 %v2330
    %2399 = vmatpush.bf16.msra.mxu0 %v2328
    %2400 = vmatmul.bf16.gmra.mxu0 %v2192
    %v2401 = vpop.f32.mrf.mxu0
    %v2402 = vadd.f32 %v2228, %v2401
    %v2403 = vpop.f32.mrf.mxu0
    %v2404 = vadd.f32 %v2228, %v2403
    %2405 = vdwg.mxu0
    %2406 = vmatpush.bf16.msra.mxu0 %v2358
    %2407 = vmatpush.bf16.msra.mxu0 %v2356
    %2408 = vmatpush.bf16.msra.mxu0 %v2354
    %2409 = vmatpush.bf16.msra.mxu0 %v2352
    %2410 = vmatpush.bf16.msra.mxu0 %v2350
    %2411 = vmatpush.bf16.msra.mxu0 %v2348
    %2412 = vmatpush.bf16.msra.mxu0 %v2346
    %2413 = vmatpush.bf16.msra.mxu0 %v2344
    %2414 = vmatmul.bf16.gmra.mxu0 %v2193
    %v2415 = vpop.f32.mrf.mxu0
    %v2416 = vadd.f32 %v2402, %v2415
    %v2417 = vpop.f32.mrf.mxu0
    %v2418 = vadd.f32 %v2404, %v2417
    %2419 = vdwg.mxu0
    %2420 = vmatpush.bf16.msra.mxu0 %v2343
    %2421 = vmatpush.bf16.msra.mxu0 %v2341
    %2422 = vmatpush.bf16.msra.mxu0 %v2339
    %2423 = vmatpush.bf16.msra.mxu0 %v2337
    %2424 = vmatpush.bf16.msra.mxu0 %v2335
    %2425 = vmatpush.bf16.msra.mxu0 %v2333
    %2426 = vmatpush.bf16.msra.mxu0 %v2331
    %2427 = vmatpush.bf16.msra.mxu0 %v2329
    %2428 = vmatmul.bf16.gmra.mxu0 %v2192
    %v2429 = vpop.f32.mrf.mxu0
    %v2430 = vadd.f32 %v2229, %v2429
    %v2431 = vpop.f32.mrf.mxu0
    %v2432 = vadd.f32 %v2229, %v2431
    %2433 = vdwg.mxu0
    %2434 = vmatpush.bf16.msra.mxu0 %v2359
    %2435 = vmatpush.bf16.msra.mxu0 %v2357
    %2436 = vmatpush.bf16.msra.mxu0 %v2355
    %2437 = vmatpush.bf16.msra.mxu0 %v2353
    %2438 = vmatpush.bf16.msra.mxu0 %v2351
    %2439 = vmatpush.bf16.msra.mxu0 %v2349
    %2440 = vmatpush.bf16.msra.mxu0 %v2347
    %2441 = vmatpush.bf16.msra.mxu0 %v2345
    %2442 = vmatmul.bf16.gmra.mxu0 %v2193
    %v2443 = vpop.f32.mrf.mxu0
    %v2444 = vadd.f32 %v2430, %v2443
    %v2445 = vpop.f32.mrf.mxu0
    %v2446 = vadd.f32 %v2432, %v2445
    %2447 = vdwg.mxu0
    %v2448 = vld [vmem:[%s1] sm:$0xff]
    %v2449 = vld [vmem:[%s1 + $0x8] sm:$0xff]
    %v2450 = vmul.f32 %v2444, 0.5
    %v2451 = vmul.f32 %v2446, 0.5
    %v2452 = vmul.f32 %v2450, 1.442695
    %v2453 = vpow.pop %v2452
    %v2454 = vmul.f32 %v2451, 1.442695
    %v2455 = vpow.pop %v2454
    %v2456 = vmul.f32 %v2448, %v2453
    %v2457 = vmul.f32 %v2449, %v2455
    %v2458 = vadd.f32 %v2416, %v2456
    %v2459 = vadd.f32 %v2418, %v2457
    %v2460 = vpack.c.bf16 %v2459, %v2458
    %v2461 = vld [vmem:[%s8] sm:$0xff]
    %v2462 = vld [vmem:[%s8 + $0x8] sm:$0xff]
    %v2463 = vld [vmem:[%s8 + $0x10] sm:$0xff]
    %v2464 = vld [vmem:[%s8 + $0x18] sm:$0xff]
    %v2465 = vld [vmem:[%s8 + $0x20] sm:$0xff]
    %v2466 = vld [vmem:[%s8 + $0x28] sm:$0xff]
    %v2467 = vld [vmem:[%s8 + $0x30] sm:$0xff]
    %v2468 = vld [vmem:[%s8 + $0x38] sm:$0xff]
    %v2469 = vld [vmem:[%s8 + $0x40] sm:$0xff]
    %v2470 = vld [vmem:[%s8 + $0x48] sm:$0xff]
    %v2471 = vld [vmem:[%s8 + $0x50] sm:$0xff]
    %v2472 = vld [vmem:[%s8 + $0x58] sm:$0xff]
    %v2473 = vld [vmem:[%s8 + $0x60] sm:$0xff]
    %v2474 = vld [vmem:[%s8 + $0x68] sm:$0xff]
    %v2475 = vld [vmem:[%s8 + $0x70] sm:$0xff]
    %v2476 = vld [vmem:[%s8 + $0x78] sm:$0xff]
    %v2477 = vld [vmem:[%s9] sm:$0x3]
    %v2479 = vperm.slane %v2477, 0
    %v2480 = vperm.slane %v2477, 1
    %v2499 = vunpack.c.l.b16 %v2461
    %v2500 = vunpack.c.h.b16 %v2461
    %v2501 = vunpack.c.l.b16 %v2462
    %v2502 = vunpack.c.h.b16 %v2462
    %v2503 = vunpack.c.l.b16 %v2463
    %v2504 = vunpack.c.h.b16 %v2463
    %v2505 = vunpack.c.l.b16 %v2464
    %v2506 = vunpack.c.h.b16 %v2464
    %v2507 = vunpack.c.l.b16 %v2465
    %v2508 = vunpack.c.h.b16 %v2465
    %v2509 = vunpack.c.l.b16 %v2466
    %v2510 = vunpack.c.h.b16 %v2466
    %v2511 = vunpack.c.l.b16 %v2467
    %v2512 = vunpack.c.h.b16 %v2467
    %v2513 = vunpack.c.l.b16 %v2468
    %v2514 = vunpack.c.h.b16 %v2468
    %v2515 = vunpack.c.l.b16 %v2469
    %v2516 = vunpack.c.h.b16 %v2469
    %v2517 = vunpack.c.l.b16 %v2470
    %v2518 = vunpack.c.h.b16 %v2470
    %v2519 = vunpack.c.l.b16 %v2471
    %v2520 = vunpack.c.h.b16 %v2471
    %v2521 = vunpack.c.l.b16 %v2472
    %v2522 = vunpack.c.h.b16 %v2472
    %v2523 = vunpack.c.l.b16 %v2473
    %v2524 = vunpack.c.h.b16 %v2473
    %v2525 = vunpack.c.l.b16 %v2474
    %v2526 = vunpack.c.h.b16 %v2474
    %v2527 = vunpack.c.l.b16 %v2475
    %v2528 = vunpack.c.h.b16 %v2475
    %v2529 = vunpack.c.l.b16 %v2476
    %v2530 = vunpack.c.h.b16 %v2476
    %v2531 = vpack.c.b16 %v2501, %v2499
    %v2532 = vpack.c.b16 %v2502, %v2500
    %v2533 = vpack.c.b16 %v2505, %v2503
    %v2534 = vpack.c.b16 %v2506, %v2504
    %v2535 = vpack.c.b16 %v2509, %v2507
    %v2536 = vpack.c.b16 %v2510, %v2508
    %v2537 = vpack.c.b16 %v2513, %v2511
    %v2538 = vpack.c.b16 %v2514, %v2512
    %v2539 = vpack.c.b16 %v2517, %v2515
    %v2540 = vpack.c.b16 %v2518, %v2516
    %v2541 = vpack.c.b16 %v2521, %v2519
    %v2542 = vpack.c.b16 %v2522, %v2520
    %v2543 = vpack.c.b16 %v2525, %v2523
    %v2544 = vpack.c.b16 %v2526, %v2524
    %v2545 = vpack.c.b16 %v2529, %v2527
    %v2546 = vpack.c.b16 %v2530, %v2528
    %2563 = vmatpush.bf16.msra.mxu0 %v2545
    %2564 = vmatpush.bf16.msra.mxu0 %v2543
    %2565 = vmatpush.bf16.msra.mxu0 %v2541
    %2566 = vmatpush.bf16.msra.mxu0 %v2539
    %2567 = vmatpush.bf16.msra.mxu0 %v2537
    %2568 = vmatpush.bf16.msra.mxu0 %v2535
    %2569 = vmatpush.bf16.msra.mxu0 %v2533
    %2570 = vmatpush.bf16.msra.mxu0 %v2531
    %2571 = vmatmul.bf16.gmra.mxu0 %v2460
    %v2572 = vpop.f32.mrf.mxu0
    %v2573 = vadd.f32 %v2479, %v2572
    %v2574 = vpop.f32.mrf.mxu0
    %v2575 = vadd.f32 %v2479, %v2574
    %2576 = vdwg.mxu0
    %2577 = vmatpush.bf16.msra.mxu0 %v2546
    %2578 = vmatpush.bf16.msra.mxu0 %v2544
    %2579 = vmatpush.bf16.msra.mxu0 %v2542
    %2580 = vmatpush.bf16.msra.mxu0 %v2540
    %2581 = vmatpush.bf16.msra.mxu0 %v2538
    %2582 = vmatpush.bf16.msra.mxu0 %v2536
    %2583 = vmatpush.bf16.msra.mxu0 %v2534
    %2584 = vmatpush.bf16.msra.mxu0 %v2532
    %2585 = vmatmul.bf16.gmra.mxu0 %v2460
    %v2586 = vpop.f32.mrf.mxu0
    %v2587 = vadd.f32 %v2480, %v2586
    %v2588 = vpop.f32.mrf.mxu0
    %v2589 = vadd.f32 %v2480, %v2588
    %2590 = vdwg.mxu0
    %v2591 = vmax.f32 %v2573, 0.0
    %v2592 = vmax.f32 %v2587, 0.0
    %v2593 = vmax.f32 %v2575, 0.0
    %v2594 = vmax.f32 %v2589, 0.0
    %v2595 = vpack.c.bf16 %v2593, %v2591
    %v2596 = vpack.c.bf16 %v2594, %v2592
    %v2597 = vld [vmem:[%s10] sm:$0xff]
    %v2598 = vld [vmem:[%s10 + $0x8] sm:$0xff]
    %v2599 = vld [vmem:[%s10 + $0x10] sm:$0xff]
    %v2600 = vld [vmem:[%s10 + $0x18] sm:$0xff]
    %v2601 = vld [vmem:[%s10 + $0x20] sm:$0xff]
    %v2602 = vld [vmem:[%s10 + $0x28] sm:$0xff]
    %v2603 = vld [vmem:[%s10 + $0x30] sm:$0xff]
    %v2604 = vld [vmem:[%s10 + $0x38] sm:$0xff]
    %v2605 = vld [vmem:[%s10 + $0x40] sm:$0xff]
    %v2606 = vld [vmem:[%s10 + $0x48] sm:$0xff]
    %v2607 = vld [vmem:[%s10 + $0x50] sm:$0xff]
    %v2608 = vld [vmem:[%s10 + $0x58] sm:$0xff]
    %v2609 = vld [vmem:[%s10 + $0x60] sm:$0xff]
    %v2610 = vld [vmem:[%s10 + $0x68] sm:$0xff]
    %v2611 = vld [vmem:[%s10 + $0x70] sm:$0xff]
    %v2612 = vld [vmem:[%s10 + $0x78] sm:$0xff]
    %v2613 = vld [vmem:[%s10 + $0x80] sm:$0xff]
    %v2614 = vld [vmem:[%s10 + $0x88] sm:$0xff]
    %v2615 = vld [vmem:[%s10 + $0x90] sm:$0xff]
    %v2616 = vld [vmem:[%s10 + $0x98] sm:$0xff]
    %v2617 = vld [vmem:[%s10 + $0xa0] sm:$0xff]
    %v2618 = vld [vmem:[%s10 + $0xa8] sm:$0xff]
    %v2619 = vld [vmem:[%s10 + $0xb0] sm:$0xff]
    %v2620 = vld [vmem:[%s10 + $0xb8] sm:$0xff]
    %v2621 = vld [vmem:[%s10 + $0xc0] sm:$0xff]
    %v2622 = vld [vmem:[%s10 + $0xc8] sm:$0xff]
    %v2623 = vld [vmem:[%s10 + $0xd0] sm:$0xff]
    %v2624 = vld [vmem:[%s10 + $0xd8] sm:$0xff]
    %v2625 = vld [vmem:[%s10 + $0xe0] sm:$0xff]
    %v2626 = vld [vmem:[%s10 + $0xe8] sm:$0xff]
    %v2627 = vld [vmem:[%s10 + $0xf0] sm:$0xff]
    %v2628 = vld [vmem:[%s10 + $0xf8] sm:$0xff]
    %v2629 = vld [vmem:[%s10 + $0x100] sm:$0xff]
    %v2630 = vld [vmem:[%s10 + $0x108] sm:$0xff]
    %v2631 = vld [vmem:[%s10 + $0x110] sm:$0xff]
    %v2632 = vld [vmem:[%s10 + $0x118] sm:$0xff]
    %v2633 = vld [vmem:[%s10 + $0x120] sm:$0xff]
    %v2634 = vld [vmem:[%s10 + $0x128] sm:$0xff]
    %v2635 = vld [vmem:[%s10 + $0x130] sm:$0xff]
    %v2636 = vld [vmem:[%s10 + $0x138] sm:$0xff]
    %v2637 = vld [vmem:[%s10 + $0x140] sm:$0xff]
    %v2638 = vld [vmem:[%s10 + $0x148] sm:$0xff]
    %v2639 = vld [vmem:[%s10 + $0x150] sm:$0xff]
    %v2640 = vld [vmem:[%s10 + $0x158] sm:$0xff]
    %v2641 = vld [vmem:[%s10 + $0x160] sm:$0xff]
    %v2642 = vld [vmem:[%s10 + $0x168] sm:$0xff]
    %v2643 = vld [vmem:[%s10 + $0x170] sm:$0xff]
    %v2644 = vld [vmem:[%s10 + $0x178] sm:$0xff]
    %v2645 = vld [vmem:[%s10 + $0x180] sm:$0xff]
    %v2646 = vld [vmem:[%s10 + $0x188] sm:$0xff]
    %v2647 = vld [vmem:[%s10 + $0x190] sm:$0xff]
    %v2648 = vld [vmem:[%s10 + $0x198] sm:$0xff]
    %v2649 = vld [vmem:[%s10 + $0x1a0] sm:$0xff]
    %v2650 = vld [vmem:[%s10 + $0x1a8] sm:$0xff]
    %v2651 = vld [vmem:[%s10 + $0x1b0] sm:$0xff]
    %v2652 = vld [vmem:[%s10 + $0x1b8] sm:$0xff]
    %v2653 = vld [vmem:[%s10 + $0x1c0] sm:$0xff]
    %v2654 = vld [vmem:[%s10 + $0x1c8] sm:$0xff]
    %v2655 = vld [vmem:[%s10 + $0x1d0] sm:$0xff]
    %v2656 = vld [vmem:[%s10 + $0x1d8] sm:$0xff]
    %v2657 = vld [vmem:[%s10 + $0x1e0] sm:$0xff]
    %v2658 = vld [vmem:[%s10 + $0x1e8] sm:$0xff]
    %v2659 = vld [vmem:[%s10 + $0x1f0] sm:$0xff]
    %v2660 = vld [vmem:[%s10 + $0x1f8] sm:$0xff]
    %v2661 = vld [vmem:[%s11] sm:$0xf]
    %v2663 = vperm.slane %v2661, 0
    %v2664 = vperm.slane %v2661, 1
    %v2665 = vperm.slane %v2661, 2
    %v2666 = vperm.slane %v2661, 3
    %v2735 = vunpack.c.l.b16 %v2597
    %v2736 = vunpack.c.h.b16 %v2597
    %v2737 = vunpack.c.l.b16 %v2598
    %v2738 = vunpack.c.h.b16 %v2598
    %v2739 = vunpack.c.l.b16 %v2599
    %v2740 = vunpack.c.h.b16 %v2599
    %v2741 = vunpack.c.l.b16 %v2600
    %v2742 = vunpack.c.h.b16 %v2600
    %v2743 = vunpack.c.l.b16 %v2601
    %v2744 = vunpack.c.h.b16 %v2601
    %v2745 = vunpack.c.l.b16 %v2602
    %v2746 = vunpack.c.h.b16 %v2602
    %v2747 = vunpack.c.l.b16 %v2603
    %v2748 = vunpack.c.h.b16 %v2603
    %v2749 = vunpack.c.l.b16 %v2604
    %v2750 = vunpack.c.h.b16 %v2604
    %v2751 = vunpack.c.l.b16 %v2605
    %v2752 = vunpack.c.h.b16 %v2605
    %v2753 = vunpack.c.l.b16 %v2606
    %v2754 = vunpack.c.h.b16 %v2606
    %v2755 = vunpack.c.l.b16 %v2607
    %v2756 = vunpack.c.h.b16 %v2607
    %v2757 = vunpack.c.l.b16 %v2608
    %v2758 = vunpack.c.h.b16 %v2608
    %v2759 = vunpack.c.l.b16 %v2609
    %v2760 = vunpack.c.h.b16 %v2609
    %v2761 = vunpack.c.l.b16 %v2610
    %v2762 = vunpack.c.h.b16 %v2610
    %v2763 = vunpack.c.l.b16 %v2611
    %v2764 = vunpack.c.h.b16 %v2611
    %v2765 = vunpack.c.l.b16 %v2612
    %v2766 = vunpack.c.h.b16 %v2612
    %v2767 = vunpack.c.l.b16 %v2613
    %v2768 = vunpack.c.h.b16 %v2613
    %v2769 = vunpack.c.l.b16 %v2614
    %v2770 = vunpack.c.h.b16 %v2614
    %v2771 = vunpack.c.l.b16 %v2615
    %v2772 = vunpack.c.h.b16 %v2615
    %v2773 = vunpack.c.l.b16 %v2616
    %v2774 = vunpack.c.h.b16 %v2616
    %v2775 = vunpack.c.l.b16 %v2617
    %v2776 = vunpack.c.h.b16 %v2617
    %v2777 = vunpack.c.l.b16 %v2618
    %v2778 = vunpack.c.h.b16 %v2618
    %v2779 = vunpack.c.l.b16 %v2619
    %v2780 = vunpack.c.h.b16 %v2619
    %v2781 = vunpack.c.l.b16 %v2620
    %v2782 = vunpack.c.h.b16 %v2620
    %v2783 = vunpack.c.l.b16 %v2621
    %v2784 = vunpack.c.h.b16 %v2621
    %v2785 = vunpack.c.l.b16 %v2622
    %v2786 = vunpack.c.h.b16 %v2622
    %v2787 = vunpack.c.l.b16 %v2623
    %v2788 = vunpack.c.h.b16 %v2623
    %v2789 = vunpack.c.l.b16 %v2624
    %v2790 = vunpack.c.h.b16 %v2624
    %v2791 = vunpack.c.l.b16 %v2625
    %v2792 = vunpack.c.h.b16 %v2625
    %v2793 = vunpack.c.l.b16 %v2626
    %v2794 = vunpack.c.h.b16 %v2626
    %v2795 = vunpack.c.l.b16 %v2627
    %v2796 = vunpack.c.h.b16 %v2627
    %v2797 = vunpack.c.l.b16 %v2628
    %v2798 = vunpack.c.h.b16 %v2628
    %v2799 = vunpack.c.l.b16 %v2629
    %v2800 = vunpack.c.h.b16 %v2629
    %v2801 = vunpack.c.l.b16 %v2630
    %v2802 = vunpack.c.h.b16 %v2630
    %v2803 = vunpack.c.l.b16 %v2631
    %v2804 = vunpack.c.h.b16 %v2631
    %v2805 = vunpack.c.l.b16 %v2632
    %v2806 = vunpack.c.h.b16 %v2632
    %v2807 = vunpack.c.l.b16 %v2633
    %v2808 = vunpack.c.h.b16 %v2633
    %v2809 = vunpack.c.l.b16 %v2634
    %v2810 = vunpack.c.h.b16 %v2634
    %v2811 = vunpack.c.l.b16 %v2635
    %v2812 = vunpack.c.h.b16 %v2635
    %v2813 = vunpack.c.l.b16 %v2636
    %v2814 = vunpack.c.h.b16 %v2636
    %v2815 = vunpack.c.l.b16 %v2637
    %v2816 = vunpack.c.h.b16 %v2637
    %v2817 = vunpack.c.l.b16 %v2638
    %v2818 = vunpack.c.h.b16 %v2638
    %v2819 = vunpack.c.l.b16 %v2639
    %v2820 = vunpack.c.h.b16 %v2639
    %v2821 = vunpack.c.l.b16 %v2640
    %v2822 = vunpack.c.h.b16 %v2640
    %v2823 = vunpack.c.l.b16 %v2641
    %v2824 = vunpack.c.h.b16 %v2641
    %v2825 = vunpack.c.l.b16 %v2642
    %v2826 = vunpack.c.h.b16 %v2642
    %v2827 = vunpack.c.l.b16 %v2643
    %v2828 = vunpack.c.h.b16 %v2643
    %v2829 = vunpack.c.l.b16 %v2644
    %v2830 = vunpack.c.h.b16 %v2644
    %v2831 = vunpack.c.l.b16 %v2645
    %v2832 = vunpack.c.h.b16 %v2645
    %v2833 = vunpack.c.l.b16 %v2646
    %v2834 = vunpack.c.h.b16 %v2646
    %v2835 = vunpack.c.l.b16 %v2647
    %v2836 = vunpack.c.h.b16 %v2647
    %v2837 = vunpack.c.l.b16 %v2648
    %v2838 = vunpack.c.h.b16 %v2648
    %v2839 = vunpack.c.l.b16 %v2649
    %v2840 = vunpack.c.h.b16 %v2649
    %v2841 = vunpack.c.l.b16 %v2650
    %v2842 = vunpack.c.h.b16 %v2650
    %v2843 = vunpack.c.l.b16 %v2651
    %v2844 = vunpack.c.h.b16 %v2651
    %v2845 = vunpack.c.l.b16 %v2652
    %v2846 = vunpack.c.h.b16 %v2652
    %v2847 = vunpack.c.l.b16 %v2653
    %v2848 = vunpack.c.h.b16 %v2653
    %v2849 = vunpack.c.l.b16 %v2654
    %v2850 = vunpack.c.h.b16 %v2654
    %v2851 = vunpack.c.l.b16 %v2655
    %v2852 = vunpack.c.h.b16 %v2655
    %v2853 = vunpack.c.l.b16 %v2656
    %v2854 = vunpack.c.h.b16 %v2656
    %v2855 = vunpack.c.l.b16 %v2657
    %v2856 = vunpack.c.h.b16 %v2657
    %v2857 = vunpack.c.l.b16 %v2658
    %v2858 = vunpack.c.h.b16 %v2658
    %v2859 = vunpack.c.l.b16 %v2659
    %v2860 = vunpack.c.h.b16 %v2659
    %v2861 = vunpack.c.l.b16 %v2660
    %v2862 = vunpack.c.h.b16 %v2660
    %v2863 = vpack.c.b16 %v2739, %v2735
    %v2864 = vpack.c.b16 %v2740, %v2736
    %v2865 = vpack.c.b16 %v2741, %v2737
    %v2866 = vpack.c.b16 %v2742, %v2738
    %v2867 = vpack.c.b16 %v2747, %v2743
    %v2868 = vpack.c.b16 %v2748, %v2744
    %v2869 = vpack.c.b16 %v2749, %v2745
    %v2870 = vpack.c.b16 %v2750, %v2746
    %v2871 = vpack.c.b16 %v2755, %v2751
    %v2872 = vpack.c.b16 %v2756, %v2752
    %v2873 = vpack.c.b16 %v2757, %v2753
    %v2874 = vpack.c.b16 %v2758, %v2754
    %v2875 = vpack.c.b16 %v2763, %v2759
    %v2876 = vpack.c.b16 %v2764, %v2760
    %v2877 = vpack.c.b16 %v2765, %v2761
    %v2878 = vpack.c.b16 %v2766, %v2762
    %v2879 = vpack.c.b16 %v2771, %v2767
    %v2880 = vpack.c.b16 %v2772, %v2768
    %v2881 = vpack.c.b16 %v2773, %v2769
    %v2882 = vpack.c.b16 %v2774, %v2770
    %v2883 = vpack.c.b16 %v2779, %v2775
    %v2884 = vpack.c.b16 %v2780, %v2776
    %v2885 = vpack.c.b16 %v2781, %v2777
    %v2886 = vpack.c.b16 %v2782, %v2778
    %v2887 = vpack.c.b16 %v2787, %v2783
    %v2888 = vpack.c.b16 %v2788, %v2784
    %v2889 = vpack.c.b16 %v2789, %v2785
    %v2890 = vpack.c.b16 %v2790, %v2786
    %v2891 = vpack.c.b16 %v2795, %v2791
    %v2892 = vpack.c.b16 %v2796, %v2792
    %v2893 = vpack.c.b16 %v2797, %v2793
    %v2894 = vpack.c.b16 %v2798, %v2794
    %v2895 = vpack.c.b16 %v2803, %v2799
    %v2896 = vpack.c.b16 %v2804, %v2800
    %v2897 = vpack.c.b16 %v2805, %v2801
    %v2898 = vpack.c.b16 %v2806, %v2802
    %v2899 = vpack.c.b16 %v2811, %v2807
    %v2900 = vpack.c.b16 %v2812, %v2808
    %v2901 = vpack.c.b16 %v2813, %v2809
    %v2902 = vpack.c.b16 %v2814, %v2810
    %v2903 = vpack.c.b16 %v2819, %v2815
    %v2904 = vpack.c.b16 %v2820, %v2816
    %v2905 = vpack.c.b16 %v2821, %v2817
    %v2906 = vpack.c.b16 %v2822, %v2818
    %v2907 = vpack.c.b16 %v2827, %v2823
    %v2908 = vpack.c.b16 %v2828, %v2824
    %v2909 = vpack.c.b16 %v2829, %v2825
    %v2910 = vpack.c.b16 %v2830, %v2826
    %v2911 = vpack.c.b16 %v2835, %v2831
    %v2912 = vpack.c.b16 %v2836, %v2832
    %v2913 = vpack.c.b16 %v2837, %v2833
    %v2914 = vpack.c.b16 %v2838, %v2834
    %v2915 = vpack.c.b16 %v2843, %v2839
    %v2916 = vpack.c.b16 %v2844, %v2840
    %v2917 = vpack.c.b16 %v2845, %v2841
    %v2918 = vpack.c.b16 %v2846, %v2842
    %v2919 = vpack.c.b16 %v2851, %v2847
    %v2920 = vpack.c.b16 %v2852, %v2848
    %v2921 = vpack.c.b16 %v2853, %v2849
    %v2922 = vpack.c.b16 %v2854, %v2850
    %v2923 = vpack.c.b16 %v2859, %v2855
    %v2924 = vpack.c.b16 %v2860, %v2856
    %v2925 = vpack.c.b16 %v2861, %v2857
    %v2926 = vpack.c.b16 %v2862, %v2858
    %2991 = vmatpush.bf16.msra.mxu0 %v2891
    %2992 = vmatpush.bf16.msra.mxu0 %v2887
    %2993 = vmatpush.bf16.msra.mxu0 %v2883
    %2994 = vmatpush.bf16.msra.mxu0 %v2879
    %2995 = vmatpush.bf16.msra.mxu0 %v2875
    %2996 = vmatpush.bf16.msra.mxu0 %v2871
    %2997 = vmatpush.bf16.msra.mxu0 %v2867
    %2998 = vmatpush.bf16.msra.mxu0 %v2863
    %2999 = vmatmul.bf16.gmra.mxu0 %v2595
    %v3000 = vpop.f32.mrf.mxu0
    %v3001 = vadd.f32 %v2663, %v3000
    %v3002 = vpop.f32.mrf.mxu0
    %v3003 = vadd.f32 %v2663, %v3002
    %3004 = vdwg.mxu0
    %3005 = vmatpush.bf16.msra.mxu0 %v2923
    %3006 = vmatpush.bf16.msra.mxu0 %v2919
    %3007 = vmatpush.bf16.msra.mxu0 %v2915
    %3008 = vmatpush.bf16.msra.mxu0 %v2911
    %3009 = vmatpush.bf16.msra.mxu0 %v2907
    %3010 = vmatpush.bf16.msra.mxu0 %v2903
    %3011 = vmatpush.bf16.msra.mxu0 %v2899
    %3012 = vmatpush.bf16.msra.mxu0 %v2895
    %3013 = vmatmul.bf16.gmra.mxu0 %v2596
    %v3014 = vpop.f32.mrf.mxu0
    %v3015 = vadd.f32 %v3001, %v3014
    %v3016 = vpop.f32.mrf.mxu0
    %v3017 = vadd.f32 %v3003, %v3016
    %3018 = vdwg.mxu0
    %3019 = vmatpush.bf16.msra.mxu0 %v2892
    %3020 = vmatpush.bf16.msra.mxu0 %v2888
    %3021 = vmatpush.bf16.msra.mxu0 %v2884
    %3022 = vmatpush.bf16.msra.mxu0 %v2880
    %3023 = vmatpush.bf16.msra.mxu0 %v2876
    %3024 = vmatpush.bf16.msra.mxu0 %v2872
    %3025 = vmatpush.bf16.msra.mxu0 %v2868
    %3026 = vmatpush.bf16.msra.mxu0 %v2864
    %3027 = vmatmul.bf16.gmra.mxu0 %v2595
    %v3028 = vpop.f32.mrf.mxu0
    %v3029 = vadd.f32 %v2664, %v3028
    %v3030 = vpop.f32.mrf.mxu0
    %v3031 = vadd.f32 %v2664, %v3030
    %3032 = vdwg.mxu0
    %3033 = vmatpush.bf16.msra.mxu0 %v2924
    %3034 = vmatpush.bf16.msra.mxu0 %v2920
    %3035 = vmatpush.bf16.msra.mxu0 %v2916
    %3036 = vmatpush.bf16.msra.mxu0 %v2912
    %3037 = vmatpush.bf16.msra.mxu0 %v2908
    %3038 = vmatpush.bf16.msra.mxu0 %v2904
    %3039 = vmatpush.bf16.msra.mxu0 %v2900
    %3040 = vmatpush.bf16.msra.mxu0 %v2896
    %3041 = vmatmul.bf16.gmra.mxu0 %v2596
    %v3042 = vpop.f32.mrf.mxu0
    %v3043 = vadd.f32 %v3029, %v3042
    %v3044 = vpop.f32.mrf.mxu0
    %v3045 = vadd.f32 %v3031, %v3044
    %3046 = vdwg.mxu0
    %3047 = vmatpush.bf16.msra.mxu0 %v2893
    %3048 = vmatpush.bf16.msra.mxu0 %v2889
    %3049 = vmatpush.bf16.msra.mxu0 %v2885
    %3050 = vmatpush.bf16.msra.mxu0 %v2881
    %3051 = vmatpush.bf16.msra.mxu0 %v2877
    %3052 = vmatpush.bf16.msra.mxu0 %v2873
    %3053 = vmatpush.bf16.msra.mxu0 %v2869
    %3054 = vmatpush.bf16.msra.mxu0 %v2865
    %3055 = vmatmul.bf16.gmra.mxu0 %v2595
    %v3056 = vpop.f32.mrf.mxu0
    %v3057 = vadd.f32 %v2665, %v3056
    %v3058 = vpop.f32.mrf.mxu0
    %v3059 = vadd.f32 %v2665, %v3058
    %3060 = vdwg.mxu0
    %3061 = vmatpush.bf16.msra.mxu0 %v2925
    %3062 = vmatpush.bf16.msra.mxu0 %v2921
    %3063 = vmatpush.bf16.msra.mxu0 %v2917
    %3064 = vmatpush.bf16.msra.mxu0 %v2913
    %3065 = vmatpush.bf16.msra.mxu0 %v2909
    %3066 = vmatpush.bf16.msra.mxu0 %v2905
    %3067 = vmatpush.bf16.msra.mxu0 %v2901
    %3068 = vmatpush.bf16.msra.mxu0 %v2897
    %3069 = vmatmul.bf16.gmra.mxu0 %v2596
    %v3070 = vpop.f32.mrf.mxu0
    %v3071 = vadd.f32 %v3057, %v3070
    %v3072 = vpop.f32.mrf.mxu0
    %v3073 = vadd.f32 %v3059, %v3072
    %3074 = vdwg.mxu0
    %3075 = vmatpush.bf16.msra.mxu0 %v2894
    %3076 = vmatpush.bf16.msra.mxu0 %v2890
    %3077 = vmatpush.bf16.msra.mxu0 %v2886
    %3078 = vmatpush.bf16.msra.mxu0 %v2882
    %3079 = vmatpush.bf16.msra.mxu0 %v2878
    %3080 = vmatpush.bf16.msra.mxu0 %v2874
    %3081 = vmatpush.bf16.msra.mxu0 %v2870
    %3082 = vmatpush.bf16.msra.mxu0 %v2866
    %3083 = vmatmul.bf16.gmra.mxu0 %v2595
    %v3084 = vpop.f32.mrf.mxu0
    %v3085 = vadd.f32 %v2666, %v3084
    %v3086 = vpop.f32.mrf.mxu0
    %v3087 = vadd.f32 %v2666, %v3086
    %3088 = vdwg.mxu0
    %3089 = vmatpush.bf16.msra.mxu0 %v2926
    %3090 = vmatpush.bf16.msra.mxu0 %v2922
    %3091 = vmatpush.bf16.msra.mxu0 %v2918
    %3092 = vmatpush.bf16.msra.mxu0 %v2914
    %3093 = vmatpush.bf16.msra.mxu0 %v2910
    %3094 = vmatpush.bf16.msra.mxu0 %v2906
    %3095 = vmatpush.bf16.msra.mxu0 %v2902
    %3096 = vmatpush.bf16.msra.mxu0 %v2898
    %3097 = vmatmul.bf16.gmra.mxu0 %v2596
    %v3098 = vpop.f32.mrf.mxu0
    %v3099 = vadd.f32 %v3085, %v3098
    %v3100 = vpop.f32.mrf.mxu0
    %v3101 = vadd.f32 %v3087, %v3100
    %3102 = vdwg.mxu0
    %v3103 = vmax.f32 %v3015, 0.0
    %v3104 = vmax.f32 %v3043, 0.0
    %v3105 = vmax.f32 %v3071, 0.0
    %v3106 = vmax.f32 %v3099, 0.0
    %v3107 = vmax.f32 %v3017, 0.0
    %v3108 = vmax.f32 %v3045, 0.0
    %v3109 = vmax.f32 %v3073, 0.0
    %v3110 = vmax.f32 %v3101, 0.0
    %v3111 = vpack.c.bf16 %v3107, %v3103
    %v3112 = vpack.c.bf16 %v3108, %v3104
    %v3113 = vpack.c.bf16 %v3109, %v3105
    %v3114 = vpack.c.bf16 %v3110, %v3106
    %v3115 = vld [vmem:[%s12] sm:$0xff]
    %v3116 = vld [vmem:[%s12 + $0x8] sm:$0xff]
    %v3117 = vld [vmem:[%s12 + $0x10] sm:$0xff]
    %v3118 = vld [vmem:[%s12 + $0x18] sm:$0xf]
    %v3119 = vld [vmem:[%s12 + $0x1c] sm:$0xff]
    %v3120 = vld [vmem:[%s12 + $0x24] sm:$0xff]
    %v3121 = vld [vmem:[%s12 + $0x2c] sm:$0xff]
    %v3122 = vld [vmem:[%s12 + $0x34] sm:$0xf]
    %v3123 = vld [vmem:[%s12 + $0x38] sm:$0xff]
    %v3124 = vld [vmem:[%s12 + $0x40] sm:$0xff]
    %v3125 = vld [vmem:[%s12 + $0x48] sm:$0xff]
    %v3126 = vld [vmem:[%s12 + $0x50] sm:$0xf]
    %v3127 = vld [vmem:[%s12 + $0x54] sm:$0xff]
    %v3128 = vld [vmem:[%s12 + $0x5c] sm:$0xff]
    %v3129 = vld [vmem:[%s12 + $0x64] sm:$0xff]
    %v3130 = vld [vmem:[%s12 + $0x6c] sm:$0xf]
    %v3131 = vld [vmem:[%s12 + $0x70] sm:$0xff]
    %v3132 = vld [vmem:[%s12 + $0x78] sm:$0xff]
    %v3133 = vld [vmem:[%s12 + $0x80] sm:$0xff]
    %v3134 = vld [vmem:[%s12 + $0x88] sm:$0xf]
    %v3135 = vld [vmem:[%s12 + $0x8c] sm:$0xff]
    %v3136 = vld [vmem:[%s12 + $0x94] sm:$0xff]
    %v3137 = vld [vmem:[%s12 + $0x9c] sm:$0xff]
    %v3138 = vld [vmem:[%s12 + $0xa4] sm:$0xf]
    %v3139 = vld [vmem:[%s12 + $0xa8] sm:$0xff]
    %v3140 = vld [vmem:[%s12 + $0xb0] sm:$0xff]
    %v3141 = vld [vmem:[%s12 + $0xb8] sm:$0xff]
    %v3142 = vld [vmem:[%s12 + $0xc0] sm:$0xf]
    %v3143 = vld [vmem:[%s12 + $0xc4] sm:$0xff]
    %v3144 = vld [vmem:[%s12 + $0xcc] sm:$0xff]
    %v3145 = vld [vmem:[%s12 + $0xd4] sm:$0xff]
    %v3146 = vld [vmem:[%s12 + $0xdc] sm:$0xf]
    %v3147 = vld [vmem:[%s12 + $0xe0] sm:$0xff]
    %v3148 = vld [vmem:[%s12 + $0xe8] sm:$0xff]
    %v3149 = vld [vmem:[%s12 + $0xf0] sm:$0xff]
    %v3150 = vld [vmem:[%s12 + $0xf8] sm:$0xf]
    %v3151 = vld [vmem:[%s12 + $0xfc] sm:$0xff]
    %v3152 = vld [vmem:[%s12 + $0x104] sm:$0xff]
    %v3153 = vld [vmem:[%s12 + $0x10c] sm:$0xff]
    %v3154 = vld [vmem:[%s12 + $0x114] sm:$0xf]
    %v3155 = vld [vmem:[%s12 + $0x118] sm:$0xff]
    %v3156 = vld [vmem:[%s12 + $0x120] sm:$0xff]
    %v3157 = vld [vmem:[%s12 + $0x128] sm:$0xff]
    %v3158 = vld [vmem:[%s12 + $0x130] sm:$0xf]
    %v3159 = vld [vmem:[%s12 + $0x134] sm:$0xff]
    %v3160 = vld [vmem:[%s12 + $0x13c] sm:$0xff]
    %v3161 = vld [vmem:[%s12 + $0x144] sm:$0xff]
    %v3162 = vld [vmem:[%s12 + $0x14c] sm:$0xf]
    %v3163 = vld [vmem:[%s12 + $0x150] sm:$0xff]
    %v3164 = vld [vmem:[%s12 + $0x158] sm:$0xff]
    %v3165 = vld [vmem:[%s12 + $0x160] sm:$0xff]
    %v3166 = vld [vmem:[%s12 + $0x168] sm:$0xf]
    %v3167 = vld [vmem:[%s12 + $0x16c] sm:$0xff]
    %v3168 = vld [vmem:[%s12 + $0x174] sm:$0xff]
    %v3169 = vld [vmem:[%s12 + $0x17c] sm:$0xff]
    %v3170 = vld [vmem:[%s12 + $0x184] sm:$0xf]
    %v3171 = vld [vmem:[%s12 + $0x188] sm:$0xff]
    %v3172 = vld [vmem:[%s12 + $0x190] sm:$0xff]
    %v3173 = vld [vmem:[%s12 + $0x198] sm:$0xff]
    %v3174 = vld [vmem:[%s12 + $0x1a0] sm:$0xf]
    %v3175 = vld [vmem:[%s12 + $0x1a4] sm:$0xff]
    %v3176 = vld [vmem:[%s12 + $0x1ac] sm:$0xff]
    %v3177 = vld [vmem:[%s12 + $0x1b4] sm:$0xff]
    %v3178 = vld [vmem:[%s12 + $0x1bc] sm:$0xf]
    %v3179 = vld [vmem:[%s12 + $0x1c0] sm:$0xff]
    %v3180 = vld [vmem:[%s12 + $0x1c8] sm:$0xff]
    %v3181 = vld [vmem:[%s12 + $0x1d0] sm:$0xff]
    %v3182 = vld [vmem:[%s12 + $0x1d8] sm:$0xf]
    %v3183 = vld [vmem:[%s12 + $0x1dc] sm:$0xff]
    %v3184 = vld [vmem:[%s12 + $0x1e4] sm:$0xff]
    %v3185 = vld [vmem:[%s12 + $0x1ec] sm:$0xff]
    %v3186 = vld [vmem:[%s12 + $0x1f4] sm:$0xf]
    %v3187 = vld [vmem:[%s12 + $0x1f8] sm:$0xff]
    %v3188 = vld [vmem:[%s12 + $0x200] sm:$0xff]
    %v3189 = vld [vmem:[%s12 + $0x208] sm:$0xff]
    %v3190 = vld [vmem:[%s12 + $0x210] sm:$0xf]
    %v3191 = vld [vmem:[%s12 + $0x214] sm:$0xff]
    %v3192 = vld [vmem:[%s12 + $0x21c] sm:$0xff]
    %v3193 = vld [vmem:[%s12 + $0x224] sm:$0xff]
    %v3194 = vld [vmem:[%s12 + $0x22c] sm:$0xf]
    %v3195 = vld [vmem:[%s12 + $0x230] sm:$0xff]
    %v3196 = vld [vmem:[%s12 + $0x238] sm:$0xff]
    %v3197 = vld [vmem:[%s12 + $0x240] sm:$0xff]
    %v3198 = vld [vmem:[%s12 + $0x248] sm:$0xf]
    %v3199 = vld [vmem:[%s12 + $0x24c] sm:$0xff]
    %v3200 = vld [vmem:[%s12 + $0x254] sm:$0xff]
    %v3201 = vld [vmem:[%s12 + $0x25c] sm:$0xff]
    %v3202 = vld [vmem:[%s12 + $0x264] sm:$0xf]
    %v3203 = vld [vmem:[%s12 + $0x268] sm:$0xff]
    %v3204 = vld [vmem:[%s12 + $0x270] sm:$0xff]
    %v3205 = vld [vmem:[%s12 + $0x278] sm:$0xff]
    %v3206 = vld [vmem:[%s12 + $0x280] sm:$0xf]
    %v3207 = vld [vmem:[%s12 + $0x284] sm:$0xff]
    %v3208 = vld [vmem:[%s12 + $0x28c] sm:$0xff]
    %v3209 = vld [vmem:[%s12 + $0x294] sm:$0xff]
    %v3210 = vld [vmem:[%s12 + $0x29c] sm:$0xf]
    %v3211 = vld [vmem:[%s12 + $0x2a0] sm:$0xff]
    %v3212 = vld [vmem:[%s12 + $0x2a8] sm:$0xff]
    %v3213 = vld [vmem:[%s12 + $0x2b0] sm:$0xff]
    %v3214 = vld [vmem:[%s12 + $0x2b8] sm:$0xf]
    %v3215 = vld [vmem:[%s12 + $0x2bc] sm:$0xff]
    %v3216 = vld [vmem:[%s12 + $0x2c4] sm:$0xff]
    %v3217 = vld [vmem:[%s12 + $0x2cc] sm:$0xff]
    %v3218 = vld [vmem:[%s12 + $0x2d4] sm:$0xf]
    %v3219 = vld [vmem:[%s12 + $0x2d8] sm:$0xff]
    %v3220 = vld [vmem:[%s12 + $0x2e0] sm:$0xff]
    %v3221 = vld [vmem:[%s12 + $0x2e8] sm:$0xff]
    %v3222 = vld [vmem:[%s12 + $0x2f0] sm:$0xf]
    %v3223 = vld [vmem:[%s12 + $0x2f4] sm:$0xff]
    %v3224 = vld [vmem:[%s12 + $0x2fc] sm:$0xff]
    %v3225 = vld [vmem:[%s12 + $0x304] sm:$0xff]
    %v3226 = vld [vmem:[%s12 + $0x30c] sm:$0xf]
    %v3227 = vld [vmem:[%s12 + $0x310] sm:$0xff]
    %v3228 = vld [vmem:[%s12 + $0x318] sm:$0xff]
    %v3229 = vld [vmem:[%s12 + $0x320] sm:$0xff]
    %v3230 = vld [vmem:[%s12 + $0x328] sm:$0xf]
    %v3231 = vld [vmem:[%s12 + $0x32c] sm:$0xff]
    %v3232 = vld [vmem:[%s12 + $0x334] sm:$0xff]
    %v3233 = vld [vmem:[%s12 + $0x33c] sm:$0xff]
    %v3234 = vld [vmem:[%s12 + $0x344] sm:$0xf]
    %v3235 = vld [vmem:[%s12 + $0x348] sm:$0xff]
    %v3236 = vld [vmem:[%s12 + $0x350] sm:$0xff]
    %v3237 = vld [vmem:[%s12 + $0x358] sm:$0xff]
    %v3238 = vld [vmem:[%s12 + $0x360] sm:$0xf]
    %v3239 = vld [vmem:[%s12 + $0x364] sm:$0xff]
    %v3240 = vld [vmem:[%s12 + $0x36c] sm:$0xff]
    %v3241 = vld [vmem:[%s12 + $0x374] sm:$0xff]
    %v3242 = vld [vmem:[%s12 + $0x37c] sm:$0xf]
    %v3243 = vld [vmem:[%s12 + $0x380] sm:$0xff]
    %v3244 = vld [vmem:[%s12 + $0x388] sm:$0xff]
    %v3245 = vld [vmem:[%s12 + $0x390] sm:$0xff]
    %v3246 = vld [vmem:[%s12 + $0x398] sm:$0xf]
    %v3247 = vld [vmem:[%s12 + $0x39c] sm:$0xff]
    %v3248 = vld [vmem:[%s12 + $0x3a4] sm:$0xff]
    %v3249 = vld [vmem:[%s12 + $0x3ac] sm:$0xff]
    %v3250 = vld [vmem:[%s12 + $0x3b4] sm:$0xf]
    %v3251 = vld [vmem:[%s12 + $0x3b8] sm:$0xff]
    %v3252 = vld [vmem:[%s12 + $0x3c0] sm:$0xff]
    %v3253 = vld [vmem:[%s12 + $0x3c8] sm:$0xff]
    %v3254 = vld [vmem:[%s12 + $0x3d0] sm:$0xf]
    %v3255 = vld [vmem:[%s12 + $0x3d4] sm:$0xff]
    %v3256 = vld [vmem:[%s12 + $0x3dc] sm:$0xff]
    %v3257 = vld [vmem:[%s12 + $0x3e4] sm:$0xff]
    %v3258 = vld [vmem:[%s12 + $0x3ec] sm:$0xf]
    %v3259 = vld [vmem:[%s12 + $0x3f0] sm:$0xff]
    %v3260 = vld [vmem:[%s12 + $0x3f8] sm:$0xff]
    %v3261 = vld [vmem:[%s12 + $0x400] sm:$0xff]
    %v3262 = vld [vmem:[%s12 + $0x408] sm:$0xf]
    %v3263 = vld [vmem:[%s12 + $0x40c] sm:$0xff]
    %v3264 = vld [vmem:[%s12 + $0x414] sm:$0xff]
    %v3265 = vld [vmem:[%s12 + $0x41c] sm:$0xff]
    %v3266 = vld [vmem:[%s12 + $0x424] sm:$0xf]
    %v3267 = vld [vmem:[%s12 + $0x428] sm:$0xff]
    %v3268 = vld [vmem:[%s12 + $0x430] sm:$0xff]
    %v3269 = vld [vmem:[%s12 + $0x438] sm:$0xff]
    %v3270 = vld [vmem:[%s12 + $0x440] sm:$0xf]
    %v3271 = vld [vmem:[%s12 + $0x444] sm:$0xff]
    %v3272 = vld [vmem:[%s12 + $0x44c] sm:$0xff]
    %v3273 = vld [vmem:[%s12 + $0x454] sm:$0xff]
    %v3274 = vld [vmem:[%s12 + $0x45c] sm:$0xf]
    %v3275 = vld [vmem:[%s12 + $0x460] sm:$0xff]
    %v3276 = vld [vmem:[%s12 + $0x468] sm:$0xff]
    %v3277 = vld [vmem:[%s12 + $0x470] sm:$0xff]
    %v3278 = vld [vmem:[%s12 + $0x478] sm:$0xf]
    %v3279 = vld [vmem:[%s12 + $0x47c] sm:$0xff]
    %v3280 = vld [vmem:[%s12 + $0x484] sm:$0xff]
    %v3281 = vld [vmem:[%s12 + $0x48c] sm:$0xff]
    %v3282 = vld [vmem:[%s12 + $0x494] sm:$0xf]
    %v3283 = vld [vmem:[%s12 + $0x498] sm:$0xff]
    %v3284 = vld [vmem:[%s12 + $0x4a0] sm:$0xff]
    %v3285 = vld [vmem:[%s12 + $0x4a8] sm:$0xff]
    %v3286 = vld [vmem:[%s12 + $0x4b0] sm:$0xf]
    %v3287 = vld [vmem:[%s12 + $0x4b4] sm:$0xff]
    %v3288 = vld [vmem:[%s12 + $0x4bc] sm:$0xff]
    %v3289 = vld [vmem:[%s12 + $0x4c4] sm:$0xff]
    %v3290 = vld [vmem:[%s12 + $0x4cc] sm:$0xf]
    %v3291 = vld [vmem:[%s12 + $0x4d0] sm:$0xff]
    %v3292 = vld [vmem:[%s12 + $0x4d8] sm:$0xff]
    %v3293 = vld [vmem:[%s12 + $0x4e0] sm:$0xff]
    %v3294 = vld [vmem:[%s12 + $0x4e8] sm:$0xf]
    %v3295 = vld [vmem:[%s12 + $0x4ec] sm:$0xff]
    %v3296 = vld [vmem:[%s12 + $0x4f4] sm:$0xff]
    %v3297 = vld [vmem:[%s12 + $0x4fc] sm:$0xff]
    %v3298 = vld [vmem:[%s12 + $0x504] sm:$0xf]
    %v3299 = vld [vmem:[%s12 + $0x508] sm:$0xff]
    %v3300 = vld [vmem:[%s12 + $0x510] sm:$0xff]
    %v3301 = vld [vmem:[%s12 + $0x518] sm:$0xff]
    %v3302 = vld [vmem:[%s12 + $0x520] sm:$0xf]
    %v3303 = vld [vmem:[%s12 + $0x524] sm:$0xff]
    %v3304 = vld [vmem:[%s12 + $0x52c] sm:$0xff]
    %v3305 = vld [vmem:[%s12 + $0x534] sm:$0xff]
    %v3306 = vld [vmem:[%s12 + $0x53c] sm:$0xf]
    %v3307 = vld [vmem:[%s12 + $0x540] sm:$0xff]
    %v3308 = vld [vmem:[%s12 + $0x548] sm:$0xff]
    %v3309 = vld [vmem:[%s12 + $0x550] sm:$0xff]
    %v3310 = vld [vmem:[%s12 + $0x558] sm:$0xf]
    %v3311 = vld [vmem:[%s12 + $0x55c] sm:$0xff]
    %v3312 = vld [vmem:[%s12 + $0x564] sm:$0xff]
    %v3313 = vld [vmem:[%s12 + $0x56c] sm:$0xff]
    %v3314 = vld [vmem:[%s12 + $0x574] sm:$0xf]
    %v3315 = vld [vmem:[%s12 + $0x578] sm:$0xff]
    %v3316 = vld [vmem:[%s12 + $0x580] sm:$0xff]
    %v3317 = vld [vmem:[%s12 + $0x588] sm:$0xff]
    %v3318 = vld [vmem:[%s12 + $0x590] sm:$0xf]
    %v3319 = vld [vmem:[%s12 + $0x594] sm:$0xff]
    %v3320 = vld [vmem:[%s12 + $0x59c] sm:$0xff]
    %v3321 = vld [vmem:[%s12 + $0x5a4] sm:$0xff]
    %v3322 = vld [vmem:[%s12 + $0x5ac] sm:$0xf]
    %v3323 = vld [vmem:[%s12 + $0x5b0] sm:$0xff]
    %v3324 = vld [vmem:[%s12 + $0x5b8] sm:$0xff]
    %v3325 = vld [vmem:[%s12 + $0x5c0] sm:$0xff]
    %v3326 = vld [vmem:[%s12 + $0x5c8] sm:$0xf]
    %v3327 = vld [vmem:[%s12 + $0x5cc] sm:$0xff]
    %v3328 = vld [vmem:[%s12 + $0x5d4] sm:$0xff]
    %v3329 = vld [vmem:[%s12 + $0x5dc] sm:$0xff]
    %v3330 = vld [vmem:[%s12 + $0x5e4] sm:$0xf]
    %v3331 = vld [vmem:[%s12 + $0x5e8] sm:$0xff]
    %v3332 = vld [vmem:[%s12 + $0x5f0] sm:$0xff]
    %v3333 = vld [vmem:[%s12 + $0x5f8] sm:$0xff]
    %v3334 = vld [vmem:[%s12 + $0x600] sm:$0xf]
    %v3335 = vld [vmem:[%s12 + $0x604] sm:$0xff]
    %v3336 = vld [vmem:[%s12 + $0x60c] sm:$0xff]
    %v3337 = vld [vmem:[%s12 + $0x614] sm:$0xff]
    %v3338 = vld [vmem:[%s12 + $0x61c] sm:$0xf]
    %v3339 = vld [vmem:[%s12 + $0x620] sm:$0xff]
    %v3340 = vld [vmem:[%s12 + $0x628] sm:$0xff]
    %v3341 = vld [vmem:[%s12 + $0x630] sm:$0xff]
    %v3342 = vld [vmem:[%s12 + $0x638] sm:$0xf]
    %v3343 = vld [vmem:[%s12 + $0x63c] sm:$0xff]
    %v3344 = vld [vmem:[%s12 + $0x644] sm:$0xff]
    %v3345 = vld [vmem:[%s12 + $0x64c] sm:$0xff]
    %v3346 = vld [vmem:[%s12 + $0x654] sm:$0xf]
    %v3347 = vld [vmem:[%s12 + $0x658] sm:$0xff]
    %v3348 = vld [vmem:[%s12 + $0x660] sm:$0xff]
    %v3349 = vld [vmem:[%s12 + $0x668] sm:$0xff]
    %v3350 = vld [vmem:[%s12 + $0x670] sm:$0xf]
    %v3351 = vld [vmem:[%s12 + $0x674] sm:$0xff]
    %v3352 = vld [vmem:[%s12 + $0x67c] sm:$0xff]
    %v3353 = vld [vmem:[%s12 + $0x684] sm:$0xff]
    %v3354 = vld [vmem:[%s12 + $0x68c] sm:$0xf]
    %v3355 = vld [vmem:[%s12 + $0x690] sm:$0xff]
    %v3356 = vld [vmem:[%s12 + $0x698] sm:$0xff]
    %v3357 = vld [vmem:[%s12 + $0x6a0] sm:$0xff]
    %v3358 = vld [vmem:[%s12 + $0x6a8] sm:$0xf]
    %v3359 = vld [vmem:[%s12 + $0x6ac] sm:$0xff]
    %v3360 = vld [vmem:[%s12 + $0x6b4] sm:$0xff]
    %v3361 = vld [vmem:[%s12 + $0x6bc] sm:$0xff]
    %v3362 = vld [vmem:[%s12 + $0x6c4] sm:$0xf]
    %v3363 = vld [vmem:[%s12 + $0x6c8] sm:$0xff]
    %v3364 = vld [vmem:[%s12 + $0x6d0] sm:$0xff]
    %v3365 = vld [vmem:[%s12 + $0x6d8] sm:$0xff]
    %v3366 = vld [vmem:[%s12 + $0x6e0] sm:$0xf]
    %v3367 = vld [vmem:[%s12 + $0x6e4] sm:$0xff]
    %v3368 = vld [vmem:[%s12 + $0x6ec] sm:$0xff]
    %v3369 = vld [vmem:[%s12 + $0x6f4] sm:$0xff]
    %v3370 = vld [vmem:[%s12 + $0x6fc] sm:$0xf]
    %v3371 = vld [vmem:[%s13] sm:$0x7f]
    %v3373 = vperm.slane %v3371, 0
    %v3374 = vperm.slane %v3371, 1
    %v3375 = vperm.slane %v3371, 2
    %v3376 = vperm.slane %v3371, 3
    %v3377 = vperm.slane %v3371, 4
    %v3378 = vperm.slane %v3371, 5
    %v3379 = vperm.slane %v3371, 6
    %v3643 = vunpack.c.l.b16 %v3115
    %v3644 = vunpack.c.h.b16 %v3115
    %v3645 = vunpack.c.l.b16 %v3116
    %v3646 = vunpack.c.h.b16 %v3116
    %v3647 = vunpack.c.l.b16 %v3117
    %v3648 = vunpack.c.h.b16 %v3117
    %v3649 = vunpack.c.l.b16 %v3118
    %v3650 = vunpack.c.l.b16 %v3119
    %v3651 = vunpack.c.h.b16 %v3119
    %v3652 = vunpack.c.l.b16 %v3120
    %v3653 = vunpack.c.h.b16 %v3120
    %v3654 = vunpack.c.l.b16 %v3121
    %v3655 = vunpack.c.h.b16 %v3121
    %v3656 = vunpack.c.l.b16 %v3122
    %v3657 = vunpack.c.l.b16 %v3123
    %v3658 = vunpack.c.h.b16 %v3123
    %v3659 = vunpack.c.l.b16 %v3124
    %v3660 = vunpack.c.h.b16 %v3124
    %v3661 = vunpack.c.l.b16 %v3125
    %v3662 = vunpack.c.h.b16 %v3125
    %v3663 = vunpack.c.l.b16 %v3126
    %v3664 = vunpack.c.l.b16 %v3127
    %v3665 = vunpack.c.h.b16 %v3127
    %v3666 = vunpack.c.l.b16 %v3128
    %v3667 = vunpack.c.h.b16 %v3128
    %v3668 = vunpack.c.l.b16 %v3129
    %v3669 = vunpack.c.h.b16 %v3129
    %v3670 = vunpack.c.l.b16 %v3130
    %v3671 = vunpack.c.l.b16 %v3131
    %v3672 = vunpack.c.h.b16 %v3131
    %v3673 = vunpack.c.l.b16 %v3132
    %v3674 = vunpack.c.h.b16 %v3132
    %v3675 = vunpack.c.l.b16 %v3133
    %v3676 = vunpack.c.h.b16 %v3133
    %v3677 = vunpack.c.l.b16 %v3134
    %v3678 = vunpack.c.l.b16 %v3135
    %v3679 = vunpack.c.h.b16 %v3135
    %v3680 = vunpack.c.l.b16 %v3136
    %v3681 = vunpack.c.h.b16 %v3136
    %v3682 = vunpack.c.l.b16 %v3137
    %v3683 = vunpack.c.h.b16 %v3137
    %v3684 = vunpack.c.l.b16 %v3138
    %v3685 = vunpack.c.l.b16 %v3139
    %v3686 = vunpack.c.h.b16 %v3139
    %v3687 = vunpack.c.l.b16 %v3140
    %v3688 = vunpack.c.h.b16 %v3140
    %v3689 = vunpack.c.l.b16 %v3141
    %v3690 = vunpack.c.h.b16 %v3141
    %v3691 = vunpack.c.l.b16 %v3142
    %v3692 = vunpack.c.l.b16 %v3143
    %v3693 = vunpack.c.h.b16 %v3143
    %v3694 = vunpack.c.l.b16 %v3144
    %v3695 = vunpack.c.h.b16 %v3144
    %v3696 = vunpack.c.l.b16 %v3145
    %v3697 = vunpack.c.h.b16 %v3145
    %v3698 = vunpack.c.l.b16 %v3146
    %v3699 = vunpack.c.l.b16 %v3147
    %v3700 = vunpack.c.h.b16 %v3147
    %v3701 = vunpack.c.l.b16 %v3148
    %v3702 = vunpack.c.h.b16 %v3148
    %v3703 = vunpack.c.l.b16 %v3149
    %v3704 = vunpack.c.h.b16 %v3149
    %v3705 = vunpack.c.l.b16 %v3150
    %v3706 = vunpack.c.l.b16 %v3151
    %v3707 = vunpack.c.h.b16 %v3151
    %v3708 = vunpack.c.l.b16 %v3152
    %v3709 = vunpack.c.h.b16 %v3152
    %v3710 = vunpack.c.l.b16 %v3153
    %v3711 = vunpack.c.h.b16 %v3153
    %v3712 = vunpack.c.l.b16 %v3154
    %v3713 = vunpack.c.l.b16 %v3155
    %v3714 = vunpack.c.h.b16 %v3155
    %v3715 = vunpack.c.l.b16 %v3156
    %v3716 = vunpack.c.h.b16 %v3156
    %v3717 = vunpack.c.l.b16 %v3157
    %v3718 = vunpack.c.h.b16 %v3157
    %v3719 = vunpack.c.l.b16 %v3158
    %v3720 = vunpack.c.l.b16 %v3159
    %v3721 = vunpack.c.h.b16 %v3159
    %v3722 = vunpack.c.l.b16 %v3160
    %v3723 = vunpack.c.h.b16 %v3160
    %v3724 = vunpack.c.l.b16 %v3161
    %v3725 = vunpack.c.h.b16 %v3161
    %v3726 = vunpack.c.l.b16 %v3162
    %v3727 = vunpack.c.l.b16 %v3163
    %v3728 = vunpack.c.h.b16 %v3163
    %v3729 = vunpack.c.l.b16 %v3164
    %v3730 = vunpack.c.h.b16 %v3164
    %v3731 = vunpack.c.l.b16 %v3165
    %v3732 = vunpack.c.h.b16 %v3165
    %v3733 = vunpack.c.l.b16 %v3166
    %v3734 = vunpack.c.l.b16 %v3167
    %v3735 = vunpack.c.h.b16 %v3167
    %v3736 = vunpack.c.l.b16 %v3168
    %v3737 = vunpack.c.h.b16 %v3168
    %v3738 = vunpack.c.l.b16 %v3169
    %v3739 = vunpack.c.h.b16 %v3169
    %v3740 = vunpack.c.l.b16 %v3170
    %v3741 = vunpack.c.l.b16 %v3171
    %v3742 = vunpack.c.h.b16 %v3171
    %v3743 = vunpack.c.l.b16 %v3172
    %v3744 = vunpack.c.h.b16 %v3172
    %v3745 = vunpack.c.l.b16 %v3173
    %v3746 = vunpack.c.h.b16 %v3173
    %v3747 = vunpack.c.l.b16 %v3174
    %v3748 = vunpack.c.l.b16 %v3175
    %v3749 = vunpack.c.h.b16 %v3175
    %v3750 = vunpack.c.l.b16 %v3176
    %v3751 = vunpack.c.h.b16 %v3176
    %v3752 = vunpack.c.l.b16 %v3177
    %v3753 = vunpack.c.h.b16 %v3177
    %v3754 = vunpack.c.l.b16 %v3178
    %v3755 = vunpack.c.l.b16 %v3179
    %v3756 = vunpack.c.h.b16 %v3179
    %v3757 = vunpack.c.l.b16 %v3180
    %v3758 = vunpack.c.h.b16 %v3180
    %v3759 = vunpack.c.l.b16 %v3181
    %v3760 = vunpack.c.h.b16 %v3181
    %v3761 = vunpack.c.l.b16 %v3182
    %v3762 = vunpack.c.l.b16 %v3183
    %v3763 = vunpack.c.h.b16 %v3183
    %v3764 = vunpack.c.l.b16 %v3184
    %v3765 = vunpack.c.h.b16 %v3184
    %v3766 = vunpack.c.l.b16 %v3185
    %v3767 = vunpack.c.h.b16 %v3185
    %v3768 = vunpack.c.l.b16 %v3186
    %v3769 = vunpack.c.l.b16 %v3187
    %v3770 = vunpack.c.h.b16 %v3187
    %v3771 = vunpack.c.l.b16 %v3188
    %v3772 = vunpack.c.h.b16 %v3188
    %v3773 = vunpack.c.l.b16 %v3189
    %v3774 = vunpack.c.h.b16 %v3189
    %v3775 = vunpack.c.l.b16 %v3190
    %v3776 = vunpack.c.l.b16 %v3191
    %v3777 = vunpack.c.h.b16 %v3191
    %v3778 = vunpack.c.l.b16 %v3192
    %v3779 = vunpack.c.h.b16 %v3192
    %v3780 = vunpack.c.l.b16 %v3193
    %v3781 = vunpack.c.h.b16 %v3193
    %v3782 = vunpack.c.l.b16 %v3194
    %v3783 = vunpack.c.l.b16 %v3195
    %v3784 = vunpack.c.h.b16 %v3195
    %v3785 = vunpack.c.l.b16 %v3196
    %v3786 = vunpack.c.h.b16 %v3196
    %v3787 = vunpack.c.l.b16 %v3197
    %v3788 = vunpack.c.h.b16 %v3197
    %v3789 = vunpack.c.l.b16 %v3198
    %v3790 = vunpack.c.l.b16 %v3199
    %v3791 = vunpack.c.h.b16 %v3199
    %v3792 = vunpack.c.l.b16 %v3200
    %v3793 = vunpack.c.h.b16 %v3200
    %v3794 = vunpack.c.l.b16 %v3201
    %v3795 = vunpack.c.h.b16 %v3201
    %v3796 = vunpack.c.l.b16 %v3202
    %v3797 = vunpack.c.l.b16 %v3203
    %v3798 = vunpack.c.h.b16 %v3203
    %v3799 = vunpack.c.l.b16 %v3204
    %v3800 = vunpack.c.h.b16 %v3204
    %v3801 = vunpack.c.l.b16 %v3205
    %v3802 = vunpack.c.h.b16 %v3205
    %v3803 = vunpack.c.l.b16 %v3206
    %v3804 = vunpack.c.l.b16 %v3207
    %v3805 = vunpack.c.h.b16 %v3207
    %v3806 = vunpack.c.l.b16 %v3208
    %v3807 = vunpack.c.h.b16 %v3208
    %v3808 = vunpack.c.l.b16 %v3209
    %v3809 = vunpack.c.h.b16 %v3209
    %v3810 = vunpack.c.l.b16 %v3210
    %v3811 = vunpack.c.l.b16 %v3211
    %v3812 = vunpack.c.h.b16 %v3211
    %v3813 = vunpack.c.l.b16 %v3212
    %v3814 = vunpack.c.h.b16 %v3212
    %v3815 = vunpack.c.l.b16 %v3213
    %v3816 = vunpack.c.h.b16 %v3213
    %v3817 = vunpack.c.l.b16 %v3214
    %v3818 = vunpack.c.l.b16 %v3215
    %v3819 = vunpack.c.h.b16 %v3215
    %v3820 = vunpack.c.l.b16 %v3216
    %v3821 = vunpack.c.h.b16 %v3216
    %v3822 = vunpack.c.l.b16 %v3217
    %v3823 = vunpack.c.h.b16 %v3217
    %v3824 = vunpack.c.l.b16 %v3218
    %v3825 = vunpack.c.l.b16 %v3219
    %v3826 = vunpack.c.h.b16 %v3219
    %v3827 = vunpack.c.l.b16 %v3220
    %v3828 = vunpack.c.h.b16 %v3220
    %v3829 = vunpack.c.l.b16 %v3221
    %v3830 = vunpack.c.h.b16 %v3221
    %v3831 = vunpack.c.l.b16 %v3222
    %v3832 = vunpack.c.l.b16 %v3223
    %v3833 = vunpack.c.h.b16 %v3223
    %v3834 = vunpack.c.l.b16 %v3224
    %v3835 = vunpack.c.h.b16 %v3224
    %v3836 = vunpack.c.l.b16 %v3225
    %v3837 = vunpack.c.h.b16 %v3225
    %v3838 = vunpack.c.l.b16 %v3226
    %v3839 = vunpack.c.l.b16 %v3227
    %v3840 = vunpack.c.h.b16 %v3227
    %v3841 = vunpack.c.l.b16 %v3228
    %v3842 = vunpack.c.h.b16 %v3228
    %v3843 = vunpack.c.l.b16 %v3229
    %v3844 = vunpack.c.h.b16 %v3229
    %v3845 = vunpack.c.l.b16 %v3230
    %v3846 = vunpack.c.l.b16 %v3231
    %v3847 = vunpack.c.h.b16 %v3231
    %v3848 = vunpack.c.l.b16 %v3232
    %v3849 = vunpack.c.h.b16 %v3232
    %v3850 = vunpack.c.l.b16 %v3233
    %v3851 = vunpack.c.h.b16 %v3233
    %v3852 = vunpack.c.l.b16 %v3234
    %v3853 = vunpack.c.l.b16 %v3235
    %v3854 = vunpack.c.h.b16 %v3235
    %v3855 = vunpack.c.l.b16 %v3236
    %v3856 = vunpack.c.h.b16 %v3236
    %v3857 = vunpack.c.l.b16 %v3237
    %v3858 = vunpack.c.h.b16 %v3237
    %v3859 = vunpack.c.l.b16 %v3238
    %v3860 = vunpack.c.l.b16 %v3239
    %v3861 = vunpack.c.h.b16 %v3239
    %v3862 = vunpack.c.l.b16 %v3240
    %v3863 = vunpack.c.h.b16 %v3240
    %v3864 = vunpack.c.l.b16 %v3241
    %v3865 = vunpack.c.h.b16 %v3241
    %v3866 = vunpack.c.l.b16 %v3242
    %v3867 = vunpack.c.l.b16 %v3243
    %v3868 = vunpack.c.h.b16 %v3243
    %v3869 = vunpack.c.l.b16 %v3244
    %v3870 = vunpack.c.h.b16 %v3244
    %v3871 = vunpack.c.l.b16 %v3245
    %v3872 = vunpack.c.h.b16 %v3245
    %v3873 = vunpack.c.l.b16 %v3246
    %v3874 = vunpack.c.l.b16 %v3247
    %v3875 = vunpack.c.h.b16 %v3247
    %v3876 = vunpack.c.l.b16 %v3248
    %v3877 = vunpack.c.h.b16 %v3248
    %v3878 = vunpack.c.l.b16 %v3249
    %v3879 = vunpack.c.h.b16 %v3249
    %v3880 = vunpack.c.l.b16 %v3250
    %v3881 = vunpack.c.l.b16 %v3251
    %v3882 = vunpack.c.h.b16 %v3251
    %v3883 = vunpack.c.l.b16 %v3252
    %v3884 = vunpack.c.h.b16 %v3252
    %v3885 = vunpack.c.l.b16 %v3253
    %v3886 = vunpack.c.h.b16 %v3253
    %v3887 = vunpack.c.l.b16 %v3254
    %v3888 = vunpack.c.l.b16 %v3255
    %v3889 = vunpack.c.h.b16 %v3255
    %v3890 = vunpack.c.l.b16 %v3256
    %v3891 = vunpack.c.h.b16 %v3256
    %v3892 = vunpack.c.l.b16 %v3257
    %v3893 = vunpack.c.h.b16 %v3257
    %v3894 = vunpack.c.l.b16 %v3258
    %v3895 = vunpack.c.l.b16 %v3259
    %v3896 = vunpack.c.h.b16 %v3259
    %v3897 = vunpack.c.l.b16 %v3260
    %v3898 = vunpack.c.h.b16 %v3260
    %v3899 = vunpack.c.l.b16 %v3261
    %v3900 = vunpack.c.h.b16 %v3261
    %v3901 = vunpack.c.l.b16 %v3262
    %v3902 = vunpack.c.l.b16 %v3263
    %v3903 = vunpack.c.h.b16 %v3263
    %v3904 = vunpack.c.l.b16 %v3264
    %v3905 = vunpack.c.h.b16 %v3264
    %v3906 = vunpack.c.l.b16 %v3265
    %v3907 = vunpack.c.h.b16 %v3265
    %v3908 = vunpack.c.l.b16 %v3266
    %v3909 = vunpack.c.l.b16 %v3267
    %v3910 = vunpack.c.h.b16 %v3267
    %v3911 = vunpack.c.l.b16 %v3268
    %v3912 = vunpack.c.h.b16 %v3268
    %v3913 = vunpack.c.l.b16 %v3269
    %v3914 = vunpack.c.h.b16 %v3269
    %v3915 = vunpack.c.l.b16 %v3270
    %v3916 = vunpack.c.l.b16 %v3271
    %v3917 = vunpack.c.h.b16 %v3271
    %v3918 = vunpack.c.l.b16 %v3272
    %v3919 = vunpack.c.h.b16 %v3272
    %v3920 = vunpack.c.l.b16 %v3273
    %v3921 = vunpack.c.h.b16 %v3273
    %v3922 = vunpack.c.l.b16 %v3274
    %v3923 = vunpack.c.l.b16 %v3275
    %v3924 = vunpack.c.h.b16 %v3275
    %v3925 = vunpack.c.l.b16 %v3276
    %v3926 = vunpack.c.h.b16 %v3276
    %v3927 = vunpack.c.l.b16 %v3277
    %v3928 = vunpack.c.h.b16 %v3277
    %v3929 = vunpack.c.l.b16 %v3278
    %v3930 = vunpack.c.l.b16 %v3279
    %v3931 = vunpack.c.h.b16 %v3279
    %v3932 = vunpack.c.l.b16 %v3280
    %v3933 = vunpack.c.h.b16 %v3280
    %v3934 = vunpack.c.l.b16 %v3281
    %v3935 = vunpack.c.h.b16 %v3281
    %v3936 = vunpack.c.l.b16 %v3282
    %v3937 = vunpack.c.l.b16 %v3283
    %v3938 = vunpack.c.h.b16 %v3283
    %v3939 = vunpack.c.l.b16 %v3284
    %v3940 = vunpack.c.h.b16 %v3284
    %v3941 = vunpack.c.l.b16 %v3285
    %v3942 = vunpack.c.h.b16 %v3285
    %v3943 = vunpack.c.l.b16 %v3286
    %v3944 = vunpack.c.l.b16 %v3287
    %v3945 = vunpack.c.h.b16 %v3287
    %v3946 = vunpack.c.l.b16 %v3288
    %v3947 = vunpack.c.h.b16 %v3288
    %v3948 = vunpack.c.l.b16 %v3289
    %v3949 = vunpack.c.h.b16 %v3289
    %v3950 = vunpack.c.l.b16 %v3290
    %v3951 = vunpack.c.l.b16 %v3291
    %v3952 = vunpack.c.h.b16 %v3291
    %v3953 = vunpack.c.l.b16 %v3292
    %v3954 = vunpack.c.h.b16 %v3292
    %v3955 = vunpack.c.l.b16 %v3293
    %v3956 = vunpack.c.h.b16 %v3293
    %v3957 = vunpack.c.l.b16 %v3294
    %v3958 = vunpack.c.l.b16 %v3295
    %v3959 = vunpack.c.h.b16 %v3295
    %v3960 = vunpack.c.l.b16 %v3296
    %v3961 = vunpack.c.h.b16 %v3296
    %v3962 = vunpack.c.l.b16 %v3297
    %v3963 = vunpack.c.h.b16 %v3297
    %v3964 = vunpack.c.l.b16 %v3298
    %v3965 = vunpack.c.l.b16 %v3299
    %v3966 = vunpack.c.h.b16 %v3299
    %v3967 = vunpack.c.l.b16 %v3300
    %v3968 = vunpack.c.h.b16 %v3300
    %v3969 = vunpack.c.l.b16 %v3301
    %v3970 = vunpack.c.h.b16 %v3301
    %v3971 = vunpack.c.l.b16 %v3302
    %v3972 = vunpack.c.l.b16 %v3303
    %v3973 = vunpack.c.h.b16 %v3303
    %v3974 = vunpack.c.l.b16 %v3304
    %v3975 = vunpack.c.h.b16 %v3304
    %v3976 = vunpack.c.l.b16 %v3305
    %v3977 = vunpack.c.h.b16 %v3305
    %v3978 = vunpack.c.l.b16 %v3306
    %v3979 = vunpack.c.l.b16 %v3307
    %v3980 = vunpack.c.h.b16 %v3307
    %v3981 = vunpack.c.l.b16 %v3308
    %v3982 = vunpack.c.h.b16 %v3308
    %v3983 = vunpack.c.l.b16 %v3309
    %v3984 = vunpack.c.h.b16 %v3309
    %v3985 = vunpack.c.l.b16 %v3310
    %v3986 = vunpack.c.l.b16 %v3311
    %v3987 = vunpack.c.h.b16 %v3311
    %v3988 = vunpack.c.l.b16 %v3312
    %v3989 = vunpack.c.h.b16 %v3312
    %v3990 = vunpack.c.l.b16 %v3313
    %v3991 = vunpack.c.h.b16 %v3313
    %v3992 = vunpack.c.l.b16 %v3314
    %v3993 = vunpack.c.l.b16 %v3315
    %v3994 = vunpack.c.h.b16 %v3315
    %v3995 = vunpack.c.l.b16 %v3316
    %v3996 = vunpack.c.h.b16 %v3316
    %v3997 = vunpack.c.l.b16 %v3317
    %v3998 = vunpack.c.h.b16 %v3317
    %v3999 = vunpack.c.l.b16 %v3318
    %v4000 = vunpack.c.l.b16 %v3319
    %v4001 = vunpack.c.h.b16 %v3319
    %v4002 = vunpack.c.l.b16 %v3320
    %v4003 = vunpack.c.h.b16 %v3320
    %v4004 = vunpack.c.l.b16 %v3321
    %v4005 = vunpack.c.h.b16 %v3321
    %v4006 = vunpack.c.l.b16 %v3322
    %v4007 = vunpack.c.l.b16 %v3323
    %v4008 = vunpack.c.h.b16 %v3323
    %v4009 = vunpack.c.l.b16 %v3324
    %v4010 = vunpack.c.h.b16 %v3324
    %v4011 = vunpack.c.l.b16 %v3325
    %v4012 = vunpack.c.h.b16 %v3325
    %v4013 = vunpack.c.l.b16 %v3326
    %v4014 = vunpack.c.l.b16 %v3327
    %v4015 = vunpack.c.h.b16 %v3327
    %v4016 = vunpack.c.l.b16 %v3328
    %v4017 = vunpack.c.h.b16 %v3328
    %v4018 = vunpack.c.l.b16 %v3329
    %v4019 = vunpack.c.h.b16 %v3329
    %v4020 = vunpack.c.l.b16 %v3330
    %v4021 = vunpack.c.l.b16 %v3331
    %v4022 = vunpack.c.h.b16 %v3331
    %v4023 = vunpack.c.l.b16 %v3332
    %v4024 = vunpack.c.h.b16 %v3332
    %v4025 = vunpack.c.l.b16 %v3333
    %v4026 = vunpack.c.h.b16 %v3333
    %v4027 = vunpack.c.l.b16 %v3334
    %v4028 = vunpack.c.l.b16 %v3335
    %v4029 = vunpack.c.h.b16 %v3335
    %v4030 = vunpack.c.l.b16 %v3336
    %v4031 = vunpack.c.h.b16 %v3336
    %v4032 = vunpack.c.l.b16 %v3337
    %v4033 = vunpack.c.h.b16 %v3337
    %v4034 = vunpack.c.l.b16 %v3338
    %v4035 = vunpack.c.l.b16 %v3339
    %v4036 = vunpack.c.h.b16 %v3339
    %v4037 = vunpack.c.l.b16 %v3340
    %v4038 = vunpack.c.h.b16 %v3340
    %v4039 = vunpack.c.l.b16 %v3341
    %v4040 = vunpack.c.h.b16 %v3341
    %v4041 = vunpack.c.l.b16 %v3342
    %v4042 = vunpack.c.l.b16 %v3343
    %v4043 = vunpack.c.h.b16 %v3343
    %v4044 = vunpack.c.l.b16 %v3344
    %v4045 = vunpack.c.h.b16 %v3344
    %v4046 = vunpack.c.l.b16 %v3345
    %v4047 = vunpack.c.h.b16 %v3345
    %v4048 = vunpack.c.l.b16 %v3346
    %v4049 = vunpack.c.l.b16 %v3347
    %v4050 = vunpack.c.h.b16 %v3347
    %v4051 = vunpack.c.l.b16 %v3348
    %v4052 = vunpack.c.h.b16 %v3348
    %v4053 = vunpack.c.l.b16 %v3349
    %v4054 = vunpack.c.h.b16 %v3349
    %v4055 = vunpack.c.l.b16 %v3350
    %v4056 = vunpack.c.l.b16 %v3351
    %v4057 = vunpack.c.h.b16 %v3351
    %v4058 = vunpack.c.l.b16 %v3352
    %v4059 = vunpack.c.h.b16 %v3352
    %v4060 = vunpack.c.l.b16 %v3353
    %v4061 = vunpack.c.h.b16 %v3353
    %v4062 = vunpack.c.l.b16 %v3354
    %v4063 = vunpack.c.l.b16 %v3355
    %v4064 = vunpack.c.h.b16 %v3355
    %v4065 = vunpack.c.l.b16 %v3356
    %v4066 = vunpack.c.h.b16 %v3356
    %v4067 = vunpack.c.l.b16 %v3357
    %v4068 = vunpack.c.h.b16 %v3357
    %v4069 = vunpack.c.l.b16 %v3358
    %v4070 = vunpack.c.l.b16 %v3359
    %v4071 = vunpack.c.h.b16 %v3359
    %v4072 = vunpack.c.l.b16 %v3360
    %v4073 = vunpack.c.h.b16 %v3360
    %v4074 = vunpack.c.l.b16 %v3361
    %v4075 = vunpack.c.h.b16 %v3361
    %v4076 = vunpack.c.l.b16 %v3362
    %v4077 = vunpack.c.l.b16 %v3363
    %v4078 = vunpack.c.h.b16 %v3363
    %v4079 = vunpack.c.l.b16 %v3364
    %v4080 = vunpack.c.h.b16 %v3364
    %v4081 = vunpack.c.l.b16 %v3365
    %v4082 = vunpack.c.h.b16 %v3365
    %v4083 = vunpack.c.l.b16 %v3366
    %v4084 = vunpack.c.l.b16 %v3367
    %v4085 = vunpack.c.h.b16 %v3367
    %v4086 = vunpack.c.l.b16 %v3368
    %v4087 = vunpack.c.h.b16 %v3368
    %v4088 = vunpack.c.l.b16 %v3369
    %v4089 = vunpack.c.h.b16 %v3369
    %v4090 = vunpack.c.l.b16 %v3370
    %v4091 = vpack.c.b16 %v3650, %v3643
    %v4092 = vpack.c.b16 %v3651, %v3644
    %v4093 = vpack.c.b16 %v3652, %v3645
    %v4094 = vpack.c.b16 %v3653, %v3646
    %v4095 = vpack.c.b16 %v3654, %v3647
    %v4096 = vpack.c.b16 %v3655, %v3648
    %v4097 = vpack.c.b16 %v3656, %v3649
    %v4098 = vpack.c.b16 %v3664, %v3657
    %v4099 = vpack.c.b16 %v3665, %v3658
    %v4100 = vpack.c.b16 %v3666, %v3659
    %v4101 = vpack.c.b16 %v3667, %v3660
    %v4102 = vpack.c.b16 %v3668, %v3661
    %v4103 = vpack.c.b16 %v3669, %v3662
    %v4104 = vpack.c.b16 %v3670, %v3663
    %v4105 = vpack.c.b16 %v3678, %v3671
    %v4106 = vpack.c.b16 %v3679, %v3672
    %v4107 = vpack.c.b16 %v3680, %v3673
    %v4108 = vpack.c.b16 %v3681, %v3674
    %v4109 = vpack.c.b16 %v3682, %v3675
    %v4110 = vpack.c.b16 %v3683, %v3676
    %v4111 = vpack.c.b16 %v3684, %v3677
    %v4112 = vpack.c.b16 %v3692, %v3685
    %v4113 = vpack.c.b16 %v3693, %v3686
    %v4114 = vpack.c.b16 %v3694, %v3687
    %v4115 = vpack.c.b16 %v3695, %v3688
    %v4116 = vpack.c.b16 %v3696, %v3689
    %v4117 = vpack.c.b16 %v3697, %v3690
    %v4118 = vpack.c.b16 %v3698, %v3691
    %v4119 = vpack.c.b16 %v3706, %v3699
    %v4120 = vpack.c.b16 %v3707, %v3700
    %v4121 = vpack.c.b16 %v3708, %v3701
    %v4122 = vpack.c.b16 %v3709, %v3702
    %v4123 = vpack.c.b16 %v3710, %v3703
    %v4124 = vpack.c.b16 %v3711, %v3704
    %v4125 = vpack.c.b16 %v3712, %v3705
    %v4126 = vpack.c.b16 %v3720, %v3713
    %v4127 = vpack.c.b16 %v3721, %v3714
    %v4128 = vpack.c.b16 %v3722, %v3715
    %v4129 = vpack.c.b16 %v3723, %v3716
    %v4130 = vpack.c.b16 %v3724, %v3717
    %v4131 = vpack.c.b16 %v3725, %v3718
    %v4132 = vpack.c.b16 %v3726, %v3719
    %v4133 = vpack.c.b16 %v3734, %v3727
    %v4134 = vpack.c.b16 %v3735, %v3728
    %v4135 = vpack.c.b16 %v3736, %v3729
    %v4136 = vpack.c.b16 %v3737, %v3730
    %v4137 = vpack.c.b16 %v3738, %v3731
    %v4138 = vpack.c.b16 %v3739, %v3732
    %v4139 = vpack.c.b16 %v3740, %v3733
    %v4140 = vpack.c.b16 %v3748, %v3741
    %v4141 = vpack.c.b16 %v3749, %v3742
    %v4142 = vpack.c.b16 %v3750, %v3743
    %v4143 = vpack.c.b16 %v3751, %v3744
    %v4144 = vpack.c.b16 %v3752, %v3745
    %v4145 = vpack.c.b16 %v3753, %v3746
    %v4146 = vpack.c.b16 %v3754, %v3747
    %v4147 = vpack.c.b16 %v3762, %v3755
    %v4148 = vpack.c.b16 %v3763, %v3756
    %v4149 = vpack.c.b16 %v3764, %v3757
    %v4150 = vpack.c.b16 %v3765, %v3758
    %v4151 = vpack.c.b16 %v3766, %v3759
    %v4152 = vpack.c.b16 %v3767, %v3760
    %v4153 = vpack.c.b16 %v3768, %v3761
    %v4154 = vpack.c.b16 %v3776, %v3769
    %v4155 = vpack.c.b16 %v3777, %v3770
    %v4156 = vpack.c.b16 %v3778, %v3771
    %v4157 = vpack.c.b16 %v3779, %v3772
    %v4158 = vpack.c.b16 %v3780, %v3773
    %v4159 = vpack.c.b16 %v3781, %v3774
    %v4160 = vpack.c.b16 %v3782, %v3775
    %v4161 = vpack.c.b16 %v3790, %v3783
    %v4162 = vpack.c.b16 %v3791, %v3784
    %v4163 = vpack.c.b16 %v3792, %v3785
    %v4164 = vpack.c.b16 %v3793, %v3786
    %v4165 = vpack.c.b16 %v3794, %v3787
    %v4166 = vpack.c.b16 %v3795, %v3788
    %v4167 = vpack.c.b16 %v3796, %v3789
    %v4168 = vpack.c.b16 %v3804, %v3797
    %v4169 = vpack.c.b16 %v3805, %v3798
    %v4170 = vpack.c.b16 %v3806, %v3799
    %v4171 = vpack.c.b16 %v3807, %v3800
    %v4172 = vpack.c.b16 %v3808, %v3801
    %v4173 = vpack.c.b16 %v3809, %v3802
    %v4174 = vpack.c.b16 %v3810, %v3803
    %v4175 = vpack.c.b16 %v3818, %v3811
    %v4176 = vpack.c.b16 %v3819, %v3812
    %v4177 = vpack.c.b16 %v3820, %v3813
    %v4178 = vpack.c.b16 %v3821, %v3814
    %v4179 = vpack.c.b16 %v3822, %v3815
    %v4180 = vpack.c.b16 %v3823, %v3816
    %v4181 = vpack.c.b16 %v3824, %v3817
    %v4182 = vpack.c.b16 %v3832, %v3825
    %v4183 = vpack.c.b16 %v3833, %v3826
    %v4184 = vpack.c.b16 %v3834, %v3827
    %v4185 = vpack.c.b16 %v3835, %v3828
    %v4186 = vpack.c.b16 %v3836, %v3829
    %v4187 = vpack.c.b16 %v3837, %v3830
    %v4188 = vpack.c.b16 %v3838, %v3831
    %v4189 = vpack.c.b16 %v3846, %v3839
    %v4190 = vpack.c.b16 %v3847, %v3840
    %v4191 = vpack.c.b16 %v3848, %v3841
    %v4192 = vpack.c.b16 %v3849, %v3842
    %v4193 = vpack.c.b16 %v3850, %v3843
    %v4194 = vpack.c.b16 %v3851, %v3844
    %v4195 = vpack.c.b16 %v3852, %v3845
    %v4196 = vpack.c.b16 %v3860, %v3853
    %v4197 = vpack.c.b16 %v3861, %v3854
    %v4198 = vpack.c.b16 %v3862, %v3855
    %v4199 = vpack.c.b16 %v3863, %v3856
    %v4200 = vpack.c.b16 %v3864, %v3857
    %v4201 = vpack.c.b16 %v3865, %v3858
    %v4202 = vpack.c.b16 %v3866, %v3859
    %v4203 = vpack.c.b16 %v3874, %v3867
    %v4204 = vpack.c.b16 %v3875, %v3868
    %v4205 = vpack.c.b16 %v3876, %v3869
    %v4206 = vpack.c.b16 %v3877, %v3870
    %v4207 = vpack.c.b16 %v3878, %v3871
    %v4208 = vpack.c.b16 %v3879, %v3872
    %v4209 = vpack.c.b16 %v3880, %v3873
    %v4210 = vpack.c.b16 %v3888, %v3881
    %v4211 = vpack.c.b16 %v3889, %v3882
    %v4212 = vpack.c.b16 %v3890, %v3883
    %v4213 = vpack.c.b16 %v3891, %v3884
    %v4214 = vpack.c.b16 %v3892, %v3885
    %v4215 = vpack.c.b16 %v3893, %v3886
    %v4216 = vpack.c.b16 %v3894, %v3887
    %v4217 = vpack.c.b16 %v3902, %v3895
    %v4218 = vpack.c.b16 %v3903, %v3896
    %v4219 = vpack.c.b16 %v3904, %v3897
    %v4220 = vpack.c.b16 %v3905, %v3898
    %v4221 = vpack.c.b16 %v3906, %v3899
    %v4222 = vpack.c.b16 %v3907, %v3900
    %v4223 = vpack.c.b16 %v3908, %v3901
    %v4224 = vpack.c.b16 %v3916, %v3909
    %v4225 = vpack.c.b16 %v3917, %v3910
    %v4226 = vpack.c.b16 %v3918, %v3911
    %v4227 = vpack.c.b16 %v3919, %v3912
    %v4228 = vpack.c.b16 %v3920, %v3913
    %v4229 = vpack.c.b16 %v3921, %v3914
    %v4230 = vpack.c.b16 %v3922, %v3915
    %v4231 = vpack.c.b16 %v3930, %v3923
    %v4232 = vpack.c.b16 %v3931, %v3924
    %v4233 = vpack.c.b16 %v3932, %v3925
    %v4234 = vpack.c.b16 %v3933, %v3926
    %v4235 = vpack.c.b16 %v3934, %v3927
    %v4236 = vpack.c.b16 %v3935, %v3928
    %v4237 = vpack.c.b16 %v3936, %v3929
    %v4238 = vpack.c.b16 %v3944, %v3937
    %v4239 = vpack.c.b16 %v3945, %v3938
    %v4240 = vpack.c.b16 %v3946, %v3939
    %v4241 = vpack.c.b16 %v3947, %v3940
    %v4242 = vpack.c.b16 %v3948, %v3941
    %v4243 = vpack.c.b16 %v3949, %v3942
    %v4244 = vpack.c.b16 %v3950, %v3943
    %v4245 = vpack.c.b16 %v3958, %v3951
    %v4246 = vpack.c.b16 %v3959, %v3952
    %v4247 = vpack.c.b16 %v3960, %v3953
    %v4248 = vpack.c.b16 %v3961, %v3954
    %v4249 = vpack.c.b16 %v3962, %v3955
    %v4250 = vpack.c.b16 %v3963, %v3956
    %v4251 = vpack.c.b16 %v3964, %v3957
    %v4252 = vpack.c.b16 %v3972, %v3965
    %v4253 = vpack.c.b16 %v3973, %v3966
    %v4254 = vpack.c.b16 %v3974, %v3967
    %v4255 = vpack.c.b16 %v3975, %v3968
    %v4256 = vpack.c.b16 %v3976, %v3969
    %v4257 = vpack.c.b16 %v3977, %v3970
    %v4258 = vpack.c.b16 %v3978, %v3971
    %v4259 = vpack.c.b16 %v3986, %v3979
    %v4260 = vpack.c.b16 %v3987, %v3980
    %v4261 = vpack.c.b16 %v3988, %v3981
    %v4262 = vpack.c.b16 %v3989, %v3982
    %v4263 = vpack.c.b16 %v3990, %v3983
    %v4264 = vpack.c.b16 %v3991, %v3984
    %v4265 = vpack.c.b16 %v3992, %v3985
    %v4266 = vpack.c.b16 %v4000, %v3993
    %v4267 = vpack.c.b16 %v4001, %v3994
    %v4268 = vpack.c.b16 %v4002, %v3995
    %v4269 = vpack.c.b16 %v4003, %v3996
    %v4270 = vpack.c.b16 %v4004, %v3997
    %v4271 = vpack.c.b16 %v4005, %v3998
    %v4272 = vpack.c.b16 %v4006, %v3999
    %v4273 = vpack.c.b16 %v4014, %v4007
    %v4274 = vpack.c.b16 %v4015, %v4008
    %v4275 = vpack.c.b16 %v4016, %v4009
    %v4276 = vpack.c.b16 %v4017, %v4010
    %v4277 = vpack.c.b16 %v4018, %v4011
    %v4278 = vpack.c.b16 %v4019, %v4012
    %v4279 = vpack.c.b16 %v4020, %v4013
    %v4280 = vpack.c.b16 %v4028, %v4021
    %v4281 = vpack.c.b16 %v4029, %v4022
    %v4282 = vpack.c.b16 %v4030, %v4023
    %v4283 = vpack.c.b16 %v4031, %v4024
    %v4284 = vpack.c.b16 %v4032, %v4025
    %v4285 = vpack.c.b16 %v4033, %v4026
    %v4286 = vpack.c.b16 %v4034, %v4027
    %v4287 = vpack.c.b16 %v4042, %v4035
    %v4288 = vpack.c.b16 %v4043, %v4036
    %v4289 = vpack.c.b16 %v4044, %v4037
    %v4290 = vpack.c.b16 %v4045, %v4038
    %v4291 = vpack.c.b16 %v4046, %v4039
    %v4292 = vpack.c.b16 %v4047, %v4040
    %v4293 = vpack.c.b16 %v4048, %v4041
    %v4294 = vpack.c.b16 %v4056, %v4049
    %v4295 = vpack.c.b16 %v4057, %v4050
    %v4296 = vpack.c.b16 %v4058, %v4051
    %v4297 = vpack.c.b16 %v4059, %v4052
    %v4298 = vpack.c.b16 %v4060, %v4053
    %v4299 = vpack.c.b16 %v4061, %v4054
    %v4300 = vpack.c.b16 %v4062, %v4055
    %v4301 = vpack.c.b16 %v4070, %v4063
    %v4302 = vpack.c.b16 %v4071, %v4064
    %v4303 = vpack.c.b16 %v4072, %v4065
    %v4304 = vpack.c.b16 %v4073, %v4066
    %v4305 = vpack.c.b16 %v4074, %v4067
    %v4306 = vpack.c.b16 %v4075, %v4068
    %v4307 = vpack.c.b16 %v4076, %v4069
    %v4308 = vpack.c.b16 %v4084, %v4077
    %v4309 = vpack.c.b16 %v4085, %v4078
    %v4310 = vpack.c.b16 %v4086, %v4079
    %v4311 = vpack.c.b16 %v4087, %v4080
    %v4312 = vpack.c.b16 %v4088, %v4081
    %v4313 = vpack.c.b16 %v4089, %v4082
    %v4314 = vpack.c.b16 %v4090, %v4083
    %4539 = vmatpush.bf16.msra.mxu0 %v4140
    %4540 = vmatpush.bf16.msra.mxu0 %v4133
    %4541 = vmatpush.bf16.msra.mxu0 %v4126
    %4542 = vmatpush.bf16.msra.mxu0 %v4119
    %4543 = vmatpush.bf16.msra.mxu0 %v4112
    %4544 = vmatpush.bf16.msra.mxu0 %v4105
    %4545 = vmatpush.bf16.msra.mxu0 %v4098
    %4546 = vmatpush.bf16.msra.mxu0 %v4091
    %4547 = vmatmul.bf16.gmra.mxu0 %v3111
    %v4548 = vpop.f32.mrf.mxu0
    %v4549 = vadd.f32 %v3373, %v4548
    %v4550 = vpop.f32.mrf.mxu0
    %v4551 = vadd.f32 %v3373, %v4550
    %4552 = vdwg.mxu0
    %4553 = vmatpush.bf16.msra.mxu0 %v4196
    %4554 = vmatpush.bf16.msra.mxu0 %v4189
    %4555 = vmatpush.bf16.msra.mxu0 %v4182
    %4556 = vmatpush.bf16.msra.mxu0 %v4175
    %4557 = vmatpush.bf16.msra.mxu0 %v4168
    %4558 = vmatpush.bf16.msra.mxu0 %v4161
    %4559 = vmatpush.bf16.msra.mxu0 %v4154
    %4560 = vmatpush.bf16.msra.mxu0 %v4147
    %4561 = vmatmul.bf16.gmra.mxu0 %v3112
    %v4562 = vpop.f32.mrf.mxu0
    %v4563 = vadd.f32 %v4549, %v4562
    %v4564 = vpop.f32.mrf.mxu0
    %v4565 = vadd.f32 %v4551, %v4564
    %4566 = vdwg.mxu0
    %4567 = vmatpush.bf16.msra.mxu0 %v4252
    %4568 = vmatpush.bf16.msra.mxu0 %v4245
    %4569 = vmatpush.bf16.msra.mxu0 %v4238
    %4570 = vmatpush.bf16.msra.mxu0 %v4231
    %4571 = vmatpush.bf16.msra.mxu0 %v4224
    %4572 = vmatpush.bf16.msra.mxu0 %v4217
    %4573 = vmatpush.bf16.msra.mxu0 %v4210
    %4574 = vmatpush.bf16.msra.mxu0 %v4203
    %4575 = vmatmul.bf16.gmra.mxu0 %v3113
    %v4576 = vpop.f32.mrf.mxu0
    %v4577 = vadd.f32 %v4563, %v4576
    %v4578 = vpop.f32.mrf.mxu0
    %v4579 = vadd.f32 %v4565, %v4578
    %4580 = vdwg.mxu0
    %4581 = vmatpush.bf16.msra.mxu0 %v4308
    %4582 = vmatpush.bf16.msra.mxu0 %v4301
    %4583 = vmatpush.bf16.msra.mxu0 %v4294
    %4584 = vmatpush.bf16.msra.mxu0 %v4287
    %4585 = vmatpush.bf16.msra.mxu0 %v4280
    %4586 = vmatpush.bf16.msra.mxu0 %v4273
    %4587 = vmatpush.bf16.msra.mxu0 %v4266
    %4588 = vmatpush.bf16.msra.mxu0 %v4259
    %4589 = vmatmul.bf16.gmra.mxu0 %v3114
    %v4590 = vpop.f32.mrf.mxu0
    %v4591 = vadd.f32 %v4577, %v4590
    %v4592 = vpop.f32.mrf.mxu0
    %v4593 = vadd.f32 %v4579, %v4592
    %4594 = vdwg.mxu0
    %4595 = vmatpush.bf16.msra.mxu0 %v4141
    %4596 = vmatpush.bf16.msra.mxu0 %v4134
    %4597 = vmatpush.bf16.msra.mxu0 %v4127
    %4598 = vmatpush.bf16.msra.mxu0 %v4120
    %4599 = vmatpush.bf16.msra.mxu0 %v4113
    %4600 = vmatpush.bf16.msra.mxu0 %v4106
    %4601 = vmatpush.bf16.msra.mxu0 %v4099
    %4602 = vmatpush.bf16.msra.mxu0 %v4092
    %4603 = vmatmul.bf16.gmra.mxu0 %v3111
    %v4604 = vpop.f32.mrf.mxu0
    %v4605 = vadd.f32 %v3374, %v4604
    %v4606 = vpop.f32.mrf.mxu0
    %v4607 = vadd.f32 %v3374, %v4606
    %4608 = vdwg.mxu0
    %4609 = vmatpush.bf16.msra.mxu0 %v4197
    %4610 = vmatpush.bf16.msra.mxu0 %v4190
    %4611 = vmatpush.bf16.msra.mxu0 %v4183
    %4612 = vmatpush.bf16.msra.mxu0 %v4176
    %4613 = vmatpush.bf16.msra.mxu0 %v4169
    %4614 = vmatpush.bf16.msra.mxu0 %v4162
    %4615 = vmatpush.bf16.msra.mxu0 %v4155
    %4616 = vmatpush.bf16.msra.mxu0 %v4148
    %4617 = vmatmul.bf16.gmra.mxu0 %v3112
    %v4618 = vpop.f32.mrf.mxu0
    %v4619 = vadd.f32 %v4605, %v4618
    %v4620 = vpop.f32.mrf.mxu0
    %v4621 = vadd.f32 %v4607, %v4620
    %4622 = vdwg.mxu0
    %4623 = vmatpush.bf16.msra.mxu0 %v4253
    %4624 = vmatpush.bf16.msra.mxu0 %v4246
    %4625 = vmatpush.bf16.msra.mxu0 %v4239
    %4626 = vmatpush.bf16.msra.mxu0 %v4232
    %4627 = vmatpush.bf16.msra.mxu0 %v4225
    %4628 = vmatpush.bf16.msra.mxu0 %v4218
    %4629 = vmatpush.bf16.msra.mxu0 %v4211
    %4630 = vmatpush.bf16.msra.mxu0 %v4204
    %4631 = vmatmul.bf16.gmra.mxu0 %v3113
    %v4632 = vpop.f32.mrf.mxu0
    %v4633 = vadd.f32 %v4619, %v4632
    %v4634 = vpop.f32.mrf.mxu0
    %v4635 = vadd.f32 %v4621, %v4634
    %4636 = vdwg.mxu0
    %4637 = vmatpush.bf16.msra.mxu0 %v4309
    %4638 = vmatpush.bf16.msra.mxu0 %v4302
    %4639 = vmatpush.bf16.msra.mxu0 %v4295
    %4640 = vmatpush.bf16.msra.mxu0 %v4288
    %4641 = vmatpush.bf16.msra.mxu0 %v4281
    %4642 = vmatpush.bf16.msra.mxu0 %v4274
    %4643 = vmatpush.bf16.msra.mxu0 %v4267
    %4644 = vmatpush.bf16.msra.mxu0 %v4260
    %4645 = vmatmul.bf16.gmra.mxu0 %v3114
    %v4646 = vpop.f32.mrf.mxu0
    %v4647 = vadd.f32 %v4633, %v4646
    %v4648 = vpop.f32.mrf.mxu0
    %v4649 = vadd.f32 %v4635, %v4648
    %4650 = vdwg.mxu0
    %4651 = vmatpush.bf16.msra.mxu0 %v4142
    %4652 = vmatpush.bf16.msra.mxu0 %v4135
    %4653 = vmatpush.bf16.msra.mxu0 %v4128
    %4654 = vmatpush.bf16.msra.mxu0 %v4121
    %4655 = vmatpush.bf16.msra.mxu0 %v4114
    %4656 = vmatpush.bf16.msra.mxu0 %v4107
    %4657 = vmatpush.bf16.msra.mxu0 %v4100
    %4658 = vmatpush.bf16.msra.mxu0 %v4093
    %4659 = vmatmul.bf16.gmra.mxu0 %v3111
    %v4660 = vpop.f32.mrf.mxu0
    %v4661 = vadd.f32 %v3375, %v4660
    %v4662 = vpop.f32.mrf.mxu0
    %v4663 = vadd.f32 %v3375, %v4662
    %4664 = vdwg.mxu0
    %4665 = vmatpush.bf16.msra.mxu0 %v4198
    %4666 = vmatpush.bf16.msra.mxu0 %v4191
    %4667 = vmatpush.bf16.msra.mxu0 %v4184
    %4668 = vmatpush.bf16.msra.mxu0 %v4177
    %4669 = vmatpush.bf16.msra.mxu0 %v4170
    %4670 = vmatpush.bf16.msra.mxu0 %v4163
    %4671 = vmatpush.bf16.msra.mxu0 %v4156
    %4672 = vmatpush.bf16.msra.mxu0 %v4149
    %4673 = vmatmul.bf16.gmra.mxu0 %v3112
    %v4674 = vpop.f32.mrf.mxu0
    %v4675 = vadd.f32 %v4661, %v4674
    %v4676 = vpop.f32.mrf.mxu0
    %v4677 = vadd.f32 %v4663, %v4676
    %4678 = vdwg.mxu0
    %4679 = vmatpush.bf16.msra.mxu0 %v4254
    %4680 = vmatpush.bf16.msra.mxu0 %v4247
    %4681 = vmatpush.bf16.msra.mxu0 %v4240
    %4682 = vmatpush.bf16.msra.mxu0 %v4233
    %4683 = vmatpush.bf16.msra.mxu0 %v4226
    %4684 = vmatpush.bf16.msra.mxu0 %v4219
    %4685 = vmatpush.bf16.msra.mxu0 %v4212
    %4686 = vmatpush.bf16.msra.mxu0 %v4205
    %4687 = vmatmul.bf16.gmra.mxu0 %v3113
    %v4688 = vpop.f32.mrf.mxu0
    %v4689 = vadd.f32 %v4675, %v4688
    %v4690 = vpop.f32.mrf.mxu0
    %v4691 = vadd.f32 %v4677, %v4690
    %4692 = vdwg.mxu0
    %4693 = vmatpush.bf16.msra.mxu0 %v4310
    %4694 = vmatpush.bf16.msra.mxu0 %v4303
    %4695 = vmatpush.bf16.msra.mxu0 %v4296
    %4696 = vmatpush.bf16.msra.mxu0 %v4289
    %4697 = vmatpush.bf16.msra.mxu0 %v4282
    %4698 = vmatpush.bf16.msra.mxu0 %v4275
    %4699 = vmatpush.bf16.msra.mxu0 %v4268
    %4700 = vmatpush.bf16.msra.mxu0 %v4261
    %4701 = vmatmul.bf16.gmra.mxu0 %v3114
    %v4702 = vpop.f32.mrf.mxu0
    %v4703 = vadd.f32 %v4689, %v4702
    %v4704 = vpop.f32.mrf.mxu0
    %v4705 = vadd.f32 %v4691, %v4704
    %4706 = vdwg.mxu0
    %4707 = vmatpush.bf16.msra.mxu0 %v4143
    %4708 = vmatpush.bf16.msra.mxu0 %v4136
    %4709 = vmatpush.bf16.msra.mxu0 %v4129
    %4710 = vmatpush.bf16.msra.mxu0 %v4122
    %4711 = vmatpush.bf16.msra.mxu0 %v4115
    %4712 = vmatpush.bf16.msra.mxu0 %v4108
    %4713 = vmatpush.bf16.msra.mxu0 %v4101
    %4714 = vmatpush.bf16.msra.mxu0 %v4094
    %4715 = vmatmul.bf16.gmra.mxu0 %v3111
    %v4716 = vpop.f32.mrf.mxu0
    %v4717 = vadd.f32 %v3376, %v4716
    %v4718 = vpop.f32.mrf.mxu0
    %v4719 = vadd.f32 %v3376, %v4718
    %4720 = vdwg.mxu0
    %4721 = vmatpush.bf16.msra.mxu0 %v4199
    %4722 = vmatpush.bf16.msra.mxu0 %v4192
    %4723 = vmatpush.bf16.msra.mxu0 %v4185
    %4724 = vmatpush.bf16.msra.mxu0 %v4178
    %4725 = vmatpush.bf16.msra.mxu0 %v4171
    %4726 = vmatpush.bf16.msra.mxu0 %v4164
    %4727 = vmatpush.bf16.msra.mxu0 %v4157
    %4728 = vmatpush.bf16.msra.mxu0 %v4150
    %4729 = vmatmul.bf16.gmra.mxu0 %v3112
    %v4730 = vpop.f32.mrf.mxu0
    %v4731 = vadd.f32 %v4717, %v4730
    %v4732 = vpop.f32.mrf.mxu0
    %v4733 = vadd.f32 %v4719, %v4732
    %4734 = vdwg.mxu0
    %4735 = vmatpush.bf16.msra.mxu0 %v4255
    %4736 = vmatpush.bf16.msra.mxu0 %v4248
    %4737 = vmatpush.bf16.msra.mxu0 %v4241
    %4738 = vmatpush.bf16.msra.mxu0 %v4234
    %4739 = vmatpush.bf16.msra.mxu0 %v4227
    %4740 = vmatpush.bf16.msra.mxu0 %v4220
    %4741 = vmatpush.bf16.msra.mxu0 %v4213
    %4742 = vmatpush.bf16.msra.mxu0 %v4206
    %4743 = vmatmul.bf16.gmra.mxu0 %v3113
    %v4744 = vpop.f32.mrf.mxu0
    %v4745 = vadd.f32 %v4731, %v4744
    %v4746 = vpop.f32.mrf.mxu0
    %v4747 = vadd.f32 %v4733, %v4746
    %4748 = vdwg.mxu0
    %4749 = vmatpush.bf16.msra.mxu0 %v4311
    %4750 = vmatpush.bf16.msra.mxu0 %v4304
    %4751 = vmatpush.bf16.msra.mxu0 %v4297
    %4752 = vmatpush.bf16.msra.mxu0 %v4290
    %4753 = vmatpush.bf16.msra.mxu0 %v4283
    %4754 = vmatpush.bf16.msra.mxu0 %v4276
    %4755 = vmatpush.bf16.msra.mxu0 %v4269
    %4756 = vmatpush.bf16.msra.mxu0 %v4262
    %4757 = vmatmul.bf16.gmra.mxu0 %v3114
    %v4758 = vpop.f32.mrf.mxu0
    %v4759 = vadd.f32 %v4745, %v4758
    %v4760 = vpop.f32.mrf.mxu0
    %v4761 = vadd.f32 %v4747, %v4760
    %4762 = vdwg.mxu0
    %4763 = vmatpush.bf16.msra.mxu0 %v4144
    %4764 = vmatpush.bf16.msra.mxu0 %v4137
    %4765 = vmatpush.bf16.msra.mxu0 %v4130
    %4766 = vmatpush.bf16.msra.mxu0 %v4123
    %4767 = vmatpush.bf16.msra.mxu0 %v4116
    %4768 = vmatpush.bf16.msra.mxu0 %v4109
    %4769 = vmatpush.bf16.msra.mxu0 %v4102
    %4770 = vmatpush.bf16.msra.mxu0 %v4095
    %4771 = vmatmul.bf16.gmra.mxu0 %v3111
    %v4772 = vpop.f32.mrf.mxu0
    %v4773 = vadd.f32 %v3377, %v4772
    %v4774 = vpop.f32.mrf.mxu0
    %v4775 = vadd.f32 %v3377, %v4774
    %4776 = vdwg.mxu0
    %4777 = vmatpush.bf16.msra.mxu0 %v4200
    %4778 = vmatpush.bf16.msra.mxu0 %v4193
    %4779 = vmatpush.bf16.msra.mxu0 %v4186
    %4780 = vmatpush.bf16.msra.mxu0 %v4179
    %4781 = vmatpush.bf16.msra.mxu0 %v4172
    %4782 = vmatpush.bf16.msra.mxu0 %v4165
    %4783 = vmatpush.bf16.msra.mxu0 %v4158
    %4784 = vmatpush.bf16.msra.mxu0 %v4151
    %4785 = vmatmul.bf16.gmra.mxu0 %v3112
    %v4786 = vpop.f32.mrf.mxu0
    %v4787 = vadd.f32 %v4773, %v4786
    %v4788 = vpop.f32.mrf.mxu0
    %v4789 = vadd.f32 %v4775, %v4788
    %4790 = vdwg.mxu0
    %4791 = vmatpush.bf16.msra.mxu0 %v4256
    %4792 = vmatpush.bf16.msra.mxu0 %v4249
    %4793 = vmatpush.bf16.msra.mxu0 %v4242
    %4794 = vmatpush.bf16.msra.mxu0 %v4235
    %4795 = vmatpush.bf16.msra.mxu0 %v4228
    %4796 = vmatpush.bf16.msra.mxu0 %v4221
    %4797 = vmatpush.bf16.msra.mxu0 %v4214
    %4798 = vmatpush.bf16.msra.mxu0 %v4207
    %4799 = vmatmul.bf16.gmra.mxu0 %v3113
    %v4800 = vpop.f32.mrf.mxu0
    %v4801 = vadd.f32 %v4787, %v4800
    %v4802 = vpop.f32.mrf.mxu0
    %v4803 = vadd.f32 %v4789, %v4802
    %4804 = vdwg.mxu0
    %4805 = vmatpush.bf16.msra.mxu0 %v4312
    %4806 = vmatpush.bf16.msra.mxu0 %v4305
    %4807 = vmatpush.bf16.msra.mxu0 %v4298
    %4808 = vmatpush.bf16.msra.mxu0 %v4291
    %4809 = vmatpush.bf16.msra.mxu0 %v4284
    %4810 = vmatpush.bf16.msra.mxu0 %v4277
    %4811 = vmatpush.bf16.msra.mxu0 %v4270
    %4812 = vmatpush.bf16.msra.mxu0 %v4263
    %4813 = vmatmul.bf16.gmra.mxu0 %v3114
    %v4814 = vpop.f32.mrf.mxu0
    %v4815 = vadd.f32 %v4801, %v4814
    %v4816 = vpop.f32.mrf.mxu0
    %v4817 = vadd.f32 %v4803, %v4816
    %4818 = vdwg.mxu0
    %4819 = vmatpush.bf16.msra.mxu0 %v4145
    %4820 = vmatpush.bf16.msra.mxu0 %v4138
    %4821 = vmatpush.bf16.msra.mxu0 %v4131
    %4822 = vmatpush.bf16.msra.mxu0 %v4124
    %4823 = vmatpush.bf16.msra.mxu0 %v4117
    %4824 = vmatpush.bf16.msra.mxu0 %v4110
    %4825 = vmatpush.bf16.msra.mxu0 %v4103
    %4826 = vmatpush.bf16.msra.mxu0 %v4096
    %4827 = vmatmul.bf16.gmra.mxu0 %v3111
    %v4828 = vpop.f32.mrf.mxu0
    %v4829 = vadd.f32 %v3378, %v4828
    %v4830 = vpop.f32.mrf.mxu0
    %v4831 = vadd.f32 %v3378, %v4830
    %4832 = vdwg.mxu0
    %4833 = vmatpush.bf16.msra.mxu0 %v4201
    %4834 = vmatpush.bf16.msra.mxu0 %v4194
    %4835 = vmatpush.bf16.msra.mxu0 %v4187
    %4836 = vmatpush.bf16.msra.mxu0 %v4180
    %4837 = vmatpush.bf16.msra.mxu0 %v4173
    %4838 = vmatpush.bf16.msra.mxu0 %v4166
    %4839 = vmatpush.bf16.msra.mxu0 %v4159
    %4840 = vmatpush.bf16.msra.mxu0 %v4152
    %4841 = vmatmul.bf16.gmra.mxu0 %v3112
    %v4842 = vpop.f32.mrf.mxu0
    %v4843 = vadd.f32 %v4829, %v4842
    %v4844 = vpop.f32.mrf.mxu0
    %v4845 = vadd.f32 %v4831, %v4844
    %4846 = vdwg.mxu0
    %4847 = vmatpush.bf16.msra.mxu0 %v4257
    %4848 = vmatpush.bf16.msra.mxu0 %v4250
    %4849 = vmatpush.bf16.msra.mxu0 %v4243
    %4850 = vmatpush.bf16.msra.mxu0 %v4236
    %4851 = vmatpush.bf16.msra.mxu0 %v4229
    %4852 = vmatpush.bf16.msra.mxu0 %v4222
    %4853 = vmatpush.bf16.msra.mxu0 %v4215
    %4854 = vmatpush.bf16.msra.mxu0 %v4208
    %4855 = vmatmul.bf16.gmra.mxu0 %v3113
    %v4856 = vpop.f32.mrf.mxu0
    %v4857 = vadd.f32 %v4843, %v4856
    %v4858 = vpop.f32.mrf.mxu0
    %v4859 = vadd.f32 %v4845, %v4858
    %4860 = vdwg.mxu0
    %4861 = vmatpush.bf16.msra.mxu0 %v4313
    %4862 = vmatpush.bf16.msra.mxu0 %v4306
    %4863 = vmatpush.bf16.msra.mxu0 %v4299
    %4864 = vmatpush.bf16.msra.mxu0 %v4292
    %4865 = vmatpush.bf16.msra.mxu0 %v4285
    %4866 = vmatpush.bf16.msra.mxu0 %v4278
    %4867 = vmatpush.bf16.msra.mxu0 %v4271
    %4868 = vmatpush.bf16.msra.mxu0 %v4264
    %4869 = vmatmul.bf16.gmra.mxu0 %v3114
    %v4870 = vpop.f32.mrf.mxu0
    %v4871 = vadd.f32 %v4857, %v4870
    %v4872 = vpop.f32.mrf.mxu0
    %v4873 = vadd.f32 %v4859, %v4872
    %4874 = vdwg.mxu0
    %4875 = vmatpush.bf16.msra.mxu0 %v4146
    %4876 = vmatpush.bf16.msra.mxu0 %v4139
    %4877 = vmatpush.bf16.msra.mxu0 %v4132
    %4878 = vmatpush.bf16.msra.mxu0 %v4125
    %4879 = vmatpush.bf16.msra.mxu0 %v4118
    %4880 = vmatpush.bf16.msra.mxu0 %v4111
    %4881 = vmatpush.bf16.msra.mxu0 %v4104
    %4882 = vmatpush.bf16.msra.mxu0 %v4097
    %4883 = vmatmul.bf16.gmra.mxu0 %v3111
    %v4884 = vpop.f32.mrf.mxu0
    %v4885 = vadd.f32 %v3379, %v4884
    %v4886 = vpop.f32.mrf.mxu0
    %v4887 = vadd.f32 %v3379, %v4886
    %4888 = vdwg.mxu0
    %4889 = vmatpush.bf16.msra.mxu0 %v4202
    %4890 = vmatpush.bf16.msra.mxu0 %v4195
    %4891 = vmatpush.bf16.msra.mxu0 %v4188
    %4892 = vmatpush.bf16.msra.mxu0 %v4181
    %4893 = vmatpush.bf16.msra.mxu0 %v4174
    %4894 = vmatpush.bf16.msra.mxu0 %v4167
    %4895 = vmatpush.bf16.msra.mxu0 %v4160
    %4896 = vmatpush.bf16.msra.mxu0 %v4153
    %4897 = vmatmul.bf16.gmra.mxu0 %v3112
    %v4898 = vpop.f32.mrf.mxu0
    %v4899 = vadd.f32 %v4885, %v4898
    %v4900 = vpop.f32.mrf.mxu0
    %v4901 = vadd.f32 %v4887, %v4900
    %4902 = vdwg.mxu0
    %4903 = vmatpush.bf16.msra.mxu0 %v4258
    %4904 = vmatpush.bf16.msra.mxu0 %v4251
    %4905 = vmatpush.bf16.msra.mxu0 %v4244
    %4906 = vmatpush.bf16.msra.mxu0 %v4237
    %4907 = vmatpush.bf16.msra.mxu0 %v4230
    %4908 = vmatpush.bf16.msra.mxu0 %v4223
    %4909 = vmatpush.bf16.msra.mxu0 %v4216
    %4910 = vmatpush.bf16.msra.mxu0 %v4209
    %4911 = vmatmul.bf16.gmra.mxu0 %v3113
    %v4912 = vpop.f32.mrf.mxu0
    %v4913 = vadd.f32 %v4899, %v4912
    %v4914 = vpop.f32.mrf.mxu0
    %v4915 = vadd.f32 %v4901, %v4914
    %4916 = vdwg.mxu0
    %4917 = vmatpush.bf16.msra.mxu0 %v4314
    %4918 = vmatpush.bf16.msra.mxu0 %v4307
    %4919 = vmatpush.bf16.msra.mxu0 %v4300
    %4920 = vmatpush.bf16.msra.mxu0 %v4293
    %4921 = vmatpush.bf16.msra.mxu0 %v4286
    %4922 = vmatpush.bf16.msra.mxu0 %v4279
    %4923 = vmatpush.bf16.msra.mxu0 %v4272
    %4924 = vmatpush.bf16.msra.mxu0 %v4265
    %4925 = vmatmul.bf16.gmra.mxu0 %v3114
    %v4926 = vpop.f32.mrf.mxu0
    %v4927 = vadd.f32 %v4913, %v4926
    %v4928 = vpop.f32.mrf.mxu0
    %v4929 = vadd.f32 %v4915, %v4928
    %4930 = vdwg.mxu0
    %v4931 = vsub.f32 0.0, %v4591
    %v4932 = vsub.f32 0.0, %v4647
    %v4933 = vsub.f32 0.0, %v4703
    %v4934 = vsub.f32 0.0, %v4759
    %v4935 = vsub.f32 0.0, %v4815
    %v4936 = vsub.f32 0.0, %v4871
    %v4937 = vsub.f32 0.0, %v4927
    %v4938 = vsub.f32 0.0, %v4593
    %v4939 = vsub.f32 0.0, %v4649
    %v4940 = vsub.f32 0.0, %v4705
    %v4941 = vsub.f32 0.0, %v4761
    %v4942 = vsub.f32 0.0, %v4817
    %v4943 = vsub.f32 0.0, %v4873
    %v4944 = vsub.f32 0.0, %v4929
    %v4945 = vmul.f32 %v4931, 1.442695
    %v4946 = vpow.pop %v4945
    %v4947 = vmul.f32 %v4932, 1.442695
    %v4948 = vpow.pop %v4947
    %v4949 = vmul.f32 %v4933, 1.442695
    %v4950 = vpow.pop %v4949
    %v4951 = vmul.f32 %v4934, 1.442695
    %v4952 = vpow.pop %v4951
    %v4953 = vmul.f32 %v4935, 1.442695
    %v4954 = vpow.pop %v4953
    %v4955 = vmul.f32 %v4936, 1.442695
    %v4956 = vpow.pop %v4955
    %v4957 = vmul.f32 %v4937, 1.442695
    %v4958 = vpow.pop %v4957
    %v4959 = vmul.f32 %v4938, 1.442695
    %v4960 = vpow.pop %v4959
    %v4961 = vmul.f32 %v4939, 1.442695
    %v4962 = vpow.pop %v4961
    %v4963 = vmul.f32 %v4940, 1.442695
    %v4964 = vpow.pop %v4963
    %v4965 = vmul.f32 %v4941, 1.442695
    %v4966 = vpow.pop %v4965
    %v4967 = vmul.f32 %v4942, 1.442695
    %v4968 = vpow.pop %v4967
    %v4969 = vmul.f32 %v4943, 1.442695
    %v4970 = vpow.pop %v4969
    %v4971 = vmul.f32 %v4944, 1.442695
    %v4972 = vpow.pop %v4971
    %v4973 = vadd.f32 %v4946, 1.0
    %v4974 = vadd.f32 %v4948, 1.0
    %v4975 = vadd.f32 %v4950, 1.0
    %v4976 = vadd.f32 %v4952, 1.0
    %v4977 = vadd.f32 %v4954, 1.0
    %v4978 = vadd.f32 %v4956, 1.0
    %v4979 = vadd.f32 %v4958, 1.0
    %v4980 = vadd.f32 %v4960, 1.0
    %v4981 = vadd.f32 %v4962, 1.0
    %v4982 = vadd.f32 %v4964, 1.0
    %v4983 = vadd.f32 %v4966, 1.0
    %v4984 = vadd.f32 %v4968, 1.0
    %v4985 = vadd.f32 %v4970, 1.0
    %v4986 = vadd.f32 %v4972, 1.0
    %v4987 = vrcp.pop %v4973
    %v4988 = vrcp.pop %v4974
    %v4989 = vrcp.pop %v4975
    %v4990 = vrcp.pop %v4976
    %v4991 = vrcp.pop %v4977
    %v4992 = vrcp.pop %v4978
    %v4993 = vrcp.pop %v4979
    %v4994 = vrcp.pop %v4980
    %v4995 = vrcp.pop %v4981
    %v4996 = vrcp.pop %v4982
    %v4997 = vrcp.pop %v4983
    %v4998 = vrcp.pop %v4984
    %v4999 = vrcp.pop %v4985
    %v5000 = vrcp.pop %v4986
    %5001 = vst [vmem:[#allocation2] sm:$0xff] %v4987
    %5002 = vst [vmem:[#allocation2 + $0x8] sm:$0xff] %v4988
    %5003 = vst [vmem:[#allocation2 + $0x10] sm:$0xff] %v4989
    %5004 = vst [vmem:[#allocation2 + $0x18] sm:$0xff] %v4990
    %5005 = vst [vmem:[#allocation2 + $0x20] sm:$0xff] %v4991
    %5006 = vst [vmem:[#allocation2 + $0x28] sm:$0xff] %v4992
    %5007 = vst.msk [vmem:[#allocation2 + $0x30] sm:$0xff] %vm1278, %v4993
    %5008 = vst [vmem:[#allocation2 + $0x38] sm:$0xff] %v4994
    %5009 = vst [vmem:[#allocation2 + $0x40] sm:$0xff] %v4995
    %5010 = vst [vmem:[#allocation2 + $0x48] sm:$0xff] %v4996
    %5011 = vst [vmem:[#allocation2 + $0x50] sm:$0xff] %v4997
    %5012 = vst [vmem:[#allocation2 + $0x58] sm:$0xff] %v4998
    %5013 = vst [vmem:[#allocation2 + $0x60] sm:$0xff] %v4999
    %5014 = vst.msk [vmem:[#allocation2 + $0x68] sm:$0xff] %vm1278, %v5000
    // Predicated region
    $region58: #{vae_forward.1} parent=1 // pred_check
      _
    $region59: #{vae_forward.1} parent=1 // pred_check_branch
      %5016 = sbr.rel (0) target = $region61
    $region60: #{vae_forward.1} parent=1 // pred_region
      %5018 = vsyncadd [#allocation3], 0
      %s5019 = sshll.u32 [#allocation2], 4
      %s5020 = int_to_ptr.vmem [resolvable:$true] %s5019
      %s5021 = sshll.u32 %s14, 4
      %s5022 = int_to_ptr.hbm [resolvable:$true] %s5021
      %5027 = dma.vmem_to_hbm [thread:$0]  %s5020, 1792, %s5022, [#allocation3], 896, 896, 56
    $region61: #{vae_forward.1} parent=1 // pred_fallthru
      _
    // Predicated region
    $region62: #{vae_forward.1} parent=1 // pred_check
      _
    $region63: #{vae_forward.1} parent=1 // pred_check_branch
      %5029 = sbr.rel (0) target = $region65
    $region64: #{vae_forward.1} parent=1 // pred_region
      %5031 = dma.done [#allocation3], 1792
    $region65: #{vae_forward.1} parent=1 // pred_fallthru
      _
    %5032 = vsyncpa [#allocation3], 1

</llo_original>
